<compile_context>
chip_gen: v5e
topology: v5e:2x2
jax: 0.10.0
libtpu: 0.0.40
codegen_flags: <defaults>
</compile_context>

<pallas_src>
import numpy as np
import jax
import jax.numpy as jnp
from jax.experimental import pallas as pl
from jax.experimental.pallas import tpu as pltpu

# ---------------- configuration (small shapes consistent with the module) ----
BATCH = 2
NUMCH = 1          # numCh
N_IMG = 9          # image_size
NU = 2             # nu
SIGMA = 1          # sigma
D_MODEL = 128      # lane-width aligned
NHEAD = 4
HEAD_DIM = D_MODEL // NHEAD
NUM_LAYERS = 2
DIM_FF = 256
LN_EPS = 1e-5

if (N_IMG - SIGMA) % NU == 0:
    CASE = 1
    SHIFT = (N_IMG - SIGMA) // NU
else:
    CASE = 2
    SHIFT = (N_IMG + SIGMA) // NU

PATCH_DIM = SHIFT * SHIFT * NUMCH        # 16
NUM_PATCHES = NU * NU                    # 4
NPIX = NUMCH * N_IMG * N_IMG             # 81


# ---------------- Kaleidoscope / rearrange fold tables (init-time, numpy) -----
def _mkt_indexes():
    # TODO(synk): Kaleidoscope.MKTkaleidoscopeIndexes is external to the module;
    # reconstructed as the multiplicative kaleidoscope permutation (nu*i) mod N.
    return [(NU * i) % N_IMG for i in range(N_IMG)]


def _build_input_onehot():
    """A[p, j, k] = 1 if token (p, k) reads flattened-image position j.

    Folds: pseudoInvMKTransform row/col gather, the case-1 crop / case-2 edge
    duplication, and 'b c (h p1) (w p2) -> b (h w) (p1 p2 c)'.
    """
    mkt = _mkt_indexes()
    A = np.zeros((NUM_PATCHES, NPIX, PATCH_DIM), np.float32)
    for p in range(NUM_PATCHES):
        h, w = p // NU, p % NU
        for p1 in range(SHIFT):
            for p2 in range(SHIFT):
                for c in range(NUMCH):
                    k = (p1 * SHIFT + p2) * NUMCH + c
                    r = min(h * SHIFT + p1, N_IMG - 1)    # case-2 edge dup (no-op case 1)
                    col = min(w * SHIFT + p2, N_IMG - 1)
                    j = c * N_IMG * N_IMG + mkt[r] * N_IMG + mkt[col]
                    A[p, j, k] += 1.0
    return A


def _build_output_onehot():
    """B[p, k, m] = 1 if flattened output-image position m reads token (p, k).

    Folds: 'b h (p1 p2 c) -> b c (h p1) (w p2)' plus case-1 zero row/col
    padding (unmapped positions stay zero) or the case-2 crop.
    """
    inner = NU * SHIFT
    Bm = np.zeros((NUM_PATCHES, PATCH_DIM, NPIX), np.float32)
    for c in range(NUMCH):
        for r in range(N_IMG):
            for col in range(N_IMG):
                if r >= inner or col >= inner:
                    continue                               # zero padding (case 1)
                m = c * N_IMG * N_IMG + r * N_IMG + col
                h, p1 = r // SHIFT, r % SHIFT
                w, p2 = col // SHIFT, col % SHIFT
                p = h * NU + w
                k = (p1 * SHIFT + p2) * NUMCH + c
                Bm[p, k, m] = 1.0
    return Bm


# ---------------- fused Pallas kernel -----------------------------------------
def fused_forward_kernel(img_ref, bias_ref, w_in_ref, w_l128_ref, w_l256_ref,
                         w_head_ref, out_ref):
    D, FF, P, H = D_MODEL, DIM_FF, NUM_PATCHES, NHEAD
    dh = D // H
    B = img_ref.shape[0]
    S = B * P

    def mm(a, w):
        # MXU matmul; weights live in bf16, accumulate in f32.
        return jnp.dot(a.astype(w.dtype), w, preferred_element_type=jnp.float32)

    def layernorm(x, g, b):
        mu = jnp.mean(x, axis=-1, keepdims=True)
        xc = x - mu
        var = jnp.mean(xc * xc, axis=-1, keepdims=True)
        return xc * jax.lax.rsqrt(var + LN_EPS) * g + b

    def onehot(rows, cols, offset):
        # M[i, j] = 1.0 iff j == i + offset (row-block placement / selection).
        ri = jax.lax.broadcasted_iota(jnp.int32, (rows, cols), 0)
        ci = jax.lax.broadcasted_iota(jnp.int32, (rows, cols), 1)
        return (ci == ri + offset).astype(jnp.float32)

    bias = bias_ref[...]                                   # (27, 384) f32 slab

    # ---- patch embedding (gather ⊗ Linear folded into w_in) + pos (+ dropout=id)
    # y[b, p*D:(p+1)*D] is patch p's embedding; place the 128-lane blocks onto
    # token rows (p-major: row = p*B + b) with tiny one-hot matmuls — no
    # sublane-splitting reshapes or concats.
    y = mm(img_ref[...], w_in_ref[...])                    # (B, P*D) full-lane
    x = jnp.zeros((S, D), jnp.float32)
    for p in range(P):
        x = x + jnp.dot(onehot(S, B, -p * B), y[:, p * D:(p + 1) * D],
                        preferred_element_type=jnp.float32)
    x = x + bias[0:S, 0:D]                                 # pos (p-major) + patch bias

    # Block-diagonal mask over the flattened (B*P) token axis: with p-major row
    # ordering, tokens r and c belong to the same image iff r % B == c % B.
    rb = jax.lax.broadcasted_iota(jnp.int32, (S, S), 0) % B
    cb = jax.lax.broadcasted_iota(jnp.int32, (S, S), 1) % B
    neg = jnp.where(rb == cb, jnp.float32(0.0), jnp.float32(-1e30))

    # ---- TransformerEncoder: post-norm (norm_first=False), relu, unrolled ----
    for l in range(NUM_LAYERS):
        wl = w_l128_ref[l]             # (D, 3D | D | FF) bf16: Wqkv, Wo, W1
        w2 = w_l256_ref[l]             # (FF, D) bf16
        base = S + 8 * l

        # fused QKV: one (S,128)x(128,384) matmul, sliced at 128-lane boundaries
        qkv = mm(x, wl[:, 0:3 * D]) + bias[base:base + 1, 0:3 * D]
        q, k, v = qkv[:, 0:D], qkv[:, D:2 * D], qkv[:, 2 * D:3 * D]
        wo = wl[:, 3 * D:4 * D]

        attn = jnp.zeros((S, D), jnp.float32)
        for h in range(H):
            qh = q[:, h * dh:(h + 1) * dh]     # sub-128 vreg slices: cheap selects
            kh = k[:, h * dh:(h + 1) * dh]
            vh = v[:, h * dh:(h + 1) * dh]
            # 2-D attention over the (S, S) token axis, cross-batch masked.
            s = jax.lax.dot_general(qh, kh, (((1,), (1,)), ((), ())),
                                    preferred_element_type=jnp.float32) + neg
            s = s - jnp.max(s, axis=-1, keepdims=True)
            pr = jnp.exp(s)
            pr = pr * pl.reciprocal(jnp.sum(pr, axis=-1, keepdims=True),
                                    approx=True)
            ctx = jnp.dot(pr, vh, preferred_element_type=jnp.float32)
            # fold each head straight into the output projection (no concat)
            attn = attn + mm(ctx, wo[h * dh:(h + 1) * dh, :])
        attn = attn + bias[base + 1:base + 2, 0:D]

        yr = layernorm(x + attn, bias[base + 2:base + 3, 0:D],
                       bias[base + 3:base + 4, 0:D])

        hdn = jnp.maximum(mm(yr, wl[:, 4 * D:4 * D + FF])
                          + bias[base + 4:base + 5, 0:FF], 0.0)    # relu
        ffn = mm(hdn, w2) + bias[base + 5:base + 6, 0:D]

        x = layernorm(yr + ffn, bias[base + 6:base + 7, 0:D],
                      bias[base + 7:base + 8, 0:D])

    # ---- mlp_head: LayerNorm + (Linear ⊗ from_embedding ⊗ case-1 zero pad),
    #      rearrange/pad folded into w_head at init time; select each patch's
    #      token rows with one-hot matmuls and accumulate into the image.
    hb = S + 8 * NUM_LAYERS
    yh = layernorm(x, bias[hb:hb + 1, 0:D], bias[hb + 1:hb + 2, 0:D])
    out = jnp.zeros((B, NPIX), jnp.float32)
    for p in range(P):
        yh_p = jnp.dot(onehot(B, S, p * B), yh,
                       preferred_element_type=jnp.float32)   # rows p*B .. p*B+B-1
        out = out + mm(yh_p, w_head_ref[p * D:(p + 1) * D, :])
    out_ref[...] = (out + bias[hb + 2:hb + 3, 0:NPIX]).astype(out_ref.dtype)


def fused_forward(img_flat, params):
    args = (img_flat, params['bias'], params['w_in'], params['w_l128'],
            params['w_l256'], params['w_head'])
    vmem = pl.BlockSpec(memory_space=pltpu.MemorySpace.VMEM)
    # TODO(synk): for non-toy batch sizes add a row grid over B*P with
    # dimension_semantics=("parallel",) so v7x's two TensorCores split the work
    # (cap row tiles ~8K on v7x / ~16K on v5e-v6e); pointless at 8 rows.
    return pl.pallas_call(
        fused_forward_kernel,
        out_shape=jax.ShapeDtypeStruct((img_flat.shape[0], NPIX), jnp.float32),
        in_specs=[vmem] * len(args),
        out_specs=vmem,
    )(*args)


# ---------------- parameter init (raw params -> packed/folded slabs) ----------
def init_params(key):
    ks = iter(jax.random.split(key, 32))

    def nrm(shape, scale=0.05):
        return np.asarray(scale * jax.random.normal(next(ks), shape, jnp.float32))

    D, FF, P, B, L = D_MODEL, DIM_FF, NUM_PATCHES, BATCH, NUM_LAYERS
    scale = 1.0 / float(HEAD_DIM) ** 0.5

    # raw parameters (Linear weights stored (in, out); transpose nn.Linear
    # weights / split in_proj per-projection when loading a PyTorch checkpoint)
    pos = nrm((P, D), 0.02)
    patch_w = nrm((PATCH_DIM, D)); patch_b = nrm((D,))
    wq = nrm((L, D, D)); bq = nrm((L, D))
    wk = nrm((L, D, D)); bk = nrm((L, D))
    wv = nrm((L, D, D)); bv = nrm((L, D))
    wo = nrm((L, D, D)); bo = nrm((L, D))
    w1 = nrm((L, D, FF)); b1 = nrm((L, FF))
    w2 = nrm((L, FF, D)); b2 = nrm((L, D))
    ln1w = np.ones((L, D), np.float32); ln1b = np.zeros((L, D), np.float32)
    ln2w = np.ones((L, D), np.float32); ln2b = np.zeros((L, D), np.float32)
    hlnw = np.ones((D,), np.float32); hlnb = np.zeros((D,), np.float32)
    head_w = nrm((D, PATCH_DIM)); head_b = nrm((PATCH_DIM,))

    # fold 1/sqrt(dh) into Wq/bq; fuse QKV; pack all per-layer 128-row weights
    wq_s, bq_s = wq * scale, bq * scale
    w_l128 = np.concatenate([wq_s, wk, wv, wo, w1], axis=2)   # (L, D, 3D+D+FF)

    # fold the input gather (+crop) into the patch-embedding weight,
    # and the output rearrange (+zero pad) into the head weight.
    A = _build_input_onehot()                                  # (P, npix, patch_dim)
    w_in = np.einsum('pjk,kd->jpd', A, patch_w).reshape(NPIX, P * D)
    Bm = _build_output_onehot()                                # (P, patch_dim, npix)
    w_head = np.einsum('dk,pkm->pdm', head_w, Bm).reshape(P * D, NPIX)
    b_head_img = np.einsum('k,pkm->m', head_b, Bm)

    # one f32 slab for pos+patch-bias, all biases and LN params (row per vector)
    S = B * P
    nrows = S + 8 * L + 3
    bias = np.zeros((nrows, 3 * D), np.float32)
    bias[0:S, 0:D] = np.repeat(pos, B, axis=0) + patch_b[None, :]   # p-major rows
    for l in range(L):
        base = S + 8 * l
        bias[base + 0, 0:3 * D] = np.concatenate([bq_s[l], bk[l], bv[l]])
        bias[base + 1, 0:D] = bo[l]
        bias[base + 2, 0:D] = ln1w[l]
        bias[base + 3, 0:D] = ln1b[l]
        bias[base + 4, 0:FF] = b1[l]
        bias[base + 5, 0:D] = b2[l]
        bias[base + 6, 0:D] = ln2w[l]
        bias[base + 7, 0:D] = ln2b[l]
    hb = S + 8 * L
    bias[hb + 0, 0:D] = hlnw
    bias[hb + 1, 0:D] = hlnb
    bias[hb + 2, 0:NPIX] = b_head_img

    return {
        'bias':   jnp.asarray(bias, jnp.float32),
        'w_in':   jnp.asarray(w_in, jnp.bfloat16),
        'w_l128': jnp.asarray(w_l128, jnp.bfloat16),
        'w_l256': jnp.asarray(w2, jnp.bfloat16),
        'w_head': jnp.asarray(w_head, jnp.bfloat16),
    }


# ---------------- full forward (mirrors AntiEncoder.forward) ------------------
def anti_encoder_forward(img, params):
    b = img.shape[0]
    img_flat = img.reshape(b, NPIX)           # row-major reshape: free
    out = fused_forward(img_flat, params)     # (B, C*N*N) — everything in-kernel
    return out.reshape(b, NUMCH, N_IMG, N_IMG)


# ---------------- main ---------------------------------------------------------
if __name__ == "__main__":
    key = jax.random.PRNGKey(0)
    k_img, k_par = jax.random.split(key)
    img = jax.random.normal(k_img, (BATCH, NUMCH, N_IMG, N_IMG), jnp.float32)
    params = init_params(k_par)

    fwd = jax.jit(anti_encoder_forward)
    out = jax.block_until_ready(fwd(img, params))

    assert out.shape == (BATCH, NUMCH, N_IMG, N_IMG), out.shape
    assert bool(jnp.all(jnp.isfinite(out)))
    print("KERNEL_OK")
</pallas_src>

<mosaic_0001>
module attributes {stable_mosaic.version = 11 : i64} {
  func.func @fused_forward_kernel(%arg0: memref<2x81xf32, #tpu.memory_space<vmem>>, %arg1: memref<27x384xf32, #tpu.memory_space<vmem>>, %arg2: memref<81x512xbf16, #tpu.memory_space<vmem>>, %arg3: memref<2x128x768xbf16, #tpu.memory_space<vmem>>, %arg4: memref<2x256x128xbf16, #tpu.memory_space<vmem>>, %arg5: memref<512x81xbf16, #tpu.memory_space<vmem>>, %arg6: memref<2x81xf32, #tpu.memory_space<vmem>>) attributes {dimension_semantics = [], scalar_prefetch = 0 : i64, scratch_operands = 0 : i64, tpu.core_type = #tpu.core_type<tc>} {
    %c0 = arith.constant 0 : index
    %c0_0 = arith.constant 0 : index
    %0 = vector.load %arg1[%c0, %c0_0] : memref<27x384xf32, #tpu.memory_space<vmem>>, vector<27x384xf32>
    %c0_1 = arith.constant 0 : index
    %c0_2 = arith.constant 0 : index
    %1 = vector.load %arg0[%c0_1, %c0_2] : memref<2x81xf32, #tpu.memory_space<vmem>>, vector<2x81xf32>
    %c0_3 = arith.constant 0 : index
    %c0_4 = arith.constant 0 : index
    %2 = vector.load %arg2[%c0_3, %c0_4] : memref<81x512xbf16, #tpu.memory_space<vmem>>, vector<81x512xbf16>
    %3 = arith.truncf %1 : vector<2x81xf32> to vector<2x81xbf16>
    %cst = arith.constant dense<0.000000e+00> : vector<2x512xf32>
    %4 = tpu.matmul %3, %2, %cst {dimension_numbers = #tpu.dot_dimension_numbers<[1], [0], [0], [1], [0, 0, 1, 1], [], []>} : vector<2x81xbf16>, vector<81x512xbf16>, vector<2x512xf32> -> vector<2x512xf32>
    %cst_5 = arith.constant 0.000000e+00 : f32
    %5 = vector.broadcast %cst_5 : f32 to vector<8x128xf32>
    %6 = tpu.iota {dimensions = array<i32: 0>} : vector<8x2xi32>
    %7 = tpu.iota {dimensions = array<i32: 1>} : vector<8x2xi32>
    %c0_i32 = arith.constant 0 : i32
    %8 = vector.broadcast %c0_i32 : i32 to vector<8x2xi32>
    %9 = arith.addi %6, %8 : vector<8x2xi32>
    %10 = arith.cmpi eq, %7, %9 : vector<8x2xi32>
    %11 = arith.extui %10 : vector<8x2xi1> to vector<8x2xi32>
    %12 = arith.sitofp %11 : vector<8x2xi32> to vector<8x2xf32>
    %13 = vector.extract_strided_slice %4 {offsets = [0, 0], sizes = [2, 128], strides = [1, 1]} : vector<2x512xf32> to vector<2x128xf32>
    %cst_6 = arith.constant dense<0.000000e+00> : vector<8x128xf32>
    %14 = tpu.matmul %12, %13, %cst_6 {dimension_numbers = #tpu.dot_dimension_numbers<[1], [0], [0], [1], [0, 0, 1, 1], [], []>} : vector<8x2xf32>, vector<2x128xf32>, vector<8x128xf32> -> vector<8x128xf32>
    %15 = arith.addf %5, %14 : vector<8x128xf32>
    %16 = tpu.iota {dimensions = array<i32: 0>} : vector<8x2xi32>
    %17 = tpu.iota {dimensions = array<i32: 1>} : vector<8x2xi32>
    %c-2_i32 = arith.constant -2 : i32
    %18 = vector.broadcast %c-2_i32 : i32 to vector<8x2xi32>
    %19 = arith.addi %16, %18 : vector<8x2xi32>
    %20 = arith.cmpi eq, %17, %19 : vector<8x2xi32>
    %21 = arith.extui %20 : vector<8x2xi1> to vector<8x2xi32>
    %22 = arith.sitofp %21 : vector<8x2xi32> to vector<8x2xf32>
    %23 = vector.extract_strided_slice %4 {offsets = [0, 128], sizes = [2, 128], strides = [1, 1]} : vector<2x512xf32> to vector<2x128xf32>
    %cst_7 = arith.constant dense<0.000000e+00> : vector<8x128xf32>
    %24 = tpu.matmul %22, %23, %cst_7 {dimension_numbers = #tpu.dot_dimension_numbers<[1], [0], [0], [1], [0, 0, 1, 1], [], []>} : vector<8x2xf32>, vector<2x128xf32>, vector<8x128xf32> -> vector<8x128xf32>
    %25 = arith.addf %15, %24 : vector<8x128xf32>
    %26 = tpu.iota {dimensions = array<i32: 0>} : vector<8x2xi32>
    %27 = tpu.iota {dimensions = array<i32: 1>} : vector<8x2xi32>
    %c-4_i32 = arith.constant -4 : i32
    %28 = vector.broadcast %c-4_i32 : i32 to vector<8x2xi32>
    %29 = arith.addi %26, %28 : vector<8x2xi32>
    %30 = arith.cmpi eq, %27, %29 : vector<8x2xi32>
    %31 = arith.extui %30 : vector<8x2xi1> to vector<8x2xi32>
    %32 = arith.sitofp %31 : vector<8x2xi32> to vector<8x2xf32>
    %33 = vector.extract_strided_slice %4 {offsets = [0, 256], sizes = [2, 128], strides = [1, 1]} : vector<2x512xf32> to vector<2x128xf32>
    %cst_8 = arith.constant dense<0.000000e+00> : vector<8x128xf32>
    %34 = tpu.matmul %32, %33, %cst_8 {dimension_numbers = #tpu.dot_dimension_numbers<[1], [0], [0], [1], [0, 0, 1, 1], [], []>} : vector<8x2xf32>, vector<2x128xf32>, vector<8x128xf32> -> vector<8x128xf32>
    %35 = arith.addf %25, %34 : vector<8x128xf32>
    %36 = tpu.iota {dimensions = array<i32: 0>} : vector<8x2xi32>
    %37 = tpu.iota {dimensions = array<i32: 1>} : vector<8x2xi32>
    %c-6_i32 = arith.constant -6 : i32
    %38 = vector.broadcast %c-6_i32 : i32 to vector<8x2xi32>
    %39 = arith.addi %36, %38 : vector<8x2xi32>
    %40 = arith.cmpi eq, %37, %39 : vector<8x2xi32>
    %41 = arith.extui %40 : vector<8x2xi1> to vector<8x2xi32>
    %42 = arith.sitofp %41 : vector<8x2xi32> to vector<8x2xf32>
    %43 = vector.extract_strided_slice %4 {offsets = [0, 384], sizes = [2, 128], strides = [1, 1]} : vector<2x512xf32> to vector<2x128xf32>
    %cst_9 = arith.constant dense<0.000000e+00> : vector<8x128xf32>
    %44 = tpu.matmul %42, %43, %cst_9 {dimension_numbers = #tpu.dot_dimension_numbers<[1], [0], [0], [1], [0, 0, 1, 1], [], []>} : vector<8x2xf32>, vector<2x128xf32>, vector<8x128xf32> -> vector<8x128xf32>
    %45 = arith.addf %35, %44 : vector<8x128xf32>
    %46 = vector.extract_strided_slice %0 {offsets = [0, 0], sizes = [8, 128], strides = [1, 1]} : vector<27x384xf32> to vector<8x128xf32>
    %47 = arith.addf %45, %46 : vector<8x128xf32>
    %48 = tpu.iota {dimensions = array<i32: 0>} : vector<8x8xi32>
    %c2_i32 = arith.constant 2 : i32
    %c0_i32_10 = arith.constant 0 : i32
    %49 = arith.cmpi eq, %c2_i32, %c0_i32_10 : i32
    %c1_i32 = arith.constant 1 : i32
    %50 = arith.select %49, %c1_i32, %c2_i32 : i32
    %51 = vector.broadcast %50 : i32 to vector<8x8xi32>
    %52 = arith.remsi %48, %51 : vector<8x8xi32>
    %c0_i32_11 = arith.constant 0 : i32
    %53 = vector.broadcast %c0_i32_11 : i32 to vector<8x8xi32>
    %54 = arith.cmpi ne, %52, %53 : vector<8x8xi32>
    %c0_i32_12 = arith.constant 0 : i32
    %55 = vector.broadcast %c0_i32_12 : i32 to vector<8x8xi32>
    %56 = arith.cmpi slt, %52, %55 : vector<8x8xi32>
    %c0_i32_13 = arith.constant 0 : i32
    %57 = arith.cmpi slt, %50, %c0_i32_13 : i32
    %58 = vector.broadcast %57 : i1 to vector<8x8xi1>
    %59 = vector.broadcast %58 : vector<8x8xi1> to vector<8x8xi1>
    %60 = arith.xori %56, %59 : vector<8x8xi1>
    %61 = arith.andi %60, %54 : vector<8x8xi1>
    %62 = vector.broadcast %50 : i32 to vector<8x8xi32>
    %63 = arith.addi %52, %62 : vector<8x8xi32>
    %64 = arith.select %61, %63, %52 : vector<8x8xi1>, vector<8x8xi32>
    %65 = tpu.iota {dimensions = array<i32: 1>} : vector<8x8xi32>
    %c2_i32_14 = arith.constant 2 : i32
    %c0_i32_15 = arith.constant 0 : i32
    %66 = arith.cmpi eq, %c2_i32_14, %c0_i32_15 : i32
    %c1_i32_16 = arith.constant 1 : i32
    %67 = arith.select %66, %c1_i32_16, %c2_i32_14 : i32
    %68 = vector.broadcast %67 : i32 to vector<8x8xi32>
    %69 = arith.remsi %65, %68 : vector<8x8xi32>
    %c0_i32_17 = arith.constant 0 : i32
    %70 = vector.broadcast %c0_i32_17 : i32 to vector<8x8xi32>
    %71 = arith.cmpi ne, %69, %70 : vector<8x8xi32>
    %c0_i32_18 = arith.constant 0 : i32
    %72 = vector.broadcast %c0_i32_18 : i32 to vector<8x8xi32>
    %73 = arith.cmpi slt, %69, %72 : vector<8x8xi32>
    %c0_i32_19 = arith.constant 0 : i32
    %74 = arith.cmpi slt, %67, %c0_i32_19 : i32
    %75 = vector.broadcast %74 : i1 to vector<8x8xi1>
    %76 = vector.broadcast %75 : vector<8x8xi1> to vector<8x8xi1>
    %77 = arith.xori %73, %76 : vector<8x8xi1>
    %78 = arith.andi %77, %71 : vector<8x8xi1>
    %79 = vector.broadcast %67 : i32 to vector<8x8xi32>
    %80 = arith.addi %69, %79 : vector<8x8xi32>
    %81 = arith.select %78, %80, %69 : vector<8x8xi1>, vector<8x8xi32>
    %82 = arith.cmpi eq, %64, %81 : vector<8x8xi32>
    %cst_20 = arith.constant 0.000000e+00 : f32
    %cst_21 = arith.constant -1.000000e+30 : f32
    %83 = vector.broadcast %cst_20 : f32 to vector<8x8xf32>
    %84 = vector.broadcast %cst_21 : f32 to vector<8x8xf32>
    %85 = arith.select %82, %83, %84 : vector<8x8xi1>, vector<8x8xf32>
    %c0_22 = arith.constant 0 : index
    %c0_23 = arith.constant 0 : index
    %c0_24 = arith.constant 0 : index
    %86 = vector.load %arg3[%c0_22, %c0_23, %c0_24] : memref<2x128x768xbf16, #tpu.memory_space<vmem>>, vector<1x128x768xbf16>
    %87 = vector.shape_cast %86 : vector<1x128x768xbf16> to vector<128x768xbf16>
    %c0_25 = arith.constant 0 : index
    %c0_26 = arith.constant 0 : index
    %c0_27 = arith.constant 0 : index
    %88 = vector.load %arg4[%c0_25, %c0_26, %c0_27] : memref<2x256x128xbf16, #tpu.memory_space<vmem>>, vector<1x256x128xbf16>
    %89 = vector.shape_cast %88 : vector<1x256x128xbf16> to vector<256x128xbf16>
    %90 = vector.extract_strided_slice %87 {offsets = [0, 0], sizes = [128, 384], strides = [1, 1]} : vector<128x768xbf16> to vector<128x384xbf16>
    %91 = arith.truncf %47 : vector<8x128xf32> to vector<8x128xbf16>
    %cst_28 = arith.constant dense<0.000000e+00> : vector<8x384xf32>
    %92 = tpu.matmul %91, %90, %cst_28 {dimension_numbers = #tpu.dot_dimension_numbers<[1], [0], [0], [1], [0, 0, 1, 1], [], []>} : vector<8x128xbf16>, vector<128x384xbf16>, vector<8x384xf32> -> vector<8x384xf32>
    %93 = vector.extract_strided_slice %0 {offsets = [8, 0], sizes = [1, 384], strides = [1, 1]} : vector<27x384xf32> to vector<1x384xf32>
    %94 = vector.broadcast %93 : vector<1x384xf32> to vector<8x384xf32>
    %95 = arith.addf %92, %94 : vector<8x384xf32>
    %96 = vector.extract_strided_slice %95 {offsets = [0, 0], sizes = [8, 128], strides = [1, 1]} : vector<8x384xf32> to vector<8x128xf32>
    %97 = vector.extract_strided_slice %95 {offsets = [0, 128], sizes = [8, 128], strides = [1, 1]} : vector<8x384xf32> to vector<8x128xf32>
    %98 = vector.extract_strided_slice %95 {offsets = [0, 256], sizes = [8, 128], strides = [1, 1]} : vector<8x384xf32> to vector<8x128xf32>
    %99 = vector.extract_strided_slice %87 {offsets = [0, 384], sizes = [128, 128], strides = [1, 1]} : vector<128x768xbf16> to vector<128x128xbf16>
    %cst_29 = arith.constant 0.000000e+00 : f32
    %100 = vector.broadcast %cst_29 : f32 to vector<8x128xf32>
    %101 = vector.extract_strided_slice %96 {offsets = [0, 0], sizes = [8, 32], strides = [1, 1]} : vector<8x128xf32> to vector<8x32xf32>
    %102 = vector.extract_strided_slice %97 {offsets = [0, 0], sizes = [8, 32], strides = [1, 1]} : vector<8x128xf32> to vector<8x32xf32>
    %103 = vector.extract_strided_slice %98 {offsets = [0, 0], sizes = [8, 32], strides = [1, 1]} : vector<8x128xf32> to vector<8x32xf32>
    %cst_30 = arith.constant dense<0.000000e+00> : vector<8x8xf32>
    %104 = tpu.matmul %101, %102, %cst_30 {dimension_numbers = #tpu.dot_dimension_numbers<[1], [1], [0], [0], [0, 0, 1, 0], [], []>} : vector<8x32xf32>, vector<8x32xf32>, vector<8x8xf32> -> vector<8x8xf32>
    %105 = arith.addf %104, %85 : vector<8x8xf32>
    %cst_31 = arith.constant dense<0xFF800000> : vector<8xf32>
    %106 = vector.multi_reduction <maximumf>, %105, %cst_31 [1] : vector<8x8xf32> to vector<8xf32>
    %107 = vector.shape_cast %106 : vector<8xf32> to vector<8x1xf32>
    %108 = vector.broadcast %107 : vector<8x1xf32> to vector<8x8xf32>
    %109 = arith.subf %105, %108 : vector<8x8xf32>
    %110 = math.exp %109 : vector<8x8xf32>
    %cst_32 = arith.constant dense<0.000000e+00> : vector<8xf32>
    %111 = vector.multi_reduction <add>, %110, %cst_32 [1] : vector<8x8xf32> to vector<8xf32>
    %112 = vector.shape_cast %111 : vector<8xf32> to vector<8x1xf32>
    %113 = tpu.reciprocal %112 {approx = true} : vector<8x1xf32> -> vector<8x1xf32>
    %114 = vector.broadcast %113 : vector<8x1xf32> to vector<8x8xf32>
    %115 = arith.mulf %110, %114 : vector<8x8xf32>
    %cst_33 = arith.constant dense<0.000000e+00> : vector<8x32xf32>
    %116 = tpu.matmul %115, %103, %cst_33 {dimension_numbers = #tpu.dot_dimension_numbers<[1], [0], [0], [1], [0, 0, 1, 1], [], []>} : vector<8x8xf32>, vector<8x32xf32>, vector<8x32xf32> -> vector<8x32xf32>
    %117 = vector.extract_strided_slice %99 {offsets = [0, 0], sizes = [32, 128], strides = [1, 1]} : vector<128x128xbf16> to vector<32x128xbf16>
    %118 = arith.truncf %116 : vector<8x32xf32> to vector<8x32xbf16>
    %cst_34 = arith.constant dense<0.000000e+00> : vector<8x128xf32>
    %119 = tpu.matmul %118, %117, %cst_34 {dimension_numbers = #tpu.dot_dimension_numbers<[1], [0], [0], [1], [0, 0, 1, 1], [], []>} : vector<8x32xbf16>, vector<32x128xbf16>, vector<8x128xf32> -> vector<8x128xf32>
    %120 = arith.addf %100, %119 : vector<8x128xf32>
    %121 = vector.extract_strided_slice %96 {offsets = [0, 32], sizes = [8, 32], strides = [1, 1]} : vector<8x128xf32> to vector<8x32xf32>
    %122 = vector.extract_strided_slice %97 {offsets = [0, 32], sizes = [8, 32], strides = [1, 1]} : vector<8x128xf32> to vector<8x32xf32>
    %123 = vector.extract_strided_slice %98 {offsets = [0, 32], sizes = [8, 32], strides = [1, 1]} : vector<8x128xf32> to vector<8x32xf32>
    %cst_35 = arith.constant dense<0.000000e+00> : vector<8x8xf32>
    %124 = tpu.matmul %121, %122, %cst_35 {dimension_numbers = #tpu.dot_dimension_numbers<[1], [1], [0], [0], [0, 0, 1, 0], [], []>} : vector<8x32xf32>, vector<8x32xf32>, vector<8x8xf32> -> vector<8x8xf32>
    %125 = arith.addf %124, %85 : vector<8x8xf32>
    %cst_36 = arith.constant dense<0xFF800000> : vector<8xf32>
    %126 = vector.multi_reduction <maximumf>, %125, %cst_36 [1] : vector<8x8xf32> to vector<8xf32>
    %127 = vector.shape_cast %126 : vector<8xf32> to vector<8x1xf32>
    %128 = vector.broadcast %127 : vector<8x1xf32> to vector<8x8xf32>
    %129 = arith.subf %125, %128 : vector<8x8xf32>
    %130 = math.exp %129 : vector<8x8xf32>
    %cst_37 = arith.constant dense<0.000000e+00> : vector<8xf32>
    %131 = vector.multi_reduction <add>, %130, %cst_37 [1] : vector<8x8xf32> to vector<8xf32>
    %132 = vector.shape_cast %131 : vector<8xf32> to vector<8x1xf32>
    %133 = tpu.reciprocal %132 {approx = true} : vector<8x1xf32> -> vector<8x1xf32>
    %134 = vector.broadcast %133 : vector<8x1xf32> to vector<8x8xf32>
    %135 = arith.mulf %130, %134 : vector<8x8xf32>
    %cst_38 = arith.constant dense<0.000000e+00> : vector<8x32xf32>
    %136 = tpu.matmul %135, %123, %cst_38 {dimension_numbers = #tpu.dot_dimension_numbers<[1], [0], [0], [1], [0, 0, 1, 1], [], []>} : vector<8x8xf32>, vector<8x32xf32>, vector<8x32xf32> -> vector<8x32xf32>
    %137 = vector.extract_strided_slice %99 {offsets = [32, 0], sizes = [32, 128], strides = [1, 1]} : vector<128x128xbf16> to vector<32x128xbf16>
    %138 = arith.truncf %136 : vector<8x32xf32> to vector<8x32xbf16>
    %cst_39 = arith.constant dense<0.000000e+00> : vector<8x128xf32>
    %139 = tpu.matmul %138, %137, %cst_39 {dimension_numbers = #tpu.dot_dimension_numbers<[1], [0], [0], [1], [0, 0, 1, 1], [], []>} : vector<8x32xbf16>, vector<32x128xbf16>, vector<8x128xf32> -> vector<8x128xf32>
    %140 = arith.addf %120, %139 : vector<8x128xf32>
    %141 = vector.extract_strided_slice %96 {offsets = [0, 64], sizes = [8, 32], strides = [1, 1]} : vector<8x128xf32> to vector<8x32xf32>
    %142 = vector.extract_strided_slice %97 {offsets = [0, 64], sizes = [8, 32], strides = [1, 1]} : vector<8x128xf32> to vector<8x32xf32>
    %143 = vector.extract_strided_slice %98 {offsets = [0, 64], sizes = [8, 32], strides = [1, 1]} : vector<8x128xf32> to vector<8x32xf32>
    %cst_40 = arith.constant dense<0.000000e+00> : vector<8x8xf32>
    %144 = tpu.matmul %141, %142, %cst_40 {dimension_numbers = #tpu.dot_dimension_numbers<[1], [1], [0], [0], [0, 0, 1, 0], [], []>} : vector<8x32xf32>, vector<8x32xf32>, vector<8x8xf32> -> vector<8x8xf32>
    %145 = arith.addf %144, %85 : vector<8x8xf32>
    %cst_41 = arith.constant dense<0xFF800000> : vector<8xf32>
    %146 = vector.multi_reduction <maximumf>, %145, %cst_41 [1] : vector<8x8xf32> to vector<8xf32>
    %147 = vector.shape_cast %146 : vector<8xf32> to vector<8x1xf32>
    %148 = vector.broadcast %147 : vector<8x1xf32> to vector<8x8xf32>
    %149 = arith.subf %145, %148 : vector<8x8xf32>
    %150 = math.exp %149 : vector<8x8xf32>
    %cst_42 = arith.constant dense<0.000000e+00> : vector<8xf32>
    %151 = vector.multi_reduction <add>, %150, %cst_42 [1] : vector<8x8xf32> to vector<8xf32>
    %152 = vector.shape_cast %151 : vector<8xf32> to vector<8x1xf32>
    %153 = tpu.reciprocal %152 {approx = true} : vector<8x1xf32> -> vector<8x1xf32>
    %154 = vector.broadcast %153 : vector<8x1xf32> to vector<8x8xf32>
    %155 = arith.mulf %150, %154 : vector<8x8xf32>
    %cst_43 = arith.constant dense<0.000000e+00> : vector<8x32xf32>
    %156 = tpu.matmul %155, %143, %cst_43 {dimension_numbers = #tpu.dot_dimension_numbers<[1], [0], [0], [1], [0, 0, 1, 1], [], []>} : vector<8x8xf32>, vector<8x32xf32>, vector<8x32xf32> -> vector<8x32xf32>
    %157 = vector.extract_strided_slice %99 {offsets = [64, 0], sizes = [32, 128], strides = [1, 1]} : vector<128x128xbf16> to vector<32x128xbf16>
    %158 = arith.truncf %156 : vector<8x32xf32> to vector<8x32xbf16>
    %cst_44 = arith.constant dense<0.000000e+00> : vector<8x128xf32>
    %159 = tpu.matmul %158, %157, %cst_44 {dimension_numbers = #tpu.dot_dimension_numbers<[1], [0], [0], [1], [0, 0, 1, 1], [], []>} : vector<8x32xbf16>, vector<32x128xbf16>, vector<8x128xf32> -> vector<8x128xf32>
    %160 = arith.addf %140, %159 : vector<8x128xf32>
    %161 = vector.extract_strided_slice %96 {offsets = [0, 96], sizes = [8, 32], strides = [1, 1]} : vector<8x128xf32> to vector<8x32xf32>
    %162 = vector.extract_strided_slice %97 {offsets = [0, 96], sizes = [8, 32], strides = [1, 1]} : vector<8x128xf32> to vector<8x32xf32>
    %163 = vector.extract_strided_slice %98 {offsets = [0, 96], sizes = [8, 32], strides = [1, 1]} : vector<8x128xf32> to vector<8x32xf32>
    %cst_45 = arith.constant dense<0.000000e+00> : vector<8x8xf32>
    %164 = tpu.matmul %161, %162, %cst_45 {dimension_numbers = #tpu.dot_dimension_numbers<[1], [1], [0], [0], [0, 0, 1, 0], [], []>} : vector<8x32xf32>, vector<8x32xf32>, vector<8x8xf32> -> vector<8x8xf32>
    %165 = arith.addf %164, %85 : vector<8x8xf32>
    %cst_46 = arith.constant dense<0xFF800000> : vector<8xf32>
    %166 = vector.multi_reduction <maximumf>, %165, %cst_46 [1] : vector<8x8xf32> to vector<8xf32>
    %167 = vector.shape_cast %166 : vector<8xf32> to vector<8x1xf32>
    %168 = vector.broadcast %167 : vector<8x1xf32> to vector<8x8xf32>
    %169 = arith.subf %165, %168 : vector<8x8xf32>
    %170 = math.exp %169 : vector<8x8xf32>
    %cst_47 = arith.constant dense<0.000000e+00> : vector<8xf32>
    %171 = vector.multi_reduction <add>, %170, %cst_47 [1] : vector<8x8xf32> to vector<8xf32>
    %172 = vector.shape_cast %171 : vector<8xf32> to vector<8x1xf32>
    %173 = tpu.reciprocal %172 {approx = true} : vector<8x1xf32> -> vector<8x1xf32>
    %174 = vector.broadcast %173 : vector<8x1xf32> to vector<8x8xf32>
    %175 = arith.mulf %170, %174 : vector<8x8xf32>
    %cst_48 = arith.constant dense<0.000000e+00> : vector<8x32xf32>
    %176 = tpu.matmul %175, %163, %cst_48 {dimension_numbers = #tpu.dot_dimension_numbers<[1], [0], [0], [1], [0, 0, 1, 1], [], []>} : vector<8x8xf32>, vector<8x32xf32>, vector<8x32xf32> -> vector<8x32xf32>
    %177 = vector.extract_strided_slice %99 {offsets = [96, 0], sizes = [32, 128], strides = [1, 1]} : vector<128x128xbf16> to vector<32x128xbf16>
    %178 = arith.truncf %176 : vector<8x32xf32> to vector<8x32xbf16>
    %cst_49 = arith.constant dense<0.000000e+00> : vector<8x128xf32>
    %179 = tpu.matmul %178, %177, %cst_49 {dimension_numbers = #tpu.dot_dimension_numbers<[1], [0], [0], [1], [0, 0, 1, 1], [], []>} : vector<8x32xbf16>, vector<32x128xbf16>, vector<8x128xf32> -> vector<8x128xf32>
    %180 = arith.addf %160, %179 : vector<8x128xf32>
    %181 = vector.extract_strided_slice %0 {offsets = [9, 0], sizes = [1, 128], strides = [1, 1]} : vector<27x384xf32> to vector<1x128xf32>
    %182 = vector.broadcast %181 : vector<1x128xf32> to vector<8x128xf32>
    %183 = arith.addf %180, %182 : vector<8x128xf32>
    %184 = arith.addf %47, %183 : vector<8x128xf32>
    %185 = vector.extract_strided_slice %0 {offsets = [10, 0], sizes = [1, 128], strides = [1, 1]} : vector<27x384xf32> to vector<1x128xf32>
    %186 = vector.extract_strided_slice %0 {offsets = [11, 0], sizes = [1, 128], strides = [1, 1]} : vector<27x384xf32> to vector<1x128xf32>
    %cst_50 = arith.constant dense<0.000000e+00> : vector<8xf32>
    %187 = vector.multi_reduction <add>, %184, %cst_50 [1] : vector<8x128xf32> to vector<8xf32>
    %188 = vector.shape_cast %187 : vector<8xf32> to vector<8x1xf32>
    %cst_51 = arith.constant 1.280000e+02 : f32
    %189 = vector.broadcast %cst_51 : f32 to vector<8x1xf32>
    %190 = arith.divf %188, %189 : vector<8x1xf32>
    %191 = vector.broadcast %190 : vector<8x1xf32> to vector<8x128xf32>
    %192 = arith.subf %184, %191 : vector<8x128xf32>
    %193 = arith.mulf %192, %192 : vector<8x128xf32>
    %cst_52 = arith.constant dense<0.000000e+00> : vector<8xf32>
    %194 = vector.multi_reduction <add>, %193, %cst_52 [1] : vector<8x128xf32> to vector<8xf32>
    %195 = vector.shape_cast %194 : vector<8xf32> to vector<8x1xf32>
    %cst_53 = arith.constant 1.280000e+02 : f32
    %196 = vector.broadcast %cst_53 : f32 to vector<8x1xf32>
    %197 = arith.divf %195, %196 : vector<8x1xf32>
    %cst_54 = arith.constant 9.99999974E-6 : f32
    %198 = vector.broadcast %cst_54 : f32 to vector<8x1xf32>
    %199 = arith.addf %197, %198 : vector<8x1xf32>
    %200 = math.rsqrt %199 : vector<8x1xf32>
    %201 = vector.broadcast %200 : vector<8x1xf32> to vector<8x128xf32>
    %202 = arith.mulf %192, %201 : vector<8x128xf32>
    %203 = vector.broadcast %185 : vector<1x128xf32> to vector<8x128xf32>
    %204 = arith.mulf %202, %203 : vector<8x128xf32>
    %205 = vector.broadcast %186 : vector<1x128xf32> to vector<8x128xf32>
    %206 = arith.addf %204, %205 : vector<8x128xf32>
    %207 = vector.extract_strided_slice %87 {offsets = [0, 512], sizes = [128, 256], strides = [1, 1]} : vector<128x768xbf16> to vector<128x256xbf16>
    %208 = arith.truncf %206 : vector<8x128xf32> to vector<8x128xbf16>
    %cst_55 = arith.constant dense<0.000000e+00> : vector<8x256xf32>
    %209 = tpu.matmul %208, %207, %cst_55 {dimension_numbers = #tpu.dot_dimension_numbers<[1], [0], [0], [1], [0, 0, 1, 1], [], []>} : vector<8x128xbf16>, vector<128x256xbf16>, vector<8x256xf32> -> vector<8x256xf32>
    %210 = vector.extract_strided_slice %0 {offsets = [12, 0], sizes = [1, 256], strides = [1, 1]} : vector<27x384xf32> to vector<1x256xf32>
    %211 = vector.broadcast %210 : vector<1x256xf32> to vector<8x256xf32>
    %212 = arith.addf %209, %211 : vector<8x256xf32>
    %cst_56 = arith.constant 0.000000e+00 : f32
    %213 = vector.broadcast %cst_56 : f32 to vector<8x256xf32>
    %214 = arith.maximumf %212, %213 : vector<8x256xf32>
    %215 = arith.truncf %214 : vector<8x256xf32> to vector<8x256xbf16>
    %cst_57 = arith.constant dense<0.000000e+00> : vector<8x128xf32>
    %216 = tpu.matmul %215, %89, %cst_57 {dimension_numbers = #tpu.dot_dimension_numbers<[1], [0], [0], [1], [0, 0, 1, 1], [], []>} : vector<8x256xbf16>, vector<256x128xbf16>, vector<8x128xf32> -> vector<8x128xf32>
    %217 = vector.extract_strided_slice %0 {offsets = [13, 0], sizes = [1, 128], strides = [1, 1]} : vector<27x384xf32> to vector<1x128xf32>
    %218 = vector.broadcast %217 : vector<1x128xf32> to vector<8x128xf32>
    %219 = arith.addf %216, %218 : vector<8x128xf32>
    %220 = arith.addf %206, %219 : vector<8x128xf32>
    %221 = vector.extract_strided_slice %0 {offsets = [14, 0], sizes = [1, 128], strides = [1, 1]} : vector<27x384xf32> to vector<1x128xf32>
    %222 = vector.extract_strided_slice %0 {offsets = [15, 0], sizes = [1, 128], strides = [1, 1]} : vector<27x384xf32> to vector<1x128xf32>
    %cst_58 = arith.constant dense<0.000000e+00> : vector<8xf32>
    %223 = vector.multi_reduction <add>, %220, %cst_58 [1] : vector<8x128xf32> to vector<8xf32>
    %224 = vector.shape_cast %223 : vector<8xf32> to vector<8x1xf32>
    %cst_59 = arith.constant 1.280000e+02 : f32
    %225 = vector.broadcast %cst_59 : f32 to vector<8x1xf32>
    %226 = arith.divf %224, %225 : vector<8x1xf32>
    %227 = vector.broadcast %226 : vector<8x1xf32> to vector<8x128xf32>
    %228 = arith.subf %220, %227 : vector<8x128xf32>
    %229 = arith.mulf %228, %228 : vector<8x128xf32>
    %cst_60 = arith.constant dense<0.000000e+00> : vector<8xf32>
    %230 = vector.multi_reduction <add>, %229, %cst_60 [1] : vector<8x128xf32> to vector<8xf32>
    %231 = vector.shape_cast %230 : vector<8xf32> to vector<8x1xf32>
    %cst_61 = arith.constant 1.280000e+02 : f32
    %232 = vector.broadcast %cst_61 : f32 to vector<8x1xf32>
    %233 = arith.divf %231, %232 : vector<8x1xf32>
    %cst_62 = arith.constant 9.99999974E-6 : f32
    %234 = vector.broadcast %cst_62 : f32 to vector<8x1xf32>
    %235 = arith.addf %233, %234 : vector<8x1xf32>
    %236 = math.rsqrt %235 : vector<8x1xf32>
    %237 = vector.broadcast %236 : vector<8x1xf32> to vector<8x128xf32>
    %238 = arith.mulf %228, %237 : vector<8x128xf32>
    %239 = vector.broadcast %221 : vector<1x128xf32> to vector<8x128xf32>
    %240 = arith.mulf %238, %239 : vector<8x128xf32>
    %241 = vector.broadcast %222 : vector<1x128xf32> to vector<8x128xf32>
    %242 = arith.addf %240, %241 : vector<8x128xf32>
    %c1 = arith.constant 1 : index
    %c0_63 = arith.constant 0 : index
    %c0_64 = arith.constant 0 : index
    %243 = vector.load %arg3[%c1, %c0_63, %c0_64] : memref<2x128x768xbf16, #tpu.memory_space<vmem>>, vector<1x128x768xbf16>
    %244 = vector.shape_cast %243 : vector<1x128x768xbf16> to vector<128x768xbf16>
    %c1_65 = arith.constant 1 : index
    %c0_66 = arith.constant 0 : index
    %c0_67 = arith.constant 0 : index
    %245 = vector.load %arg4[%c1_65, %c0_66, %c0_67] : memref<2x256x128xbf16, #tpu.memory_space<vmem>>, vector<1x256x128xbf16>
    %246 = vector.shape_cast %245 : vector<1x256x128xbf16> to vector<256x128xbf16>
    %247 = vector.extract_strided_slice %244 {offsets = [0, 0], sizes = [128, 384], strides = [1, 1]} : vector<128x768xbf16> to vector<128x384xbf16>
    %248 = arith.truncf %242 : vector<8x128xf32> to vector<8x128xbf16>
    %cst_68 = arith.constant dense<0.000000e+00> : vector<8x384xf32>
    %249 = tpu.matmul %248, %247, %cst_68 {dimension_numbers = #tpu.dot_dimension_numbers<[1], [0], [0], [1], [0, 0, 1, 1], [], []>} : vector<8x128xbf16>, vector<128x384xbf16>, vector<8x384xf32> -> vector<8x384xf32>
    %250 = vector.extract_strided_slice %0 {offsets = [16, 0], sizes = [1, 384], strides = [1, 1]} : vector<27x384xf32> to vector<1x384xf32>
    %251 = vector.broadcast %250 : vector<1x384xf32> to vector<8x384xf32>
    %252 = arith.addf %249, %251 : vector<8x384xf32>
    %253 = vector.extract_strided_slice %252 {offsets = [0, 0], sizes = [8, 128], strides = [1, 1]} : vector<8x384xf32> to vector<8x128xf32>
    %254 = vector.extract_strided_slice %252 {offsets = [0, 128], sizes = [8, 128], strides = [1, 1]} : vector<8x384xf32> to vector<8x128xf32>
    %255 = vector.extract_strided_slice %252 {offsets = [0, 256], sizes = [8, 128], strides = [1, 1]} : vector<8x384xf32> to vector<8x128xf32>
    %256 = vector.extract_strided_slice %244 {offsets = [0, 384], sizes = [128, 128], strides = [1, 1]} : vector<128x768xbf16> to vector<128x128xbf16>
    %cst_69 = arith.constant 0.000000e+00 : f32
    %257 = vector.broadcast %cst_69 : f32 to vector<8x128xf32>
    %258 = vector.extract_strided_slice %253 {offsets = [0, 0], sizes = [8, 32], strides = [1, 1]} : vector<8x128xf32> to vector<8x32xf32>
    %259 = vector.extract_strided_slice %254 {offsets = [0, 0], sizes = [8, 32], strides = [1, 1]} : vector<8x128xf32> to vector<8x32xf32>
    %260 = vector.extract_strided_slice %255 {offsets = [0, 0], sizes = [8, 32], strides = [1, 1]} : vector<8x128xf32> to vector<8x32xf32>
    %cst_70 = arith.constant dense<0.000000e+00> : vector<8x8xf32>
    %261 = tpu.matmul %258, %259, %cst_70 {dimension_numbers = #tpu.dot_dimension_numbers<[1], [1], [0], [0], [0, 0, 1, 0], [], []>} : vector<8x32xf32>, vector<8x32xf32>, vector<8x8xf32> -> vector<8x8xf32>
    %262 = arith.addf %261, %85 : vector<8x8xf32>
    %cst_71 = arith.constant dense<0xFF800000> : vector<8xf32>
    %263 = vector.multi_reduction <maximumf>, %262, %cst_71 [1] : vector<8x8xf32> to vector<8xf32>
    %264 = vector.shape_cast %263 : vector<8xf32> to vector<8x1xf32>
    %265 = vector.broadcast %264 : vector<8x1xf32> to vector<8x8xf32>
    %266 = arith.subf %262, %265 : vector<8x8xf32>
    %267 = math.exp %266 : vector<8x8xf32>
    %cst_72 = arith.constant dense<0.000000e+00> : vector<8xf32>
    %268 = vector.multi_reduction <add>, %267, %cst_72 [1] : vector<8x8xf32> to vector<8xf32>
    %269 = vector.shape_cast %268 : vector<8xf32> to vector<8x1xf32>
    %270 = tpu.reciprocal %269 {approx = true} : vector<8x1xf32> -> vector<8x1xf32>
    %271 = vector.broadcast %270 : vector<8x1xf32> to vector<8x8xf32>
    %272 = arith.mulf %267, %271 : vector<8x8xf32>
    %cst_73 = arith.constant dense<0.000000e+00> : vector<8x32xf32>
    %273 = tpu.matmul %272, %260, %cst_73 {dimension_numbers = #tpu.dot_dimension_numbers<[1], [0], [0], [1], [0, 0, 1, 1], [], []>} : vector<8x8xf32>, vector<8x32xf32>, vector<8x32xf32> -> vector<8x32xf32>
    %274 = vector.extract_strided_slice %256 {offsets = [0, 0], sizes = [32, 128], strides = [1, 1]} : vector<128x128xbf16> to vector<32x128xbf16>
    %275 = arith.truncf %273 : vector<8x32xf32> to vector<8x32xbf16>
    %cst_74 = arith.constant dense<0.000000e+00> : vector<8x128xf32>
    %276 = tpu.matmul %275, %274, %cst_74 {dimension_numbers = #tpu.dot_dimension_numbers<[1], [0], [0], [1], [0, 0, 1, 1], [], []>} : vector<8x32xbf16>, vector<32x128xbf16>, vector<8x128xf32> -> vector<8x128xf32>
    %277 = arith.addf %257, %276 : vector<8x128xf32>
    %278 = vector.extract_strided_slice %253 {offsets = [0, 32], sizes = [8, 32], strides = [1, 1]} : vector<8x128xf32> to vector<8x32xf32>
    %279 = vector.extract_strided_slice %254 {offsets = [0, 32], sizes = [8, 32], strides = [1, 1]} : vector<8x128xf32> to vector<8x32xf32>
    %280 = vector.extract_strided_slice %255 {offsets = [0, 32], sizes = [8, 32], strides = [1, 1]} : vector<8x128xf32> to vector<8x32xf32>
    %cst_75 = arith.constant dense<0.000000e+00> : vector<8x8xf32>
    %281 = tpu.matmul %278, %279, %cst_75 {dimension_numbers = #tpu.dot_dimension_numbers<[1], [1], [0], [0], [0, 0, 1, 0], [], []>} : vector<8x32xf32>, vector<8x32xf32>, vector<8x8xf32> -> vector<8x8xf32>
    %282 = arith.addf %281, %85 : vector<8x8xf32>
    %cst_76 = arith.constant dense<0xFF800000> : vector<8xf32>
    %283 = vector.multi_reduction <maximumf>, %282, %cst_76 [1] : vector<8x8xf32> to vector<8xf32>
    %284 = vector.shape_cast %283 : vector<8xf32> to vector<8x1xf32>
    %285 = vector.broadcast %284 : vector<8x1xf32> to vector<8x8xf32>
    %286 = arith.subf %282, %285 : vector<8x8xf32>
    %287 = math.exp %286 : vector<8x8xf32>
    %cst_77 = arith.constant dense<0.000000e+00> : vector<8xf32>
    %288 = vector.multi_reduction <add>, %287, %cst_77 [1] : vector<8x8xf32> to vector<8xf32>
    %289 = vector.shape_cast %288 : vector<8xf32> to vector<8x1xf32>
    %290 = tpu.reciprocal %289 {approx = true} : vector<8x1xf32> -> vector<8x1xf32>
    %291 = vector.broadcast %290 : vector<8x1xf32> to vector<8x8xf32>
    %292 = arith.mulf %287, %291 : vector<8x8xf32>
    %cst_78 = arith.constant dense<0.000000e+00> : vector<8x32xf32>
    %293 = tpu.matmul %292, %280, %cst_78 {dimension_numbers = #tpu.dot_dimension_numbers<[1], [0], [0], [1], [0, 0, 1, 1], [], []>} : vector<8x8xf32>, vector<8x32xf32>, vector<8x32xf32> -> vector<8x32xf32>
    %294 = vector.extract_strided_slice %256 {offsets = [32, 0], sizes = [32, 128], strides = [1, 1]} : vector<128x128xbf16> to vector<32x128xbf16>
    %295 = arith.truncf %293 : vector<8x32xf32> to vector<8x32xbf16>
    %cst_79 = arith.constant dense<0.000000e+00> : vector<8x128xf32>
    %296 = tpu.matmul %295, %294, %cst_79 {dimension_numbers = #tpu.dot_dimension_numbers<[1], [0], [0], [1], [0, 0, 1, 1], [], []>} : vector<8x32xbf16>, vector<32x128xbf16>, vector<8x128xf32> -> vector<8x128xf32>
    %297 = arith.addf %277, %296 : vector<8x128xf32>
    %298 = vector.extract_strided_slice %253 {offsets = [0, 64], sizes = [8, 32], strides = [1, 1]} : vector<8x128xf32> to vector<8x32xf32>
    %299 = vector.extract_strided_slice %254 {offsets = [0, 64], sizes = [8, 32], strides = [1, 1]} : vector<8x128xf32> to vector<8x32xf32>
    %300 = vector.extract_strided_slice %255 {offsets = [0, 64], sizes = [8, 32], strides = [1, 1]} : vector<8x128xf32> to vector<8x32xf32>
    %cst_80 = arith.constant dense<0.000000e+00> : vector<8x8xf32>
    %301 = tpu.matmul %298, %299, %cst_80 {dimension_numbers = #tpu.dot_dimension_numbers<[1], [1], [0], [0], [0, 0, 1, 0], [], []>} : vector<8x32xf32>, vector<8x32xf32>, vector<8x8xf32> -> vector<8x8xf32>
    %302 = arith.addf %301, %85 : vector<8x8xf32>
    %cst_81 = arith.constant dense<0xFF800000> : vector<8xf32>
    %303 = vector.multi_reduction <maximumf>, %302, %cst_81 [1] : vector<8x8xf32> to vector<8xf32>
    %304 = vector.shape_cast %303 : vector<8xf32> to vector<8x1xf32>
    %305 = vector.broadcast %304 : vector<8x1xf32> to vector<8x8xf32>
    %306 = arith.subf %302, %305 : vector<8x8xf32>
    %307 = math.exp %306 : vector<8x8xf32>
    %cst_82 = arith.constant dense<0.000000e+00> : vector<8xf32>
    %308 = vector.multi_reduction <add>, %307, %cst_82 [1] : vector<8x8xf32> to vector<8xf32>
    %309 = vector.shape_cast %308 : vector<8xf32> to vector<8x1xf32>
    %310 = tpu.reciprocal %309 {approx = true} : vector<8x1xf32> -> vector<8x1xf32>
    %311 = vector.broadcast %310 : vector<8x1xf32> to vector<8x8xf32>
    %312 = arith.mulf %307, %311 : vector<8x8xf32>
    %cst_83 = arith.constant dense<0.000000e+00> : vector<8x32xf32>
    %313 = tpu.matmul %312, %300, %cst_83 {dimension_numbers = #tpu.dot_dimension_numbers<[1], [0], [0], [1], [0, 0, 1, 1], [], []>} : vector<8x8xf32>, vector<8x32xf32>, vector<8x32xf32> -> vector<8x32xf32>
    %314 = vector.extract_strided_slice %256 {offsets = [64, 0], sizes = [32, 128], strides = [1, 1]} : vector<128x128xbf16> to vector<32x128xbf16>
    %315 = arith.truncf %313 : vector<8x32xf32> to vector<8x32xbf16>
    %cst_84 = arith.constant dense<0.000000e+00> : vector<8x128xf32>
    %316 = tpu.matmul %315, %314, %cst_84 {dimension_numbers = #tpu.dot_dimension_numbers<[1], [0], [0], [1], [0, 0, 1, 1], [], []>} : vector<8x32xbf16>, vector<32x128xbf16>, vector<8x128xf32> -> vector<8x128xf32>
    %317 = arith.addf %297, %316 : vector<8x128xf32>
    %318 = vector.extract_strided_slice %253 {offsets = [0, 96], sizes = [8, 32], strides = [1, 1]} : vector<8x128xf32> to vector<8x32xf32>
    %319 = vector.extract_strided_slice %254 {offsets = [0, 96], sizes = [8, 32], strides = [1, 1]} : vector<8x128xf32> to vector<8x32xf32>
    %320 = vector.extract_strided_slice %255 {offsets = [0, 96], sizes = [8, 32], strides = [1, 1]} : vector<8x128xf32> to vector<8x32xf32>
    %cst_85 = arith.constant dense<0.000000e+00> : vector<8x8xf32>
    %321 = tpu.matmul %318, %319, %cst_85 {dimension_numbers = #tpu.dot_dimension_numbers<[1], [1], [0], [0], [0, 0, 1, 0], [], []>} : vector<8x32xf32>, vector<8x32xf32>, vector<8x8xf32> -> vector<8x8xf32>
    %322 = arith.addf %321, %85 : vector<8x8xf32>
    %cst_86 = arith.constant dense<0xFF800000> : vector<8xf32>
    %323 = vector.multi_reduction <maximumf>, %322, %cst_86 [1] : vector<8x8xf32> to vector<8xf32>
    %324 = vector.shape_cast %323 : vector<8xf32> to vector<8x1xf32>
    %325 = vector.broadcast %324 : vector<8x1xf32> to vector<8x8xf32>
    %326 = arith.subf %322, %325 : vector<8x8xf32>
    %327 = math.exp %326 : vector<8x8xf32>
    %cst_87 = arith.constant dense<0.000000e+00> : vector<8xf32>
    %328 = vector.multi_reduction <add>, %327, %cst_87 [1] : vector<8x8xf32> to vector<8xf32>
    %329 = vector.shape_cast %328 : vector<8xf32> to vector<8x1xf32>
    %330 = tpu.reciprocal %329 {approx = true} : vector<8x1xf32> -> vector<8x1xf32>
    %331 = vector.broadcast %330 : vector<8x1xf32> to vector<8x8xf32>
    %332 = arith.mulf %327, %331 : vector<8x8xf32>
    %cst_88 = arith.constant dense<0.000000e+00> : vector<8x32xf32>
    %333 = tpu.matmul %332, %320, %cst_88 {dimension_numbers = #tpu.dot_dimension_numbers<[1], [0], [0], [1], [0, 0, 1, 1], [], []>} : vector<8x8xf32>, vector<8x32xf32>, vector<8x32xf32> -> vector<8x32xf32>
    %334 = vector.extract_strided_slice %256 {offsets = [96, 0], sizes = [32, 128], strides = [1, 1]} : vector<128x128xbf16> to vector<32x128xbf16>
    %335 = arith.truncf %333 : vector<8x32xf32> to vector<8x32xbf16>
    %cst_89 = arith.constant dense<0.000000e+00> : vector<8x128xf32>
    %336 = tpu.matmul %335, %334, %cst_89 {dimension_numbers = #tpu.dot_dimension_numbers<[1], [0], [0], [1], [0, 0, 1, 1], [], []>} : vector<8x32xbf16>, vector<32x128xbf16>, vector<8x128xf32> -> vector<8x128xf32>
    %337 = arith.addf %317, %336 : vector<8x128xf32>
    %338 = vector.extract_strided_slice %0 {offsets = [17, 0], sizes = [1, 128], strides = [1, 1]} : vector<27x384xf32> to vector<1x128xf32>
    %339 = vector.broadcast %338 : vector<1x128xf32> to vector<8x128xf32>
    %340 = arith.addf %337, %339 : vector<8x128xf32>
    %341 = arith.addf %242, %340 : vector<8x128xf32>
    %342 = vector.extract_strided_slice %0 {offsets = [18, 0], sizes = [1, 128], strides = [1, 1]} : vector<27x384xf32> to vector<1x128xf32>
    %343 = vector.extract_strided_slice %0 {offsets = [19, 0], sizes = [1, 128], strides = [1, 1]} : vector<27x384xf32> to vector<1x128xf32>
    %cst_90 = arith.constant dense<0.000000e+00> : vector<8xf32>
    %344 = vector.multi_reduction <add>, %341, %cst_90 [1] : vector<8x128xf32> to vector<8xf32>
    %345 = vector.shape_cast %344 : vector<8xf32> to vector<8x1xf32>
    %cst_91 = arith.constant 1.280000e+02 : f32
    %346 = vector.broadcast %cst_91 : f32 to vector<8x1xf32>
    %347 = arith.divf %345, %346 : vector<8x1xf32>
    %348 = vector.broadcast %347 : vector<8x1xf32> to vector<8x128xf32>
    %349 = arith.subf %341, %348 : vector<8x128xf32>
    %350 = arith.mulf %349, %349 : vector<8x128xf32>
    %cst_92 = arith.constant dense<0.000000e+00> : vector<8xf32>
    %351 = vector.multi_reduction <add>, %350, %cst_92 [1] : vector<8x128xf32> to vector<8xf32>
    %352 = vector.shape_cast %351 : vector<8xf32> to vector<8x1xf32>
    %cst_93 = arith.constant 1.280000e+02 : f32
    %353 = vector.broadcast %cst_93 : f32 to vector<8x1xf32>
    %354 = arith.divf %352, %353 : vector<8x1xf32>
    %cst_94 = arith.constant 9.99999974E-6 : f32
    %355 = vector.broadcast %cst_94 : f32 to vector<8x1xf32>
    %356 = arith.addf %354, %355 : vector<8x1xf32>
    %357 = math.rsqrt %356 : vector<8x1xf32>
    %358 = vector.broadcast %357 : vector<8x1xf32> to vector<8x128xf32>
    %359 = arith.mulf %349, %358 : vector<8x128xf32>
    %360 = vector.broadcast %342 : vector<1x128xf32> to vector<8x128xf32>
    %361 = arith.mulf %359, %360 : vector<8x128xf32>
    %362 = vector.broadcast %343 : vector<1x128xf32> to vector<8x128xf32>
    %363 = arith.addf %361, %362 : vector<8x128xf32>
    %364 = vector.extract_strided_slice %244 {offsets = [0, 512], sizes = [128, 256], strides = [1, 1]} : vector<128x768xbf16> to vector<128x256xbf16>
    %365 = arith.truncf %363 : vector<8x128xf32> to vector<8x128xbf16>
    %cst_95 = arith.constant dense<0.000000e+00> : vector<8x256xf32>
    %366 = tpu.matmul %365, %364, %cst_95 {dimension_numbers = #tpu.dot_dimension_numbers<[1], [0], [0], [1], [0, 0, 1, 1], [], []>} : vector<8x128xbf16>, vector<128x256xbf16>, vector<8x256xf32> -> vector<8x256xf32>
    %367 = vector.extract_strided_slice %0 {offsets = [20, 0], sizes = [1, 256], strides = [1, 1]} : vector<27x384xf32> to vector<1x256xf32>
    %368 = vector.broadcast %367 : vector<1x256xf32> to vector<8x256xf32>
    %369 = arith.addf %366, %368 : vector<8x256xf32>
    %cst_96 = arith.constant 0.000000e+00 : f32
    %370 = vector.broadcast %cst_96 : f32 to vector<8x256xf32>
    %371 = arith.maximumf %369, %370 : vector<8x256xf32>
    %372 = arith.truncf %371 : vector<8x256xf32> to vector<8x256xbf16>
    %cst_97 = arith.constant dense<0.000000e+00> : vector<8x128xf32>
    %373 = tpu.matmul %372, %246, %cst_97 {dimension_numbers = #tpu.dot_dimension_numbers<[1], [0], [0], [1], [0, 0, 1, 1], [], []>} : vector<8x256xbf16>, vector<256x128xbf16>, vector<8x128xf32> -> vector<8x128xf32>
    %374 = vector.extract_strided_slice %0 {offsets = [21, 0], sizes = [1, 128], strides = [1, 1]} : vector<27x384xf32> to vector<1x128xf32>
    %375 = vector.broadcast %374 : vector<1x128xf32> to vector<8x128xf32>
    %376 = arith.addf %373, %375 : vector<8x128xf32>
    %377 = arith.addf %363, %376 : vector<8x128xf32>
    %378 = vector.extract_strided_slice %0 {offsets = [22, 0], sizes = [1, 128], strides = [1, 1]} : vector<27x384xf32> to vector<1x128xf32>
    %379 = vector.extract_strided_slice %0 {offsets = [23, 0], sizes = [1, 128], strides = [1, 1]} : vector<27x384xf32> to vector<1x128xf32>
    %cst_98 = arith.constant dense<0.000000e+00> : vector<8xf32>
    %380 = vector.multi_reduction <add>, %377, %cst_98 [1] : vector<8x128xf32> to vector<8xf32>
    %381 = vector.shape_cast %380 : vector<8xf32> to vector<8x1xf32>
    %cst_99 = arith.constant 1.280000e+02 : f32
    %382 = vector.broadcast %cst_99 : f32 to vector<8x1xf32>
    %383 = arith.divf %381, %382 : vector<8x1xf32>
    %384 = vector.broadcast %383 : vector<8x1xf32> to vector<8x128xf32>
    %385 = arith.subf %377, %384 : vector<8x128xf32>
    %386 = arith.mulf %385, %385 : vector<8x128xf32>
    %cst_100 = arith.constant dense<0.000000e+00> : vector<8xf32>
    %387 = vector.multi_reduction <add>, %386, %cst_100 [1] : vector<8x128xf32> to vector<8xf32>
    %388 = vector.shape_cast %387 : vector<8xf32> to vector<8x1xf32>
    %cst_101 = arith.constant 1.280000e+02 : f32
    %389 = vector.broadcast %cst_101 : f32 to vector<8x1xf32>
    %390 = arith.divf %388, %389 : vector<8x1xf32>
    %cst_102 = arith.constant 9.99999974E-6 : f32
    %391 = vector.broadcast %cst_102 : f32 to vector<8x1xf32>
    %392 = arith.addf %390, %391 : vector<8x1xf32>
    %393 = math.rsqrt %392 : vector<8x1xf32>
    %394 = vector.broadcast %393 : vector<8x1xf32> to vector<8x128xf32>
    %395 = arith.mulf %385, %394 : vector<8x128xf32>
    %396 = vector.broadcast %378 : vector<1x128xf32> to vector<8x128xf32>
    %397 = arith.mulf %395, %396 : vector<8x128xf32>
    %398 = vector.broadcast %379 : vector<1x128xf32> to vector<8x128xf32>
    %399 = arith.addf %397, %398 : vector<8x128xf32>
    %400 = vector.extract_strided_slice %0 {offsets = [24, 0], sizes = [1, 128], strides = [1, 1]} : vector<27x384xf32> to vector<1x128xf32>
    %401 = vector.extract_strided_slice %0 {offsets = [25, 0], sizes = [1, 128], strides = [1, 1]} : vector<27x384xf32> to vector<1x128xf32>
    %cst_103 = arith.constant dense<0.000000e+00> : vector<8xf32>
    %402 = vector.multi_reduction <add>, %399, %cst_103 [1] : vector<8x128xf32> to vector<8xf32>
    %403 = vector.shape_cast %402 : vector<8xf32> to vector<8x1xf32>
    %cst_104 = arith.constant 1.280000e+02 : f32
    %404 = vector.broadcast %cst_104 : f32 to vector<8x1xf32>
    %405 = arith.divf %403, %404 : vector<8x1xf32>
    %406 = vector.broadcast %405 : vector<8x1xf32> to vector<8x128xf32>
    %407 = arith.subf %399, %406 : vector<8x128xf32>
    %408 = arith.mulf %407, %407 : vector<8x128xf32>
    %cst_105 = arith.constant dense<0.000000e+00> : vector<8xf32>
    %409 = vector.multi_reduction <add>, %408, %cst_105 [1] : vector<8x128xf32> to vector<8xf32>
    %410 = vector.shape_cast %409 : vector<8xf32> to vector<8x1xf32>
    %cst_106 = arith.constant 1.280000e+02 : f32
    %411 = vector.broadcast %cst_106 : f32 to vector<8x1xf32>
    %412 = arith.divf %410, %411 : vector<8x1xf32>
    %cst_107 = arith.constant 9.99999974E-6 : f32
    %413 = vector.broadcast %cst_107 : f32 to vector<8x1xf32>
    %414 = arith.addf %412, %413 : vector<8x1xf32>
    %415 = math.rsqrt %414 : vector<8x1xf32>
    %416 = vector.broadcast %415 : vector<8x1xf32> to vector<8x128xf32>
    %417 = arith.mulf %407, %416 : vector<8x128xf32>
    %418 = vector.broadcast %400 : vector<1x128xf32> to vector<8x128xf32>
    %419 = arith.mulf %417, %418 : vector<8x128xf32>
    %420 = vector.broadcast %401 : vector<1x128xf32> to vector<8x128xf32>
    %421 = arith.addf %419, %420 : vector<8x128xf32>
    %cst_108 = arith.constant 0.000000e+00 : f32
    %422 = vector.broadcast %cst_108 : f32 to vector<2x81xf32>
    %423 = tpu.iota {dimensions = array<i32: 0>} : vector<2x8xi32>
    %424 = tpu.iota {dimensions = array<i32: 1>} : vector<2x8xi32>
    %c0_i32_109 = arith.constant 0 : i32
    %425 = vector.broadcast %c0_i32_109 : i32 to vector<2x8xi32>
    %426 = arith.addi %423, %425 : vector<2x8xi32>
    %427 = arith.cmpi eq, %424, %426 : vector<2x8xi32>
    %428 = arith.extui %427 : vector<2x8xi1> to vector<2x8xi32>
    %429 = arith.sitofp %428 : vector<2x8xi32> to vector<2x8xf32>
    %cst_110 = arith.constant dense<0.000000e+00> : vector<2x128xf32>
    %430 = tpu.matmul %429, %421, %cst_110 {dimension_numbers = #tpu.dot_dimension_numbers<[1], [0], [0], [1], [0, 0, 1, 1], [], []>} : vector<2x8xf32>, vector<8x128xf32>, vector<2x128xf32> -> vector<2x128xf32>
    %c0_111 = arith.constant 0 : index
    %c0_112 = arith.constant 0 : index
    %431 = vector.load %arg5[%c0_111, %c0_112] : memref<512x81xbf16, #tpu.memory_space<vmem>>, vector<128x81xbf16>
    %432 = arith.truncf %430 : vector<2x128xf32> to vector<2x128xbf16>
    %cst_113 = arith.constant dense<0.000000e+00> : vector<2x81xf32>
    %433 = tpu.matmul %432, %431, %cst_113 {dimension_numbers = #tpu.dot_dimension_numbers<[1], [0], [0], [1], [0, 0, 1, 1], [], []>} : vector<2x128xbf16>, vector<128x81xbf16>, vector<2x81xf32> -> vector<2x81xf32>
    %434 = arith.addf %422, %433 : vector<2x81xf32>
    %435 = tpu.iota {dimensions = array<i32: 0>} : vector<2x8xi32>
    %436 = tpu.iota {dimensions = array<i32: 1>} : vector<2x8xi32>
    %c2_i32_114 = arith.constant 2 : i32
    %437 = vector.broadcast %c2_i32_114 : i32 to vector<2x8xi32>
    %438 = arith.addi %435, %437 : vector<2x8xi32>
    %439 = arith.cmpi eq, %436, %438 : vector<2x8xi32>
    %440 = arith.extui %439 : vector<2x8xi1> to vector<2x8xi32>
    %441 = arith.sitofp %440 : vector<2x8xi32> to vector<2x8xf32>
    %cst_115 = arith.constant dense<0.000000e+00> : vector<2x128xf32>
    %442 = tpu.matmul %441, %421, %cst_115 {dimension_numbers = #tpu.dot_dimension_numbers<[1], [0], [0], [1], [0, 0, 1, 1], [], []>} : vector<2x8xf32>, vector<8x128xf32>, vector<2x128xf32> -> vector<2x128xf32>
    %c128 = arith.constant 128 : index
    %c0_116 = arith.constant 0 : index
    %443 = vector.load %arg5[%c128, %c0_116] : memref<512x81xbf16, #tpu.memory_space<vmem>>, vector<128x81xbf16>
    %444 = arith.truncf %442 : vector<2x128xf32> to vector<2x128xbf16>
    %cst_117 = arith.constant dense<0.000000e+00> : vector<2x81xf32>
    %445 = tpu.matmul %444, %443, %cst_117 {dimension_numbers = #tpu.dot_dimension_numbers<[1], [0], [0], [1], [0, 0, 1, 1], [], []>} : vector<2x128xbf16>, vector<128x81xbf16>, vector<2x81xf32> -> vector<2x81xf32>
    %446 = arith.addf %434, %445 : vector<2x81xf32>
    %447 = tpu.iota {dimensions = array<i32: 0>} : vector<2x8xi32>
    %448 = tpu.iota {dimensions = array<i32: 1>} : vector<2x8xi32>
    %c4_i32 = arith.constant 4 : i32
    %449 = vector.broadcast %c4_i32 : i32 to vector<2x8xi32>
    %450 = arith.addi %447, %449 : vector<2x8xi32>
    %451 = arith.cmpi eq, %448, %450 : vector<2x8xi32>
    %452 = arith.extui %451 : vector<2x8xi1> to vector<2x8xi32>
    %453 = arith.sitofp %452 : vector<2x8xi32> to vector<2x8xf32>
    %cst_118 = arith.constant dense<0.000000e+00> : vector<2x128xf32>
    %454 = tpu.matmul %453, %421, %cst_118 {dimension_numbers = #tpu.dot_dimension_numbers<[1], [0], [0], [1], [0, 0, 1, 1], [], []>} : vector<2x8xf32>, vector<8x128xf32>, vector<2x128xf32> -> vector<2x128xf32>
    %c256 = arith.constant 256 : index
    %c0_119 = arith.constant 0 : index
    %455 = vector.load %arg5[%c256, %c0_119] : memref<512x81xbf16, #tpu.memory_space<vmem>>, vector<128x81xbf16>
    %456 = arith.truncf %454 : vector<2x128xf32> to vector<2x128xbf16>
    %cst_120 = arith.constant dense<0.000000e+00> : vector<2x81xf32>
    %457 = tpu.matmul %456, %455, %cst_120 {dimension_numbers = #tpu.dot_dimension_numbers<[1], [0], [0], [1], [0, 0, 1, 1], [], []>} : vector<2x128xbf16>, vector<128x81xbf16>, vector<2x81xf32> -> vector<2x81xf32>
    %458 = arith.addf %446, %457 : vector<2x81xf32>
    %459 = tpu.iota {dimensions = array<i32: 0>} : vector<2x8xi32>
    %460 = tpu.iota {dimensions = array<i32: 1>} : vector<2x8xi32>
    %c6_i32 = arith.constant 6 : i32
    %461 = vector.broadcast %c6_i32 : i32 to vector<2x8xi32>
    %462 = arith.addi %459, %461 : vector<2x8xi32>
    %463 = arith.cmpi eq, %460, %462 : vector<2x8xi32>
    %464 = arith.extui %463 : vector<2x8xi1> to vector<2x8xi32>
    %465 = arith.sitofp %464 : vector<2x8xi32> to vector<2x8xf32>
    %cst_121 = arith.constant dense<0.000000e+00> : vector<2x128xf32>
    %466 = tpu.matmul %465, %421, %cst_121 {dimension_numbers = #tpu.dot_dimension_numbers<[1], [0], [0], [1], [0, 0, 1, 1], [], []>} : vector<2x8xf32>, vector<8x128xf32>, vector<2x128xf32> -> vector<2x128xf32>
    %c384 = arith.constant 384 : index
    %c0_122 = arith.constant 0 : index
    %467 = vector.load %arg5[%c384, %c0_122] : memref<512x81xbf16, #tpu.memory_space<vmem>>, vector<128x81xbf16>
    %468 = arith.truncf %466 : vector<2x128xf32> to vector<2x128xbf16>
    %cst_123 = arith.constant dense<0.000000e+00> : vector<2x81xf32>
    %469 = tpu.matmul %468, %467, %cst_123 {dimension_numbers = #tpu.dot_dimension_numbers<[1], [0], [0], [1], [0, 0, 1, 1], [], []>} : vector<2x128xbf16>, vector<128x81xbf16>, vector<2x81xf32> -> vector<2x81xf32>
    %470 = arith.addf %458, %469 : vector<2x81xf32>
    %471 = vector.extract_strided_slice %0 {offsets = [26, 0], sizes = [1, 81], strides = [1, 1]} : vector<27x384xf32> to vector<1x81xf32>
    %472 = vector.broadcast %471 : vector<1x81xf32> to vector<2x81xf32>
    %473 = arith.addf %470, %472 : vector<2x81xf32>
    %c0_124 = arith.constant 0 : index
    %c0_125 = arith.constant 0 : index
    %474 = vector.load %arg6[%c0_124, %c0_125] : memref<2x81xf32, #tpu.memory_space<vmem>>, vector<2x81xf32>
    tpu.vector_store %arg6[%c0_124, %c0_125], %473 {strides = array<i32>} : memref<2x81xf32, #tpu.memory_space<vmem>>, vector<2x81xf32>,
    return
  }
}

</mosaic_0001>

<llo_original>
// kernel: anti_encoder_forward.1
$region0: #{anti_encoder_forward.1}
  #allocation0 [shape = 'u32[]', space=smem, size = 0x4, offset = 0x4, fixed_abs, tag = 'smem constant byte address 0x4 - core index']
  #allocation1 [shape = 'u32[72,128]{1,0:T(1,128)}', space=vmem, size = 0x9000, scoped, tag = 'internal scratch']
  %s0 = inlined_call_operand.vmem [shape: f32[2,81], index: 0, kind: input, shape index: {}]
  %s1 = inlined_call_operand.hbm [shape: f32[27,384], index: 1, kind: input, shape index: {}]
  %s2 = inlined_call_operand.vmem [shape: bf16[81,512], index: 2, kind: input, shape index: {}]
  %s3 = inlined_call_operand.hbm [shape: bf16[2,128,768], index: 3, kind: input, shape index: {}]
  %s4 = inlined_call_operand.vmem [shape: bf16[2,256,128], index: 4, kind: input, shape index: {}]
  %s5 = inlined_call_operand.vmem [shape: bf16[512,81], index: 5, kind: input, shape index: {}]
  %s6 = inlined_call_operand.vmem [shape: f32[2,81], index: 6, kind: output, shape index: {}]
  %s7 = sld [smem:[#allocation0]]
  $region42: #{anti_encoder_forward.1} parent=0
    _
  %s9 = ssub.s32 1, %s7
  %s10 = scalar_select 0, %s9, %s7
  $region1: #{anti_encoder_forward.1} parent=0
    #allocation2 [shape = 'u8[49152]{0}', space=vmem, size = 0xc000, scoped, tag = 'input window, operand 1, single buffered']
    #allocation3 [shape = 's32[1]{0}', space=sflag, size = 0x4, scoped, tag = 'scoped memory for anti_encoder_forward.1']
    #allocation4 [shape = 'u8[393216]{0}', space=vmem, size = 0x60000, scoped, tag = 'input window, operand 3, single buffered']
    #allocation5 [shape = 's32[1]{0}', space=sflag, size = 0x4, scoped, tag = 'scoped memory for anti_encoder_forward.1']
    %11 = vsyncpa [#allocation3], 0
    %12 = vsyncpa [#allocation5], 0
    // Predicated region
    $region2: #{anti_encoder_forward.1} parent=1 // pred_check
      _
    $region3: #{anti_encoder_forward.1} parent=1 // pred_check_branch
      %14 = sbr.rel (0) target = $region5
    $region4: #{anti_encoder_forward.1} parent=1 // pred_region
      _
    $region5: #{anti_encoder_forward.1} parent=1 // pred_fallthru
      _
    // Predicated region
    $region6: #{anti_encoder_forward.1} parent=1 // pred_check
      _
    $region7: #{anti_encoder_forward.1} parent=1 // pred_check_branch
      %16 = sbr.rel (0) target = $region9
    $region8: #{anti_encoder_forward.1} parent=1 // pred_region
      %18 = vsyncadd [#allocation3], 0
      %s19 = sshll.u32 %s1, 4
      %s20 = int_to_ptr.hbm [resolvable:$true] %s19
      %s21 = sshll.u32 [#allocation2], 4
      %s22 = int_to_ptr.vmem [resolvable:$true] %s21
      %27 = dma.hbm_to_vmem [thread:$0]  %s20, 1536, %s22, [#allocation3], 384, 384, 24
    $region9: #{anti_encoder_forward.1} parent=1 // pred_fallthru
      _
    // Predicated region
    $region10: #{anti_encoder_forward.1} parent=1 // pred_check
      _
    $region11: #{anti_encoder_forward.1} parent=1 // pred_check_branch
      %29 = sbr.rel (0) target = $region13
    $region12: #{anti_encoder_forward.1} parent=1 // pred_region
      _
    $region13: #{anti_encoder_forward.1} parent=1 // pred_fallthru
      _
    // Predicated region
    $region14: #{anti_encoder_forward.1} parent=1 // pred_check
      _
    $region15: #{anti_encoder_forward.1} parent=1 // pred_check_branch
      %31 = sbr.rel (0) target = $region17
    $region16: #{anti_encoder_forward.1} parent=1 // pred_region
      %33 = vsyncadd [#allocation5], 0
      %s34 = sshll.u32 %s3, 4
      %s35 = int_to_ptr.hbm [resolvable:$true] %s34
      %s36 = sshll.u32 [#allocation4], 4
      %s37 = int_to_ptr.vmem [resolvable:$true] %s36
      %42 = dma.hbm_to_vmem [thread:$0]  %s35, 12288, %s37, [#allocation5], 384, 384, 24
    $region17: #{anti_encoder_forward.1} parent=1 // pred_fallthru
      _
    // Predicated region
    $region18: #{anti_encoder_forward.1} parent=1 // pred_check
      _
    $region19: #{anti_encoder_forward.1} parent=1 // pred_check_branch
      %44 = sbr.rel (0) target = $region21
    $region20: #{anti_encoder_forward.1} parent=1 // pred_region
      _
    $region21: #{anti_encoder_forward.1} parent=1 // pred_fallthru
      _
    // Predicated region
    $region22: #{anti_encoder_forward.1} parent=1 // pred_check
      _
    $region23: #{anti_encoder_forward.1} parent=1 // pred_check_branch
      %46 = sbr.rel (0) target = $region25
    $region24: #{anti_encoder_forward.1} parent=1 // pred_region
      _
    $region25: #{anti_encoder_forward.1} parent=1 // pred_fallthru
      _
    // Predicated region
    $region26: #{anti_encoder_forward.1} parent=1 // pred_check
      _
    $region27: #{anti_encoder_forward.1} parent=1 // pred_check_branch
      %48 = sbr.rel (0) target = $region29
    $region28: #{anti_encoder_forward.1} parent=1 // pred_region
      %50 = dma.done [#allocation3], 1536
    $region29: #{anti_encoder_forward.1} parent=1 // pred_fallthru
      _
    // Predicated region
    $region30: #{anti_encoder_forward.1} parent=1 // pred_check
      _
    $region31: #{anti_encoder_forward.1} parent=1 // pred_check_branch
      %52 = sbr.rel (0) target = $region33
    $region32: #{anti_encoder_forward.1} parent=1 // pred_region
      %54 = dma.done [#allocation5], 12288
    $region33: #{anti_encoder_forward.1} parent=1 // pred_fallthru
      _
    %v56 = vld [vmem:[#allocation2] sm:$0xff]
    %v57 = vld [vmem:[#allocation2 + $0x18] sm:$0xff]
    %v58 = vld [vmem:[#allocation2 + $0x20] sm:$0xff]
    %v59 = vld [vmem:[#allocation2 + $0x28] sm:$0xff]
    %v60 = vld [vmem:[#allocation2 + $0x30] sm:$0xff]
    %v61 = vld [vmem:[#allocation2 + $0x38] sm:$0xff]
    %v62 = vld [vmem:[#allocation2 + $0x40] sm:$0xff]
    %v63 = vld [vmem:[#allocation2 + $0x48] sm:$0x7]
    %v64 = vld [vmem:[%s0] sm:$0x3]
    %v65 = vld [vmem:[%s2] sm:$0xff]
    %v66 = vld [vmem:[%s2 + $0x8] sm:$0xff]
    %v67 = vld [vmem:[%s2 + $0x10] sm:$0xff]
    %v68 = vld [vmem:[%s2 + $0x18] sm:$0xff]
    %v69 = vld [vmem:[%s2 + $0x20] sm:$0xff]
    %v70 = vld [vmem:[%s2 + $0x28] sm:$0xff]
    %v71 = vld [vmem:[%s2 + $0x30] sm:$0xff]
    %v72 = vld [vmem:[%s2 + $0x38] sm:$0xff]
    %v73 = vld [vmem:[%s2 + $0x40] sm:$0xff]
    %v74 = vld [vmem:[%s2 + $0x48] sm:$0xff]
    %v75 = vld [vmem:[%s2 + $0x50] sm:$0xff]
    %v76 = vld [vmem:[%s2 + $0x58] sm:$0xff]
    %v77 = vld [vmem:[%s2 + $0x60] sm:$0xff]
    %v78 = vld [vmem:[%s2 + $0x68] sm:$0xff]
    %v79 = vld [vmem:[%s2 + $0x70] sm:$0xff]
    %v80 = vld [vmem:[%s2 + $0x78] sm:$0xff]
    %v81 = vld [vmem:[%s2 + $0x80] sm:$0xff]
    %v82 = vld [vmem:[%s2 + $0x88] sm:$0xff]
    %v83 = vld [vmem:[%s2 + $0x90] sm:$0xff]
    %v84 = vld [vmem:[%s2 + $0x98] sm:$0xff]
    %v85 = vld [vmem:[%s2 + $0xa0] sm:$0x11]
    %v86 = vld [vmem:[%s2 + $0xa8] sm:$0x11]
    %v87 = vpack.c.bf16 %v64, %v64
    %v110 = vunpack.c.l.b16 %v65
    %v111 = vunpack.c.h.b16 %v65
    %v112 = vunpack.c.l.b16 %v66
    %v113 = vunpack.c.h.b16 %v66
    %v114 = vunpack.c.l.b16 %v67
    %v115 = vunpack.c.h.b16 %v67
    %v116 = vunpack.c.l.b16 %v68
    %v117 = vunpack.c.h.b16 %v68
    %v118 = vunpack.c.l.b16 %v69
    %v119 = vunpack.c.h.b16 %v69
    %v120 = vunpack.c.l.b16 %v70
    %v121 = vunpack.c.h.b16 %v70
    %v122 = vunpack.c.l.b16 %v71
    %v123 = vunpack.c.h.b16 %v71
    %v124 = vunpack.c.l.b16 %v72
    %v125 = vunpack.c.h.b16 %v72
    %v126 = vunpack.c.l.b16 %v73
    %v127 = vunpack.c.h.b16 %v73
    %v128 = vunpack.c.l.b16 %v74
    %v129 = vunpack.c.h.b16 %v74
    %v130 = vunpack.c.l.b16 %v75
    %v131 = vunpack.c.h.b16 %v75
    %v132 = vunpack.c.l.b16 %v76
    %v133 = vunpack.c.h.b16 %v76
    %v134 = vunpack.c.l.b16 %v77
    %v135 = vunpack.c.h.b16 %v77
    %v136 = vunpack.c.l.b16 %v78
    %v137 = vunpack.c.h.b16 %v78
    %v138 = vunpack.c.l.b16 %v79
    %v139 = vunpack.c.h.b16 %v79
    %v140 = vunpack.c.l.b16 %v80
    %v141 = vunpack.c.h.b16 %v80
    %v142 = vunpack.c.l.b16 %v81
    %v143 = vunpack.c.h.b16 %v81
    %v144 = vunpack.c.l.b16 %v82
    %v145 = vunpack.c.h.b16 %v82
    %v146 = vunpack.c.l.b16 %v83
    %v147 = vunpack.c.h.b16 %v83
    %v148 = vunpack.c.l.b16 %v84
    %v149 = vunpack.c.h.b16 %v84
    %v150 = vunpack.c.l.b16 %v85
    %v151 = vunpack.c.h.b16 %v85
    %v152 = vunpack.c.l.b16 %v86
    %v153 = vunpack.c.h.b16 %v86
    %v154 = vpack.c.b16 %v114, %v110
    %v155 = vpack.c.b16 %v115, %v111
    %v156 = vpack.c.b16 %v116, %v112
    %v157 = vpack.c.b16 %v117, %v113
    %v158 = vpack.c.b16 %v122, %v118
    %v159 = vpack.c.b16 %v123, %v119
    %v160 = vpack.c.b16 %v124, %v120
    %v161 = vpack.c.b16 %v125, %v121
    %v162 = vpack.c.b16 %v130, %v126
    %v163 = vpack.c.b16 %v131, %v127
    %v164 = vpack.c.b16 %v132, %v128
    %v165 = vpack.c.b16 %v133, %v129
    %v166 = vpack.c.b16 %v138, %v134
    %v167 = vpack.c.b16 %v139, %v135
    %v168 = vpack.c.b16 %v140, %v136
    %v169 = vpack.c.b16 %v141, %v137
    %v170 = vpack.c.b16 %v146, %v142
    %v171 = vpack.c.b16 %v147, %v143
    %v172 = vpack.c.b16 %v148, %v144
    %v173 = vpack.c.b16 %v149, %v145
    %v174 = vpack.c.b16 %v150, %v150
    %v175 = vpack.c.b16 %v151, %v151
    %v176 = vpack.c.b16 %v152, %v152
    %v177 = vpack.c.b16 %v153, %v153
    %vm198 = vcmask 662528
    %v200 = vsel %vm198, %v87, 0
    %vm202 = vcmask 1040384
    %v203 = vsel 0, 4294967295, 65535
    %v204 = vsel %vm202, %v203, 0
    %v206 = vand.u32 %v174, %v204
    %v209 = vand.u32 %v175, %v204
    %v212 = vand.u32 %v176, %v204
    %v215 = vand.u32 %v177, %v204
    %217 = vmatpush.bf16.msra.mxu0 0
    %218 = vmatpush.bf16.msra.mxu0 0
    %219 = vmatpush.bf16.msra.mxu0 %v206
    %220 = vmatpush.bf16.msra.mxu0 %v170
    %221 = vmatpush.bf16.msra.mxu0 %v166
    %222 = vmatpush.bf16.msra.mxu0 %v162
    %223 = vmatpush.bf16.msra.mxu0 %v158
    %224 = vmatpush.bf16.msra.mxu0 %v154
    %225 = vmatmul.bf16.gmra.mxu0 %v200
    %v226 = vpop.f32.mrf.mxu0
    %v227 = vadd.f32 0.0, %v226
    %v228 = vpop.f32.mrf.mxu0
    %229 = vdwg.mxu0
    %230 = vmatpush.bf16.msra.mxu0 0
    %231 = vmatpush.bf16.msra.mxu0 0
    %232 = vmatpush.bf16.msra.mxu0 %v209
    %233 = vmatpush.bf16.msra.mxu0 %v171
    %234 = vmatpush.bf16.msra.mxu0 %v167
    %235 = vmatpush.bf16.msra.mxu0 %v163
    %236 = vmatpush.bf16.msra.mxu0 %v159
    %237 = vmatpush.bf16.msra.mxu0 %v155
    %238 = vmatmul.bf16.gmra.mxu0 %v200
    %v239 = vpop.f32.mrf.mxu0
    %v240 = vadd.f32 0.0, %v239
    %v241 = vpop.f32.mrf.mxu0
    %242 = vdwg.mxu0
    %243 = vmatpush.bf16.msra.mxu0 0
    %244 = vmatpush.bf16.msra.mxu0 0
    %245 = vmatpush.bf16.msra.mxu0 %v212
    %246 = vmatpush.bf16.msra.mxu0 %v172
    %247 = vmatpush.bf16.msra.mxu0 %v168
    %248 = vmatpush.bf16.msra.mxu0 %v164
    %249 = vmatpush.bf16.msra.mxu0 %v160
    %250 = vmatpush.bf16.msra.mxu0 %v156
    %251 = vmatmul.bf16.gmra.mxu0 %v200
    %v252 = vpop.f32.mrf.mxu0
    %v253 = vadd.f32 0.0, %v252
    %v254 = vpop.f32.mrf.mxu0
    %255 = vdwg.mxu0
    %256 = vmatpush.bf16.msra.mxu0 0
    %257 = vmatpush.bf16.msra.mxu0 0
    %258 = vmatpush.bf16.msra.mxu0 %v215
    %259 = vmatpush.bf16.msra.mxu0 %v173
    %260 = vmatpush.bf16.msra.mxu0 %v169
    %261 = vmatpush.bf16.msra.mxu0 %v165
    %262 = vmatpush.bf16.msra.mxu0 %v161
    %263 = vmatpush.bf16.msra.mxu0 %v157
    %264 = vmatmul.bf16.gmra.mxu0 %v200
    %v265 = vpop.f32.mrf.mxu0
    %v266 = vadd.f32 0.0, %v265
    %v267 = vpop.f32.mrf.mxu0
    %268 = vdwg.mxu0
    %v269 = vlaneseq
    %v270 = vshrl.u32 %v269, 7
    %v271 = vlaneseq
    %v272 = vand.u32 %v271, 127
    %vm273 = vcmp.eq.s32.totalorder %v272, %v270
    %v274 = vsel %vm273, 1, 0
    %v275 = vcvt.s32.f32 %v274
    %v276 = vadd.s32 %v270, 4294967294
    %vm277 = vcmp.eq.s32.totalorder %v272, %v276
    %v278 = vsel %vm277, 1, 0
    %v279 = vcvt.s32.f32 %v278
    %vm280 = vcmask 15360
    %v282 = vsel %vm280, %v279, 0
    %vm284 = vcmask 1041408
    %v286 = vsel %vm284, %v240, 0
    %288 = vmatpush.msra.mxu0 0.0
    %289 = vmatpush.msra.mxu0 0.0
    %290 = vmatpush.msra.mxu0 0.0
    %291 = vmatpush.msra.mxu0 0.0
    %292 = vmatpush.msra.mxu0 0.0
    %293 = vmatpush.msra.mxu0 0.0
    %294 = vmatpush.msra.mxu0 0.0
    %295 = vmatpush.msra.mxu0 0.0
    %296 = vmatpush.msra.mxu0 0.0
    %297 = vmatpush.msra.mxu0 0.0
    %298 = vmatpush.msra.mxu0 0.0
    %299 = vmatpush.msra.mxu0 0.0
    %300 = vmatpush.msra.mxu0 0.0
    %301 = vmatpush.msra.mxu0 0.0
    %302 = vmatpush.msra.mxu0 0.0
    %303 = vmatpush.msra.mxu0 %v286
    %304 = vmatmul.f32.gmra.mxu0 %v282
    %v305 = vpop.f32.mrf.mxu0
    %v306 = vadd.f32 0.0, %v305
    %307 = vdwg.mxu0
    %v309 = vsel %vm280, %v275, 0
    %v312 = vsel %vm284, %v227, 0
    %314 = vmatpush.msra.mxu0 0.0
    %315 = vmatpush.msra.mxu0 0.0
    %316 = vmatpush.msra.mxu0 0.0
    %317 = vmatpush.msra.mxu0 0.0
    %318 = vmatpush.msra.mxu0 0.0
    %319 = vmatpush.msra.mxu0 0.0
    %320 = vmatpush.msra.mxu0 0.0
    %321 = vmatpush.msra.mxu0 0.0
    %322 = vmatpush.msra.mxu0 0.0
    %323 = vmatpush.msra.mxu0 0.0
    %324 = vmatpush.msra.mxu0 0.0
    %325 = vmatpush.msra.mxu0 0.0
    %326 = vmatpush.msra.mxu0 0.0
    %327 = vmatpush.msra.mxu0 0.0
    %328 = vmatpush.msra.mxu0 0.0
    %329 = vmatpush.msra.mxu0 %v312
    %330 = vmatmul.f32.gmra.mxu0 %v309
    %v331 = vpop.f32.mrf.mxu0
    %v332 = vadd.f32 %v306, %v331
    %333 = vdwg.mxu0
    %v334 = vadd.s32 %v270, 4294967292
    %vm335 = vcmp.eq.s32.totalorder %v272, %v334
    %v336 = vsel %vm335, 1, 0
    %v337 = vcvt.s32.f32 %v336
    %v339 = vsel %vm280, %v337, 0
    %v342 = vsel %vm284, %v253, 0
    %344 = vmatpush.msra.mxu0 0.0
    %345 = vmatpush.msra.mxu0 0.0
    %346 = vmatpush.msra.mxu0 0.0
    %347 = vmatpush.msra.mxu0 0.0
    %348 = vmatpush.msra.mxu0 0.0
    %349 = vmatpush.msra.mxu0 0.0
    %350 = vmatpush.msra.mxu0 0.0
    %351 = vmatpush.msra.mxu0 0.0
    %352 = vmatpush.msra.mxu0 0.0
    %353 = vmatpush.msra.mxu0 0.0
    %354 = vmatpush.msra.mxu0 0.0
    %355 = vmatpush.msra.mxu0 0.0
    %356 = vmatpush.msra.mxu0 0.0
    %357 = vmatpush.msra.mxu0 0.0
    %358 = vmatpush.msra.mxu0 0.0
    %359 = vmatpush.msra.mxu0 %v342
    %360 = vmatmul.f32.gmra.mxu0 %v339
    %v361 = vpop.f32.mrf.mxu0
    %v362 = vadd.f32 0.0, %v361
    %363 = vdwg.mxu0
    %v364 = vadd.f32 %v332, %v362
    %v365 = vadd.s32 %v270, 4294967290
    %vm366 = vcmp.eq.s32.totalorder %v272, %v365
    %v367 = vsel %vm366, 1, 0
    %v368 = vcvt.s32.f32 %v367
    %v370 = vsel %vm280, %v368, 0
    %v373 = vsel %vm284, %v266, 0
    %375 = vmatpush.msra.mxu0 0.0
    %376 = vmatpush.msra.mxu0 0.0
    %377 = vmatpush.msra.mxu0 0.0
    %378 = vmatpush.msra.mxu0 0.0
    %379 = vmatpush.msra.mxu0 0.0
    %380 = vmatpush.msra.mxu0 0.0
    %381 = vmatpush.msra.mxu0 0.0
    %382 = vmatpush.msra.mxu0 0.0
    %383 = vmatpush.msra.mxu0 0.0
    %384 = vmatpush.msra.mxu0 0.0
    %385 = vmatpush.msra.mxu0 0.0
    %386 = vmatpush.msra.mxu0 0.0
    %387 = vmatpush.msra.mxu0 0.0
    %388 = vmatpush.msra.mxu0 0.0
    %389 = vmatpush.msra.mxu0 0.0
    %390 = vmatpush.msra.mxu0 %v373
    %391 = vmatmul.f32.gmra.mxu0 %v370
    %v392 = vpop.f32.mrf.mxu0
    %v393 = vadd.f32 0.0, %v392
    %394 = vdwg.mxu0
    %v395 = vadd.f32 %v364, %v393
    %v396 = vadd.f32 %v395, %v56
    %vm397 = vcmp.lt.s32.totalorder %v270, 0
    %v398 = vsub.s32 0, %v270
    %v399 = vsel %vm397, %v398, %v270
    %v400 = vshrl.u32 %v399, 1
    %v401 = vand.u32 %v399, 1
    %v402 = vsub.s32 0, %v401
    %v403 = vsel %vm397, %v402, %v401
    %vm404 = vcmp.ne.s32.totalorder %v403, 0
    %vm405 = vcmp.lt.s32.totalorder %v403, 0
    %vm406 = vmand %vm405, %vm404
    %v407 = vadd.s32 %v403, 2
    %v408 = vsel %vm406, %v407, %v403
    %vm409 = vcmp.lt.s32.totalorder %v272, 0
    %v410 = vsub.s32 0, %v272
    %v411 = vsel %vm409, %v410, %v272
    %v412 = vshrl.u32 %v411, 1
    %v413 = vand.u32 %v411, 1
    %v414 = vsub.s32 0, %v413
    %v415 = vsel %vm409, %v414, %v413
    %vm416 = vcmp.ne.s32.totalorder %v415, 0
    %vm417 = vcmp.lt.s32.totalorder %v415, 0
    %vm418 = vmand %vm417, %vm416
    %v419 = vadd.s32 %v415, 2
    %v420 = vsel %vm418, %v419, %v415
    %vm421 = vcmp.eq.s32.totalorder %v408, %v420
    %v422 = vsel %vm421, 0.0, -1e+30
    %v423 = vld [vmem:[#allocation4] sm:$0xff]
    %v424 = vld [vmem:[#allocation4 + $0x8] sm:$0xff]
    %v425 = vld [vmem:[#allocation4 + $0x10] sm:$0xff]
    %v426 = vld [vmem:[#allocation4 + $0x18] sm:$0xff]
    %v427 = vld [vmem:[#allocation4 + $0x20] sm:$0xff]
    %v428 = vld [vmem:[#allocation4 + $0x28] sm:$0xff]
    %v429 = vld [vmem:[#allocation4 + $0x30] sm:$0xff]
    %v430 = vld [vmem:[#allocation4 + $0x38] sm:$0xff]
    %v431 = vld [vmem:[#allocation4 + $0x40] sm:$0xff]
    %v432 = vld [vmem:[#allocation4 + $0x48] sm:$0xff]
    %v433 = vld [vmem:[#allocation4 + $0x50] sm:$0xff]
    %v434 = vld [vmem:[#allocation4 + $0x58] sm:$0xff]
    %v435 = vld [vmem:[#allocation4 + $0x60] sm:$0xff]
    %v436 = vld [vmem:[#allocation4 + $0x68] sm:$0xff]
    %v437 = vld [vmem:[#allocation4 + $0x70] sm:$0xff]
    %v438 = vld [vmem:[#allocation4 + $0x78] sm:$0xff]
    %v439 = vld [vmem:[#allocation4 + $0x80] sm:$0xff]
    %v440 = vld [vmem:[#allocation4 + $0x88] sm:$0xff]
    %v441 = vld [vmem:[#allocation4 + $0x90] sm:$0xff]
    %v442 = vld [vmem:[#allocation4 + $0x98] sm:$0xff]
    %v443 = vld [vmem:[#allocation4 + $0xa0] sm:$0xff]
    %v444 = vld [vmem:[#allocation4 + $0xa8] sm:$0xff]
    %v445 = vld [vmem:[#allocation4 + $0xb0] sm:$0xff]
    %v446 = vld [vmem:[#allocation4 + $0xb8] sm:$0xff]
    %v447 = vld [vmem:[#allocation4 + $0xc0] sm:$0xff]
    %v448 = vld [vmem:[#allocation4 + $0xc8] sm:$0xff]
    %v449 = vld [vmem:[#allocation4 + $0xd0] sm:$0xff]
    %v450 = vld [vmem:[#allocation4 + $0xd8] sm:$0xff]
    %v451 = vld [vmem:[#allocation4 + $0xe0] sm:$0xff]
    %v452 = vld [vmem:[#allocation4 + $0xe8] sm:$0xff]
    %v453 = vld [vmem:[#allocation4 + $0xf0] sm:$0xff]
    %v454 = vld [vmem:[#allocation4 + $0xf8] sm:$0xff]
    %v455 = vld [vmem:[#allocation4 + $0x100] sm:$0xff]
    %v456 = vld [vmem:[#allocation4 + $0x108] sm:$0xff]
    %v457 = vld [vmem:[#allocation4 + $0x110] sm:$0xff]
    %v458 = vld [vmem:[#allocation4 + $0x118] sm:$0xff]
    %v459 = vld [vmem:[#allocation4 + $0x120] sm:$0xff]
    %v460 = vld [vmem:[#allocation4 + $0x128] sm:$0xff]
    %v461 = vld [vmem:[#allocation4 + $0x130] sm:$0xff]
    %v462 = vld [vmem:[#allocation4 + $0x138] sm:$0xff]
    %v463 = vld [vmem:[#allocation4 + $0x140] sm:$0xff]
    %v464 = vld [vmem:[#allocation4 + $0x148] sm:$0xff]
    %v465 = vld [vmem:[#allocation4 + $0x150] sm:$0xff]
    %v466 = vld [vmem:[#allocation4 + $0x158] sm:$0xff]
    %v467 = vld [vmem:[#allocation4 + $0x160] sm:$0xff]
    %v468 = vld [vmem:[#allocation4 + $0x168] sm:$0xff]
    %v469 = vld [vmem:[#allocation4 + $0x170] sm:$0xff]
    %v470 = vld [vmem:[#allocation4 + $0x178] sm:$0xff]
    %v471 = vld [vmem:[%s4] sm:$0xf]
    %v472 = vld [vmem:[%s4 + $0x4] sm:$0xf]
    %v473 = vld [vmem:[%s4 + $0x8] sm:$0xf]
    %v474 = vld [vmem:[%s4 + $0xc] sm:$0xf]
    %v475 = vld [vmem:[%s4 + $0x10] sm:$0xf]
    %v476 = vld [vmem:[%s4 + $0x14] sm:$0xf]
    %v477 = vld [vmem:[%s4 + $0x18] sm:$0xf]
    %v478 = vld [vmem:[%s4 + $0x1c] sm:$0xf]
    %v479 = vld [vmem:[%s4 + $0x20] sm:$0xf]
    %v480 = vld [vmem:[%s4 + $0x24] sm:$0xf]
    %v481 = vld [vmem:[%s4 + $0x28] sm:$0xf]
    %v482 = vld [vmem:[%s4 + $0x2c] sm:$0xf]
    %v483 = vld [vmem:[%s4 + $0x30] sm:$0xf]
    %v484 = vld [vmem:[%s4 + $0x34] sm:$0xf]
    %v485 = vld [vmem:[%s4 + $0x38] sm:$0xf]
    %v486 = vld [vmem:[%s4 + $0x3c] sm:$0xf]
    %v487 = vld [vmem:[%s4 + $0x40] sm:$0xf]
    %v488 = vld [vmem:[%s4 + $0x44] sm:$0xf]
    %v489 = vld [vmem:[%s4 + $0x48] sm:$0xf]
    %v490 = vld [vmem:[%s4 + $0x4c] sm:$0xf]
    %v491 = vld [vmem:[%s4 + $0x50] sm:$0xf]
    %v492 = vld [vmem:[%s4 + $0x54] sm:$0xf]
    %v493 = vld [vmem:[%s4 + $0x58] sm:$0xf]
    %v494 = vld [vmem:[%s4 + $0x5c] sm:$0xf]
    %v495 = vld [vmem:[%s4 + $0x60] sm:$0xf]
    %v496 = vld [vmem:[%s4 + $0x64] sm:$0xf]
    %v497 = vld [vmem:[%s4 + $0x68] sm:$0xf]
    %v498 = vld [vmem:[%s4 + $0x6c] sm:$0xf]
    %v499 = vld [vmem:[%s4 + $0x70] sm:$0xf]
    %v500 = vld [vmem:[%s4 + $0x74] sm:$0xf]
    %v501 = vld [vmem:[%s4 + $0x78] sm:$0xf]
    %v502 = vld [vmem:[%s4 + $0x7c] sm:$0xf]
    %v503 = vpack.c.bf16 %v396, %v396
    %v504 = vperm.slane %v57, 0
    %v505 = vperm.slane %v58, 0
    %v506 = vperm.slane %v59, 0
    %v539 = vunpack.c.l.b16 %v423
    %v540 = vunpack.c.h.b16 %v423
    %v541 = vunpack.c.l.b16 %v424
    %v542 = vunpack.c.l.b16 %v426
    %v543 = vunpack.c.h.b16 %v426
    %v544 = vunpack.c.l.b16 %v427
    %v545 = vunpack.c.l.b16 %v429
    %v546 = vunpack.c.h.b16 %v429
    %v547 = vunpack.c.l.b16 %v430
    %v548 = vunpack.c.l.b16 %v432
    %v549 = vunpack.c.h.b16 %v432
    %v550 = vunpack.c.l.b16 %v433
    %v551 = vunpack.c.l.b16 %v435
    %v552 = vunpack.c.h.b16 %v435
    %v553 = vunpack.c.l.b16 %v436
    %v554 = vunpack.c.l.b16 %v438
    %v555 = vunpack.c.h.b16 %v438
    %v556 = vunpack.c.l.b16 %v439
    %v557 = vunpack.c.l.b16 %v441
    %v558 = vunpack.c.h.b16 %v441
    %v559 = vunpack.c.l.b16 %v442
    %v560 = vunpack.c.l.b16 %v444
    %v561 = vunpack.c.h.b16 %v444
    %v562 = vunpack.c.l.b16 %v445
    %v563 = vunpack.c.l.b16 %v447
    %v564 = vunpack.c.h.b16 %v447
    %v565 = vunpack.c.l.b16 %v448
    %v566 = vunpack.c.l.b16 %v450
    %v567 = vunpack.c.h.b16 %v450
    %v568 = vunpack.c.l.b16 %v451
    %v569 = vunpack.c.l.b16 %v453
    %v570 = vunpack.c.h.b16 %v453
    %v571 = vunpack.c.l.b16 %v454
    %v572 = vunpack.c.l.b16 %v456
    %v573 = vunpack.c.h.b16 %v456
    %v574 = vunpack.c.l.b16 %v457
    %v575 = vunpack.c.l.b16 %v459
    %v576 = vunpack.c.h.b16 %v459
    %v577 = vunpack.c.l.b16 %v460
    %v578 = vunpack.c.l.b16 %v462
    %v579 = vunpack.c.h.b16 %v462
    %v580 = vunpack.c.l.b16 %v463
    %v581 = vunpack.c.l.b16 %v465
    %v582 = vunpack.c.h.b16 %v465
    %v583 = vunpack.c.l.b16 %v466
    %v584 = vunpack.c.l.b16 %v468
    %v585 = vunpack.c.h.b16 %v468
    %v586 = vunpack.c.l.b16 %v469
    %v587 = vpack.c.b16 %v542, %v539
    %v588 = vpack.c.b16 %v543, %v540
    %v589 = vpack.c.b16 %v544, %v541
    %v590 = vpack.c.b16 %v548, %v545
    %v591 = vpack.c.b16 %v549, %v546
    %v592 = vpack.c.b16 %v550, %v547
    %v593 = vpack.c.b16 %v554, %v551
    %v594 = vpack.c.b16 %v555, %v552
    %v595 = vpack.c.b16 %v556, %v553
    %v596 = vpack.c.b16 %v560, %v557
    %v597 = vpack.c.b16 %v561, %v558
    %v598 = vpack.c.b16 %v562, %v559
    %v599 = vpack.c.b16 %v566, %v563
    %v600 = vpack.c.b16 %v567, %v564
    %v601 = vpack.c.b16 %v568, %v565
    %v602 = vpack.c.b16 %v572, %v569
    %v603 = vpack.c.b16 %v573, %v570
    %v604 = vpack.c.b16 %v574, %v571
    %v605 = vpack.c.b16 %v578, %v575
    %v606 = vpack.c.b16 %v579, %v576
    %v607 = vpack.c.b16 %v580, %v577
    %v608 = vpack.c.b16 %v584, %v581
    %v609 = vpack.c.b16 %v585, %v582
    %v610 = vpack.c.b16 %v586, %v583
    %635 = vmatpush.bf16.msra.mxu0 %v608
    %636 = vmatpush.bf16.msra.mxu0 %v605
    %637 = vmatpush.bf16.msra.mxu0 %v602
    %638 = vmatpush.bf16.msra.mxu0 %v599
    %639 = vmatpush.bf16.msra.mxu0 %v596
    %640 = vmatpush.bf16.msra.mxu0 %v593
    %641 = vmatpush.bf16.msra.mxu0 %v590
    %642 = vmatpush.bf16.msra.mxu0 %v587
    %643 = vmatmul.bf16.gmra.mxu0 %v503
    %v644 = vpop.f32.mrf.mxu0
    %v645 = vadd.f32 %v504, %v644
    %v646 = vpop.f32.mrf.mxu0
    %647 = vdwg.mxu0
    %648 = vmatpush.bf16.msra.mxu0 %v609
    %649 = vmatpush.bf16.msra.mxu0 %v606
    %650 = vmatpush.bf16.msra.mxu0 %v603
    %651 = vmatpush.bf16.msra.mxu0 %v600
    %652 = vmatpush.bf16.msra.mxu0 %v597
    %653 = vmatpush.bf16.msra.mxu0 %v594
    %654 = vmatpush.bf16.msra.mxu0 %v591
    %655 = vmatpush.bf16.msra.mxu0 %v588
    %656 = vmatmul.bf16.gmra.mxu0 %v503
    %v657 = vpop.f32.mrf.mxu0
    %v658 = vadd.f32 %v505, %v657
    %v659 = vpop.f32.mrf.mxu0
    %660 = vdwg.mxu0
    %661 = vmatpush.bf16.msra.mxu0 %v610
    %662 = vmatpush.bf16.msra.mxu0 %v607
    %663 = vmatpush.bf16.msra.mxu0 %v604
    %664 = vmatpush.bf16.msra.mxu0 %v601
    %665 = vmatpush.bf16.msra.mxu0 %v598
    %666 = vmatpush.bf16.msra.mxu0 %v595
    %667 = vmatpush.bf16.msra.mxu0 %v592
    %668 = vmatpush.bf16.msra.mxu0 %v589
    %669 = vmatmul.bf16.gmra.mxu0 %v503
    %v670 = vpop.f32.mrf.mxu0
    %v671 = vadd.f32 %v506, %v670
    %v672 = vpop.f32.mrf.mxu0
    %673 = vdwg.mxu0
    %vm674 = vcmask 261120
    %v676 = vsel %vm674, %v645, 0
    %v679 = vsel %vm674, %v658, 0
    %681 = vmatpush.xpose.msra.mxu0 0.0
    %682 = vmatpush.xpose.msra.mxu0 0.0
    %683 = vmatpush.xpose.msra.mxu0 0.0
    %684 = vmatpush.xpose.msra.mxu0 0.0
    %685 = vmatpush.xpose.msra.mxu0 0.0
    %686 = vmatpush.xpose.msra.mxu0 0.0
    %687 = vmatpush.xpose.msra.mxu0 0.0
    %688 = vmatpush.xpose.msra.mxu0 0.0
    %689 = vmatpush.xpose.msra.mxu0 0.0
    %690 = vmatpush.xpose.msra.mxu0 0.0
    %691 = vmatpush.xpose.msra.mxu0 0.0
    %692 = vmatpush.xpose.msra.mxu0 0.0
    %693 = vmatpush.xpose.msra.mxu0 0.0
    %694 = vmatpush.xpose.msra.mxu0 0.0
    %695 = vmatpush.xpose.msra.mxu0 0.0
    %696 = vmatpush.xpose.msra.mxu0 %v679
    %697 = vmatmul.f32.gmra.mxu0 %v676
    %v698 = vpop.f32.mrf.mxu0
    %v699 = vadd.f32 %v422, %v698
    %700 = vdwg.mxu0
    %vm701 = vcmask 64512
    %v702 = vsel %vm701, %v699, -inf
    %703 = vmax.xlane.f32.xlu0 %v702
    %v704 = vpop.xlane.xlu0 %703
    %v705 = vsub.f32 %v699, %v704
    %v706 = vmul.f32 %v705, 1.442695
    %v707 = vpow.pop %v706
    %v708 = vsel %vm701, %v707, 0.0
    %709 = vadd.xlane.f32.xlu0 %v708
    %v710 = vpop.xlane.xlu0 %709
    %v711 = vrcp.pop %v710
    %v712 = vmul.f32 %v707, %v711
    %v714 = vsel %vm701, %v712, 0
    %716 = vmatpush.msra.mxu0 0.0
    %717 = vmatpush.msra.mxu0 0.0
    %718 = vmatpush.msra.mxu0 0.0
    %719 = vmatpush.msra.mxu0 0.0
    %720 = vmatpush.msra.mxu0 0.0
    %721 = vmatpush.msra.mxu0 0.0
    %722 = vmatpush.msra.mxu0 0.0
    %723 = vmatpush.msra.mxu0 0.0
    %724 = vmatpush.msra.mxu0 0.0
    %725 = vmatpush.msra.mxu0 0.0
    %726 = vmatpush.msra.mxu0 0.0
    %727 = vmatpush.msra.mxu0 0.0
    %728 = vmatpush.msra.mxu0 0.0
    %729 = vmatpush.msra.mxu0 0.0
    %730 = vmatpush.msra.mxu0 0.0
    %731 = vmatpush.msra.mxu0 %v671
    %732 = vmatmul.f32.gmra.mxu0 %v714
    %v733 = vpop.f32.mrf.mxu0
    %v734 = vadd.f32 0.0, %v733
    %735 = vdwg.mxu0
    %v736 = vpack.c.bf16 %v734, %v734
    %737 = vrot.lane.b32.xlu0 %v645, 96
    %v738 = vpop.permute.xlu0 %737
    %739 = vrot.lane.b32.xlu0 %v658, 96
    %v740 = vpop.permute.xlu0 %739
    %v741 = vsel %vm674, %v738, 0
    %v743 = vsel %vm674, %v740, 0
    %745 = vmatpush.xpose.msra.mxu0 0.0
    %746 = vmatpush.xpose.msra.mxu0 0.0
    %747 = vmatpush.xpose.msra.mxu0 0.0
    %748 = vmatpush.xpose.msra.mxu0 0.0
    %749 = vmatpush.xpose.msra.mxu0 0.0
    %750 = vmatpush.xpose.msra.mxu0 0.0
    %751 = vmatpush.xpose.msra.mxu0 0.0
    %752 = vmatpush.xpose.msra.mxu0 0.0
    %753 = vmatpush.xpose.msra.mxu0 0.0
    %754 = vmatpush.xpose.msra.mxu0 0.0
    %755 = vmatpush.xpose.msra.mxu0 0.0
    %756 = vmatpush.xpose.msra.mxu0 0.0
    %757 = vmatpush.xpose.msra.mxu0 0.0
    %758 = vmatpush.xpose.msra.mxu0 0.0
    %759 = vmatpush.xpose.msra.mxu0 0.0
    %760 = vmatpush.xpose.msra.mxu0 %v743
    %761 = vmatmul.f32.gmra.mxu0 %v741
    %v762 = vpop.f32.mrf.mxu0
    %v763 = vadd.f32 %v422, %v762
    %764 = vdwg.mxu0
    %v765 = vsel %vm701, %v763, -inf
    %766 = vmax.xlane.f32.xlu0 %v765
    %v767 = vpop.xlane.xlu0 %766
    %v768 = vsub.f32 %v763, %v767
    %v769 = vmul.f32 %v768, 1.442695
    %v770 = vpow.pop %v769
    %v771 = vsel %vm701, %v770, 0.0
    %772 = vadd.xlane.f32.xlu0 %v771
    %v773 = vpop.xlane.xlu0 %772
    %v774 = vrcp.pop %v773
    %v775 = vmul.f32 %v770, %v774
    %777 = vrot.lane.b32.xlu0 %v671, 96
    %v778 = vpop.permute.xlu0 %777
    %v781 = vsel %vm701, %v775, 0
    %783 = vmatpush.msra.mxu0 0.0
    %784 = vmatpush.msra.mxu0 0.0
    %785 = vmatpush.msra.mxu0 0.0
    %786 = vmatpush.msra.mxu0 0.0
    %787 = vmatpush.msra.mxu0 0.0
    %788 = vmatpush.msra.mxu0 0.0
    %789 = vmatpush.msra.mxu0 0.0
    %790 = vmatpush.msra.mxu0 0.0
    %791 = vmatpush.msra.mxu0 0.0
    %792 = vmatpush.msra.mxu0 0.0
    %793 = vmatpush.msra.mxu0 0.0
    %794 = vmatpush.msra.mxu0 0.0
    %795 = vmatpush.msra.mxu0 0.0
    %796 = vmatpush.msra.mxu0 0.0
    %797 = vmatpush.msra.mxu0 0.0
    %798 = vmatpush.msra.mxu0 %v778
    %799 = vmatmul.f32.gmra.mxu0 %v781
    %v800 = vpop.f32.mrf.mxu0
    %v801 = vadd.f32 0.0, %v800
    %802 = vdwg.mxu0
    %v803 = vpack.c.bf16 %v801, %v801
    %v804 = vunpack.c.h.b16 %v436
    %v805 = vunpack.c.h.b16 %v439
    %v806 = vunpack.c.h.b16 %v442
    %v807 = vunpack.c.h.b16 %v445
    %v808 = vpack.c.b16 %v805, %v804
    %v809 = vpack.c.b16 %v807, %v806
    %v813 = vsel %vm674, %v803, 0
    %815 = vmatpush.bf16.msra.mxu0 0
    %816 = vmatpush.bf16.msra.mxu0 0
    %817 = vmatpush.bf16.msra.mxu0 0
    %818 = vmatpush.bf16.msra.mxu0 0
    %819 = vmatpush.bf16.msra.mxu0 0
    %820 = vmatpush.bf16.msra.mxu0 0
    %821 = vmatpush.bf16.msra.mxu0 %v809
    %822 = vmatpush.bf16.msra.mxu0 %v808
    %823 = vmatmul.bf16.gmra.mxu0 %v813
    %v824 = vpop.f32.mrf.mxu0
    %v825 = vadd.f32 0.0, %v824
    %v826 = vpop.f32.mrf.mxu0
    %827 = vdwg.mxu0
    %v828 = vunpack.c.h.b16 %v424
    %v829 = vunpack.c.h.b16 %v427
    %v830 = vunpack.c.h.b16 %v430
    %v831 = vunpack.c.h.b16 %v433
    %v832 = vpack.c.b16 %v829, %v828
    %v833 = vpack.c.b16 %v831, %v830
    %v837 = vsel %vm674, %v736, 0
    %839 = vmatpush.bf16.msra.mxu0 0
    %840 = vmatpush.bf16.msra.mxu0 0
    %841 = vmatpush.bf16.msra.mxu0 0
    %842 = vmatpush.bf16.msra.mxu0 0
    %843 = vmatpush.bf16.msra.mxu0 0
    %844 = vmatpush.bf16.msra.mxu0 0
    %845 = vmatpush.bf16.msra.mxu0 %v833
    %846 = vmatpush.bf16.msra.mxu0 %v832
    %847 = vmatmul.bf16.gmra.mxu0 %v837
    %v848 = vpop.f32.mrf.mxu0
    %v849 = vadd.f32 %v825, %v848
    %v850 = vpop.f32.mrf.mxu0
    %851 = vdwg.mxu0
    %852 = vrot.lane.b32.xlu0 %v645, 64
    %v853 = vpop.permute.xlu0 %852
    %854 = vrot.lane.b32.xlu0 %v658, 64
    %v855 = vpop.permute.xlu0 %854
    %v856 = vsel %vm674, %v853, 0
    %v858 = vsel %vm674, %v855, 0
    %860 = vmatpush.xpose.msra.mxu0 0.0
    %861 = vmatpush.xpose.msra.mxu0 0.0
    %862 = vmatpush.xpose.msra.mxu0 0.0
    %863 = vmatpush.xpose.msra.mxu0 0.0
    %864 = vmatpush.xpose.msra.mxu0 0.0
    %865 = vmatpush.xpose.msra.mxu0 0.0
    %866 = vmatpush.xpose.msra.mxu0 0.0
    %867 = vmatpush.xpose.msra.mxu0 0.0
    %868 = vmatpush.xpose.msra.mxu0 0.0
    %869 = vmatpush.xpose.msra.mxu0 0.0
    %870 = vmatpush.xpose.msra.mxu0 0.0
    %871 = vmatpush.xpose.msra.mxu0 0.0
    %872 = vmatpush.xpose.msra.mxu0 0.0
    %873 = vmatpush.xpose.msra.mxu0 0.0
    %874 = vmatpush.xpose.msra.mxu0 0.0
    %875 = vmatpush.xpose.msra.mxu0 %v858
    %876 = vmatmul.f32.gmra.mxu0 %v856
    %v877 = vpop.f32.mrf.mxu0
    %v878 = vadd.f32 %v422, %v877
    %879 = vdwg.mxu0
    %v880 = vsel %vm701, %v878, -inf
    %881 = vmax.xlane.f32.xlu0 %v880
    %v882 = vpop.xlane.xlu0 %881
    %v883 = vsub.f32 %v878, %v882
    %v884 = vmul.f32 %v883, 1.442695
    %v885 = vpow.pop %v884
    %v886 = vsel %vm701, %v885, 0.0
    %887 = vadd.xlane.f32.xlu0 %v886
    %v888 = vpop.xlane.xlu0 %887
    %v889 = vrcp.pop %v888
    %v890 = vmul.f32 %v885, %v889
    %891 = vrot.lane.b32.xlu0 %v671, 64
    %v892 = vpop.permute.xlu0 %891
    %v895 = vsel %vm701, %v890, 0
    %897 = vmatpush.msra.mxu0 0.0
    %898 = vmatpush.msra.mxu0 0.0
    %899 = vmatpush.msra.mxu0 0.0
    %900 = vmatpush.msra.mxu0 0.0
    %901 = vmatpush.msra.mxu0 0.0
    %902 = vmatpush.msra.mxu0 0.0
    %903 = vmatpush.msra.mxu0 0.0
    %904 = vmatpush.msra.mxu0 0.0
    %905 = vmatpush.msra.mxu0 0.0
    %906 = vmatpush.msra.mxu0 0.0
    %907 = vmatpush.msra.mxu0 0.0
    %908 = vmatpush.msra.mxu0 0.0
    %909 = vmatpush.msra.mxu0 0.0
    %910 = vmatpush.msra.mxu0 0.0
    %911 = vmatpush.msra.mxu0 0.0
    %912 = vmatpush.msra.mxu0 %v892
    %913 = vmatmul.f32.gmra.mxu0 %v895
    %v914 = vpop.f32.mrf.mxu0
    %v915 = vadd.f32 0.0, %v914
    %916 = vdwg.mxu0
    %v917 = vpack.c.bf16 %v915, %v915
    %v918 = vunpack.c.h.b16 %v448
    %v919 = vunpack.c.h.b16 %v451
    %v920 = vunpack.c.h.b16 %v454
    %v921 = vunpack.c.h.b16 %v457
    %v922 = vpack.c.b16 %v919, %v918
    %v923 = vpack.c.b16 %v921, %v920
    %v927 = vsel %vm674, %v917, 0
    %929 = vmatpush.bf16.msra.mxu0 0
    %930 = vmatpush.bf16.msra.mxu0 0
    %931 = vmatpush.bf16.msra.mxu0 0
    %932 = vmatpush.bf16.msra.mxu0 0
    %933 = vmatpush.bf16.msra.mxu0 0
    %934 = vmatpush.bf16.msra.mxu0 0
    %935 = vmatpush.bf16.msra.mxu0 %v923
    %936 = vmatpush.bf16.msra.mxu0 %v922
    %937 = vmatmul.bf16.gmra.mxu0 %v927
    %v938 = vpop.f32.mrf.mxu0
    %v939 = vadd.f32 0.0, %v938
    %v940 = vpop.f32.mrf.mxu0
    %941 = vdwg.mxu0
    %v942 = vadd.f32 %v849, %v939
    %943 = vrot.lane.b32.xlu0 %v645, 32
    %v944 = vpop.permute.xlu0 %943
    %945 = vrot.lane.b32.xlu0 %v658, 32
    %v946 = vpop.permute.xlu0 %945
    %v947 = vsel %vm674, %v944, 0
    %v949 = vsel %vm674, %v946, 0
    %951 = vmatpush.xpose.msra.mxu0 0.0
    %952 = vmatpush.xpose.msra.mxu0 0.0
    %953 = vmatpush.xpose.msra.mxu0 0.0
    %954 = vmatpush.xpose.msra.mxu0 0.0
    %955 = vmatpush.xpose.msra.mxu0 0.0
    %956 = vmatpush.xpose.msra.mxu0 0.0
    %957 = vmatpush.xpose.msra.mxu0 0.0
    %958 = vmatpush.xpose.msra.mxu0 0.0
    %959 = vmatpush.xpose.msra.mxu0 0.0
    %960 = vmatpush.xpose.msra.mxu0 0.0
    %961 = vmatpush.xpose.msra.mxu0 0.0
    %962 = vmatpush.xpose.msra.mxu0 0.0
    %963 = vmatpush.xpose.msra.mxu0 0.0
    %964 = vmatpush.xpose.msra.mxu0 0.0
    %965 = vmatpush.xpose.msra.mxu0 0.0
    %966 = vmatpush.xpose.msra.mxu0 %v949
    %967 = vmatmul.f32.gmra.mxu0 %v947
    %v968 = vpop.f32.mrf.mxu0
    %v969 = vadd.f32 %v422, %v968
    %970 = vdwg.mxu0
    %v971 = vsel %vm701, %v969, -inf
    %972 = vmax.xlane.f32.xlu0 %v971
    %v973 = vpop.xlane.xlu0 %972
    %v974 = vsub.f32 %v969, %v973
    %v975 = vmul.f32 %v974, 1.442695
    %v976 = vpow.pop %v975
    %v977 = vsel %vm701, %v976, 0.0
    %978 = vadd.xlane.f32.xlu0 %v977
    %v979 = vpop.xlane.xlu0 %978
    %v980 = vrcp.pop %v979
    %v981 = vmul.f32 %v976, %v980
    %982 = vrot.lane.b32.xlu0 %v671, 32
    %v983 = vpop.permute.xlu0 %982
    %v986 = vsel %vm701, %v981, 0
    %988 = vmatpush.msra.mxu0 0.0
    %989 = vmatpush.msra.mxu0 0.0
    %990 = vmatpush.msra.mxu0 0.0
    %991 = vmatpush.msra.mxu0 0.0
    %992 = vmatpush.msra.mxu0 0.0
    %993 = vmatpush.msra.mxu0 0.0
    %994 = vmatpush.msra.mxu0 0.0
    %995 = vmatpush.msra.mxu0 0.0
    %996 = vmatpush.msra.mxu0 0.0
    %997 = vmatpush.msra.mxu0 0.0
    %998 = vmatpush.msra.mxu0 0.0
    %999 = vmatpush.msra.mxu0 0.0
    %1000 = vmatpush.msra.mxu0 0.0
    %1001 = vmatpush.msra.mxu0 0.0
    %1002 = vmatpush.msra.mxu0 0.0
    %1003 = vmatpush.msra.mxu0 %v983
    %1004 = vmatmul.f32.gmra.mxu0 %v986
    %v1005 = vpop.f32.mrf.mxu0
    %v1006 = vadd.f32 0.0, %v1005
    %1007 = vdwg.mxu0
    %v1008 = vpack.c.bf16 %v1006, %v1006
    %v1009 = vunpack.c.h.b16 %v460
    %v1010 = vunpack.c.h.b16 %v463
    %v1011 = vunpack.c.h.b16 %v466
    %v1012 = vunpack.c.h.b16 %v469
    %v1013 = vpack.c.b16 %v1010, %v1009
    %v1014 = vpack.c.b16 %v1012, %v1011
    %v1018 = vsel %vm674, %v1008, 0
    %1020 = vmatpush.bf16.msra.mxu0 0
    %1021 = vmatpush.bf16.msra.mxu0 0
    %1022 = vmatpush.bf16.msra.mxu0 0
    %1023 = vmatpush.bf16.msra.mxu0 0
    %1024 = vmatpush.bf16.msra.mxu0 0
    %1025 = vmatpush.bf16.msra.mxu0 0
    %1026 = vmatpush.bf16.msra.mxu0 %v1014
    %1027 = vmatpush.bf16.msra.mxu0 %v1013
    %1028 = vmatmul.bf16.gmra.mxu0 %v1018
    %v1029 = vpop.f32.mrf.mxu0
    %v1030 = vadd.f32 0.0, %v1029
    %v1031 = vpop.f32.mrf.mxu0
    %1032 = vdwg.mxu0
    %v1033 = vadd.f32 %v942, %v1030
    %v1034 = vperm.slane %v57, 1
    %v1035 = vadd.f32 %v1033, %v1034
    %v1036 = vadd.f32 %v396, %v1035
    %1037 = vadd.xlane.f32.xlu0 %v1036
    %v1038 = vpop.xlane.xlu0 %1037
    %v1039 = vrcp.pop 128.0
    %v1040 = vmul.f32 128.0, %v1039
    %v1041 = vsub.f32 1.0, %v1040
    %v1042 = vmul.f32 %v1039, %v1041
    %v1043 = vadd.f32 %v1039, %v1042
    %vm1044 = vweird.f32 %v1039
    %v1045 = vsel %vm1044, %v1039, %v1043
    %v1046 = vmul.f32 %v1038, %v1045
    %v1047 = vsub.f32 %v1036, %v1046
    %v1048 = vmul.f32 %v1047, %v1047
    %1049 = vadd.xlane.f32.xlu0 %v1048
    %v1050 = vpop.xlane.xlu0 %1049
    %v1051 = vmul.f32 %v1050, %v1045
    %v1052 = vadd.f32 %v1051, 1e-05
    %v1053 = vrsqrt.pop %v1052
    %v1054 = vmul.f32 %v1053, %v1052
    %v1055 = vmul.f32 %v1054, %v1053
    %v1056 = vmul.f32 0.5, %v1055
    %v1057 = vsub.f32 1.5, %v1056
    %v1058 = vmul.f32 %v1053, %v1057
    %vm1059 = vweird.f32 %v1052
    %vm1060 = vweird.f32 %v1053
    %vm1061 = vmor %vm1059, %vm1060
    %v1062 = vsel %vm1061, %v1053, %v1058
    %v1063 = vmul.f32 %v1047, %v1062
    %v1064 = vperm.slane %v57, 2
    %v1065 = vmul.f32 %v1063, %v1064
    %v1066 = vperm.slane %v57, 3
    %v1067 = vadd.f32 %v1065, %v1066
    %v1068 = vpack.c.bf16 %v1067, %v1067
    %v1069 = vperm.slane %v57, 4
    %v1070 = vperm.slane %v58, 4
    %v1087 = vunpack.c.l.b16 %v425
    %v1088 = vunpack.c.h.b16 %v425
    %v1089 = vunpack.c.l.b16 %v428
    %v1090 = vunpack.c.h.b16 %v428
    %v1091 = vunpack.c.l.b16 %v431
    %v1092 = vunpack.c.h.b16 %v431
    %v1093 = vunpack.c.l.b16 %v434
    %v1094 = vunpack.c.h.b16 %v434
    %v1095 = vunpack.c.l.b16 %v437
    %v1096 = vunpack.c.h.b16 %v437
    %v1097 = vunpack.c.l.b16 %v440
    %v1098 = vunpack.c.h.b16 %v440
    %v1099 = vunpack.c.l.b16 %v443
    %v1100 = vunpack.c.h.b16 %v443
    %v1101 = vunpack.c.l.b16 %v446
    %v1102 = vunpack.c.h.b16 %v446
    %v1103 = vunpack.c.l.b16 %v449
    %v1104 = vunpack.c.h.b16 %v449
    %v1105 = vunpack.c.l.b16 %v452
    %v1106 = vunpack.c.h.b16 %v452
    %v1107 = vunpack.c.l.b16 %v455
    %v1108 = vunpack.c.h.b16 %v455
    %v1109 = vunpack.c.l.b16 %v458
    %v1110 = vunpack.c.h.b16 %v458
    %v1111 = vunpack.c.l.b16 %v461
    %v1112 = vunpack.c.h.b16 %v461
    %v1113 = vunpack.c.l.b16 %v464
    %v1114 = vunpack.c.h.b16 %v464
    %v1115 = vunpack.c.l.b16 %v467
    %v1116 = vunpack.c.h.b16 %v467
    %v1117 = vunpack.c.l.b16 %v470
    %v1118 = vunpack.c.h.b16 %v470
    %v1119 = vpack.c.b16 %v1089, %v1087
    %v1120 = vpack.c.b16 %v1090, %v1088
    %v1121 = vpack.c.b16 %v1093, %v1091
    %v1122 = vpack.c.b16 %v1094, %v1092
    %v1123 = vpack.c.b16 %v1097, %v1095
    %v1124 = vpack.c.b16 %v1098, %v1096
    %v1125 = vpack.c.b16 %v1101, %v1099
    %v1126 = vpack.c.b16 %v1102, %v1100
    %v1127 = vpack.c.b16 %v1105, %v1103
    %v1128 = vpack.c.b16 %v1106, %v1104
    %v1129 = vpack.c.b16 %v1109, %v1107
    %v1130 = vpack.c.b16 %v1110, %v1108
    %v1131 = vpack.c.b16 %v1113, %v1111
    %v1132 = vpack.c.b16 %v1114, %v1112
    %v1133 = vpack.c.b16 %v1117, %v1115
    %v1134 = vpack.c.b16 %v1118, %v1116
    %1151 = vmatpush.bf16.msra.mxu0 %v1133
    %1152 = vmatpush.bf16.msra.mxu0 %v1131
    %1153 = vmatpush.bf16.msra.mxu0 %v1129
    %1154 = vmatpush.bf16.msra.mxu0 %v1127
    %1155 = vmatpush.bf16.msra.mxu0 %v1125
    %1156 = vmatpush.bf16.msra.mxu0 %v1123
    %1157 = vmatpush.bf16.msra.mxu0 %v1121
    %1158 = vmatpush.bf16.msra.mxu0 %v1119
    %1159 = vmatmul.bf16.gmra.mxu0 %v1068
    %v1160 = vpop.f32.mrf.mxu0
    %v1161 = vadd.f32 %v1069, %v1160
    %v1162 = vpop.f32.mrf.mxu0
    %1163 = vdwg.mxu0
    %1164 = vmatpush.bf16.msra.mxu0 %v1134
    %1165 = vmatpush.bf16.msra.mxu0 %v1132
    %1166 = vmatpush.bf16.msra.mxu0 %v1130
    %1167 = vmatpush.bf16.msra.mxu0 %v1128
    %1168 = vmatpush.bf16.msra.mxu0 %v1126
    %1169 = vmatpush.bf16.msra.mxu0 %v1124
    %1170 = vmatpush.bf16.msra.mxu0 %v1122
    %1171 = vmatpush.bf16.msra.mxu0 %v1120
    %1172 = vmatmul.bf16.gmra.mxu0 %v1068
    %v1173 = vpop.f32.mrf.mxu0
    %v1174 = vadd.f32 %v1070, %v1173
    %v1175 = vpop.f32.mrf.mxu0
    %1176 = vdwg.mxu0
    %v1177 = vmax.f32 %v1161, 0.0
    %v1178 = vmax.f32 %v1174, 0.0
    %v1179 = vpack.c.bf16 %v1177, %v1177
    %v1180 = vpack.c.bf16 %v1178, %v1178
    %v1181 = vperm.slane %v57, 5
    %v1214 = vunpack.c.l.b16 %v471
    %v1215 = vunpack.c.l.b16 %v472
    %v1216 = vunpack.c.l.b16 %v473
    %v1217 = vunpack.c.l.b16 %v474
    %v1218 = vunpack.c.l.b16 %v475
    %v1219 = vunpack.c.l.b16 %v476
    %v1220 = vunpack.c.l.b16 %v477
    %v1221 = vunpack.c.l.b16 %v478
    %v1222 = vunpack.c.l.b16 %v479
    %v1223 = vunpack.c.l.b16 %v480
    %v1224 = vunpack.c.l.b16 %v481
    %v1225 = vunpack.c.l.b16 %v482
    %v1226 = vunpack.c.l.b16 %v483
    %v1227 = vunpack.c.l.b16 %v484
    %v1228 = vunpack.c.l.b16 %v485
    %v1229 = vunpack.c.l.b16 %v486
    %v1230 = vunpack.c.l.b16 %v487
    %v1231 = vunpack.c.l.b16 %v488
    %v1232 = vunpack.c.l.b16 %v489
    %v1233 = vunpack.c.l.b16 %v490
    %v1234 = vunpack.c.l.b16 %v491
    %v1235 = vunpack.c.l.b16 %v492
    %v1236 = vunpack.c.l.b16 %v493
    %v1237 = vunpack.c.l.b16 %v494
    %v1238 = vunpack.c.l.b16 %v495
    %v1239 = vunpack.c.l.b16 %v496
    %v1240 = vunpack.c.l.b16 %v497
    %v1241 = vunpack.c.l.b16 %v498
    %v1242 = vunpack.c.l.b16 %v499
    %v1243 = vunpack.c.l.b16 %v500
    %v1244 = vunpack.c.l.b16 %v501
    %v1245 = vunpack.c.l.b16 %v502
    %v1246 = vpack.c.b16 %v1215, %v1214
    %v1247 = vpack.c.b16 %v1217, %v1216
    %v1248 = vpack.c.b16 %v1219, %v1218
    %v1249 = vpack.c.b16 %v1221, %v1220
    %v1250 = vpack.c.b16 %v1223, %v1222
    %v1251 = vpack.c.b16 %v1225, %v1224
    %v1252 = vpack.c.b16 %v1227, %v1226
    %v1253 = vpack.c.b16 %v1229, %v1228
    %v1254 = vpack.c.b16 %v1231, %v1230
    %v1255 = vpack.c.b16 %v1233, %v1232
    %v1256 = vpack.c.b16 %v1235, %v1234
    %v1257 = vpack.c.b16 %v1237, %v1236
    %v1258 = vpack.c.b16 %v1239, %v1238
    %v1259 = vpack.c.b16 %v1241, %v1240
    %v1260 = vpack.c.b16 %v1243, %v1242
    %v1261 = vpack.c.b16 %v1245, %v1244
    %1278 = vmatpush.bf16.msra.mxu0 %v1253
    %1279 = vmatpush.bf16.msra.mxu0 %v1252
    %1280 = vmatpush.bf16.msra.mxu0 %v1251
    %1281 = vmatpush.bf16.msra.mxu0 %v1250
    %1282 = vmatpush.bf16.msra.mxu0 %v1249
    %1283 = vmatpush.bf16.msra.mxu0 %v1248
    %1284 = vmatpush.bf16.msra.mxu0 %v1247
    %1285 = vmatpush.bf16.msra.mxu0 %v1246
    %1286 = vmatmul.bf16.gmra.mxu0 %v1179
    %v1287 = vpop.f32.mrf.mxu0
    %v1288 = vadd.f32 %v1181, %v1287
    %v1289 = vpop.f32.mrf.mxu0
    %1290 = vdwg.mxu0
    %1291 = vmatpush.bf16.msra.mxu0 %v1261
    %1292 = vmatpush.bf16.msra.mxu0 %v1260
    %1293 = vmatpush.bf16.msra.mxu0 %v1259
    %1294 = vmatpush.bf16.msra.mxu0 %v1258
    %1295 = vmatpush.bf16.msra.mxu0 %v1257
    %1296 = vmatpush.bf16.msra.mxu0 %v1256
    %1297 = vmatpush.bf16.msra.mxu0 %v1255
    %1298 = vmatpush.bf16.msra.mxu0 %v1254
    %1299 = vmatmul.bf16.gmra.mxu0 %v1180
    %v1300 = vpop.f32.mrf.mxu0
    %v1301 = vadd.f32 %v1288, %v1300
    %v1302 = vpop.f32.mrf.mxu0
    %1303 = vdwg.mxu0
    %v1304 = vadd.f32 %v1067, %v1301
    %1305 = vadd.xlane.f32.xlu0 %v1304
    %v1306 = vpop.xlane.xlu0 %1305
    %v1307 = vmul.f32 %v1306, %v1045
    %v1308 = vsub.f32 %v1304, %v1307
    %v1309 = vmul.f32 %v1308, %v1308
    %1310 = vadd.xlane.f32.xlu0 %v1309
    %v1311 = vpop.xlane.xlu0 %1310
    %v1312 = vmul.f32 %v1311, %v1045
    %v1313 = vadd.f32 %v1312, 1e-05
    %v1314 = vrsqrt.pop %v1313
    %v1315 = vmul.f32 %v1314, %v1313
    %v1316 = vmul.f32 %v1315, %v1314
    %v1317 = vmul.f32 0.5, %v1316
    %v1318 = vsub.f32 1.5, %v1317
    %v1319 = vmul.f32 %v1314, %v1318
    %vm1320 = vweird.f32 %v1313
    %vm1321 = vweird.f32 %v1314
    %vm1322 = vmor %vm1320, %vm1321
    %v1323 = vsel %vm1322, %v1314, %v1319
    %v1324 = vmul.f32 %v1308, %v1323
    %v1325 = vperm.slane %v57, 6
    %v1326 = vmul.f32 %v1324, %v1325
    %v1327 = vperm.slane %v57, 7
    %v1328 = vadd.f32 %v1326, %v1327
    %s1329 = scalar_lea.vmem [#allocation4], 384
    %v1330 = vld [vmem:[%s1329] sm:$0xff]
    %v1331 = vld [vmem:[%s1329 + $0x8] sm:$0xff]
    %v1332 = vld [vmem:[%s1329 + $0x10] sm:$0xff]
    %v1333 = vld [vmem:[%s1329 + $0x18] sm:$0xff]
    %v1334 = vld [vmem:[%s1329 + $0x20] sm:$0xff]
    %v1335 = vld [vmem:[%s1329 + $0x28] sm:$0xff]
    %v1336 = vld [vmem:[%s1329 + $0x30] sm:$0xff]
    %v1337 = vld [vmem:[%s1329 + $0x38] sm:$0xff]
    %v1338 = vld [vmem:[%s1329 + $0x40] sm:$0xff]
    %v1339 = vld [vmem:[%s1329 + $0x48] sm:$0xff]
    %v1340 = vld [vmem:[%s1329 + $0x50] sm:$0xff]
    %v1341 = vld [vmem:[%s1329 + $0x58] sm:$0xff]
    %v1342 = vld [vmem:[%s1329 + $0x60] sm:$0xff]
    %v1343 = vld [vmem:[%s1329 + $0x68] sm:$0xff]
    %v1344 = vld [vmem:[%s1329 + $0x70] sm:$0xff]
    %v1345 = vld [vmem:[%s1329 + $0x78] sm:$0xff]
    %v1346 = vld [vmem:[%s1329 + $0x80] sm:$0xff]
    %v1347 = vld [vmem:[%s1329 + $0x88] sm:$0xff]
    %v1348 = vld [vmem:[%s1329 + $0x90] sm:$0xff]
    %v1349 = vld [vmem:[%s1329 + $0x98] sm:$0xff]
    %v1350 = vld [vmem:[%s1329 + $0xa0] sm:$0xff]
    %v1351 = vld [vmem:[%s1329 + $0xa8] sm:$0xff]
    %v1352 = vld [vmem:[%s1329 + $0xb0] sm:$0xff]
    %v1353 = vld [vmem:[%s1329 + $0xb8] sm:$0xff]
    %v1354 = vld [vmem:[%s1329 + $0xc0] sm:$0xff]
    %v1355 = vld [vmem:[%s1329 + $0xc8] sm:$0xff]
    %v1356 = vld [vmem:[%s1329 + $0xd0] sm:$0xff]
    %v1357 = vld [vmem:[%s1329 + $0xd8] sm:$0xff]
    %v1358 = vld [vmem:[%s1329 + $0xe0] sm:$0xff]
    %v1359 = vld [vmem:[%s1329 + $0xe8] sm:$0xff]
    %v1360 = vld [vmem:[%s1329 + $0xf0] sm:$0xff]
    %v1361 = vld [vmem:[%s1329 + $0xf8] sm:$0xff]
    %v1362 = vld [vmem:[%s1329 + $0x100] sm:$0xff]
    %v1363 = vld [vmem:[%s1329 + $0x108] sm:$0xff]
    %v1364 = vld [vmem:[%s1329 + $0x110] sm:$0xff]
    %v1365 = vld [vmem:[%s1329 + $0x118] sm:$0xff]
    %v1366 = vld [vmem:[%s1329 + $0x120] sm:$0xff]
    %v1367 = vld [vmem:[%s1329 + $0x128] sm:$0xff]
    %v1368 = vld [vmem:[%s1329 + $0x130] sm:$0xff]
    %v1369 = vld [vmem:[%s1329 + $0x138] sm:$0xff]
    %v1370 = vld [vmem:[%s1329 + $0x140] sm:$0xff]
    %v1371 = vld [vmem:[%s1329 + $0x148] sm:$0xff]
    %v1372 = vld [vmem:[%s1329 + $0x150] sm:$0xff]
    %v1373 = vld [vmem:[%s1329 + $0x158] sm:$0xff]
    %v1374 = vld [vmem:[%s1329 + $0x160] sm:$0xff]
    %v1375 = vld [vmem:[%s1329 + $0x168] sm:$0xff]
    %v1376 = vld [vmem:[%s1329 + $0x170] sm:$0xff]
    %v1377 = vld [vmem:[%s1329 + $0x178] sm:$0xff]
    %s1378 = scalar_lea.vmem %s4, 128
    %v1379 = vld [vmem:[%s1378] sm:$0xf]
    %v1380 = vld [vmem:[%s1378 + $0x4] sm:$0xf]
    %v1381 = vld [vmem:[%s1378 + $0x8] sm:$0xf]
    %v1382 = vld [vmem:[%s1378 + $0xc] sm:$0xf]
    %v1383 = vld [vmem:[%s1378 + $0x10] sm:$0xf]
    %v1384 = vld [vmem:[%s1378 + $0x14] sm:$0xf]
    %v1385 = vld [vmem:[%s1378 + $0x18] sm:$0xf]
    %v1386 = vld [vmem:[%s1378 + $0x1c] sm:$0xf]
    %v1387 = vld [vmem:[%s1378 + $0x20] sm:$0xf]
    %v1388 = vld [vmem:[%s1378 + $0x24] sm:$0xf]
    %v1389 = vld [vmem:[%s1378 + $0x28] sm:$0xf]
    %v1390 = vld [vmem:[%s1378 + $0x2c] sm:$0xf]
    %v1391 = vld [vmem:[%s1378 + $0x30] sm:$0xf]
    %v1392 = vld [vmem:[%s1378 + $0x34] sm:$0xf]
    %v1393 = vld [vmem:[%s1378 + $0x38] sm:$0xf]
    %v1394 = vld [vmem:[%s1378 + $0x3c] sm:$0xf]
    %v1395 = vld [vmem:[%s1378 + $0x40] sm:$0xf]
    %v1396 = vld [vmem:[%s1378 + $0x44] sm:$0xf]
    %v1397 = vld [vmem:[%s1378 + $0x48] sm:$0xf]
    %v1398 = vld [vmem:[%s1378 + $0x4c] sm:$0xf]
    %v1399 = vld [vmem:[%s1378 + $0x50] sm:$0xf]
    %v1400 = vld [vmem:[%s1378 + $0x54] sm:$0xf]
    %v1401 = vld [vmem:[%s1378 + $0x58] sm:$0xf]
    %v1402 = vld [vmem:[%s1378 + $0x5c] sm:$0xf]
    %v1403 = vld [vmem:[%s1378 + $0x60] sm:$0xf]
    %v1404 = vld [vmem:[%s1378 + $0x64] sm:$0xf]
    %v1405 = vld [vmem:[%s1378 + $0x68] sm:$0xf]
    %v1406 = vld [vmem:[%s1378 + $0x6c] sm:$0xf]
    %v1407 = vld [vmem:[%s1378 + $0x70] sm:$0xf]
    %v1408 = vld [vmem:[%s1378 + $0x74] sm:$0xf]
    %v1409 = vld [vmem:[%s1378 + $0x78] sm:$0xf]
    %v1410 = vld [vmem:[%s1378 + $0x7c] sm:$0xf]
    %v1411 = vpack.c.bf16 %v1328, %v1328
    %v1412 = vperm.slane %v60, 0
    %v1413 = vperm.slane %v61, 0
    %v1414 = vperm.slane %v62, 0
    %v1447 = vunpack.c.l.b16 %v1330
    %v1448 = vunpack.c.h.b16 %v1330
    %v1449 = vunpack.c.l.b16 %v1331
    %v1450 = vunpack.c.l.b16 %v1333
    %v1451 = vunpack.c.h.b16 %v1333
    %v1452 = vunpack.c.l.b16 %v1334
    %v1453 = vunpack.c.l.b16 %v1336
    %v1454 = vunpack.c.h.b16 %v1336
    %v1455 = vunpack.c.l.b16 %v1337
    %v1456 = vunpack.c.l.b16 %v1339
    %v1457 = vunpack.c.h.b16 %v1339
    %v1458 = vunpack.c.l.b16 %v1340
    %v1459 = vunpack.c.l.b16 %v1342
    %v1460 = vunpack.c.h.b16 %v1342
    %v1461 = vunpack.c.l.b16 %v1343
    %v1462 = vunpack.c.l.b16 %v1345
    %v1463 = vunpack.c.h.b16 %v1345
    %v1464 = vunpack.c.l.b16 %v1346
    %v1465 = vunpack.c.l.b16 %v1348
    %v1466 = vunpack.c.h.b16 %v1348
    %v1467 = vunpack.c.l.b16 %v1349
    %v1468 = vunpack.c.l.b16 %v1351
    %v1469 = vunpack.c.h.b16 %v1351
    %v1470 = vunpack.c.l.b16 %v1352
    %v1471 = vunpack.c.l.b16 %v1354
    %v1472 = vunpack.c.h.b16 %v1354
    %v1473 = vunpack.c.l.b16 %v1355
    %v1474 = vunpack.c.l.b16 %v1357
    %v1475 = vunpack.c.h.b16 %v1357
    %v1476 = vunpack.c.l.b16 %v1358
    %v1477 = vunpack.c.l.b16 %v1360
    %v1478 = vunpack.c.h.b16 %v1360
    %v1479 = vunpack.c.l.b16 %v1361
    %v1480 = vunpack.c.l.b16 %v1363
    %v1481 = vunpack.c.h.b16 %v1363
    %v1482 = vunpack.c.l.b16 %v1364
    %v1483 = vunpack.c.l.b16 %v1366
    %v1484 = vunpack.c.h.b16 %v1366
    %v1485 = vunpack.c.l.b16 %v1367
    %v1486 = vunpack.c.l.b16 %v1369
    %v1487 = vunpack.c.h.b16 %v1369
    %v1488 = vunpack.c.l.b16 %v1370
    %v1489 = vunpack.c.l.b16 %v1372
    %v1490 = vunpack.c.h.b16 %v1372
    %v1491 = vunpack.c.l.b16 %v1373
    %v1492 = vunpack.c.l.b16 %v1375
    %v1493 = vunpack.c.h.b16 %v1375
    %v1494 = vunpack.c.l.b16 %v1376
    %v1495 = vpack.c.b16 %v1450, %v1447
    %v1496 = vpack.c.b16 %v1451, %v1448
    %v1497 = vpack.c.b16 %v1452, %v1449
    %v1498 = vpack.c.b16 %v1456, %v1453
    %v1499 = vpack.c.b16 %v1457, %v1454
    %v1500 = vpack.c.b16 %v1458, %v1455
    %v1501 = vpack.c.b16 %v1462, %v1459
    %v1502 = vpack.c.b16 %v1463, %v1460
    %v1503 = vpack.c.b16 %v1464, %v1461
    %v1504 = vpack.c.b16 %v1468, %v1465
    %v1505 = vpack.c.b16 %v1469, %v1466
    %v1506 = vpack.c.b16 %v1470, %v1467
    %v1507 = vpack.c.b16 %v1474, %v1471
    %v1508 = vpack.c.b16 %v1475, %v1472
    %v1509 = vpack.c.b16 %v1476, %v1473
    %v1510 = vpack.c.b16 %v1480, %v1477
    %v1511 = vpack.c.b16 %v1481, %v1478
    %v1512 = vpack.c.b16 %v1482, %v1479
    %v1513 = vpack.c.b16 %v1486, %v1483
    %v1514 = vpack.c.b16 %v1487, %v1484
    %v1515 = vpack.c.b16 %v1488, %v1485
    %v1516 = vpack.c.b16 %v1492, %v1489
    %v1517 = vpack.c.b16 %v1493, %v1490
    %v1518 = vpack.c.b16 %v1494, %v1491
    %1543 = vmatpush.bf16.msra.mxu0 %v1516
    %1544 = vmatpush.bf16.msra.mxu0 %v1513
    %1545 = vmatpush.bf16.msra.mxu0 %v1510
    %1546 = vmatpush.bf16.msra.mxu0 %v1507
    %1547 = vmatpush.bf16.msra.mxu0 %v1504
    %1548 = vmatpush.bf16.msra.mxu0 %v1501
    %1549 = vmatpush.bf16.msra.mxu0 %v1498
    %1550 = vmatpush.bf16.msra.mxu0 %v1495
    %1551 = vmatmul.bf16.gmra.mxu0 %v1411
    %v1552 = vpop.f32.mrf.mxu0
    %v1553 = vadd.f32 %v1412, %v1552
    %v1554 = vpop.f32.mrf.mxu0
    %1555 = vdwg.mxu0
    %1556 = vmatpush.bf16.msra.mxu0 %v1517
    %1557 = vmatpush.bf16.msra.mxu0 %v1514
    %1558 = vmatpush.bf16.msra.mxu0 %v1511
    %1559 = vmatpush.bf16.msra.mxu0 %v1508
    %1560 = vmatpush.bf16.msra.mxu0 %v1505
    %1561 = vmatpush.bf16.msra.mxu0 %v1502
    %1562 = vmatpush.bf16.msra.mxu0 %v1499
    %1563 = vmatpush.bf16.msra.mxu0 %v1496
    %1564 = vmatmul.bf16.gmra.mxu0 %v1411
    %v1565 = vpop.f32.mrf.mxu0
    %v1566 = vadd.f32 %v1413, %v1565
    %v1567 = vpop.f32.mrf.mxu0
    %1568 = vdwg.mxu0
    %1569 = vmatpush.bf16.msra.mxu0 %v1518
    %1570 = vmatpush.bf16.msra.mxu0 %v1515
    %1571 = vmatpush.bf16.msra.mxu0 %v1512
    %1572 = vmatpush.bf16.msra.mxu0 %v1509
    %1573 = vmatpush.bf16.msra.mxu0 %v1506
    %1574 = vmatpush.bf16.msra.mxu0 %v1503
    %1575 = vmatpush.bf16.msra.mxu0 %v1500
    %1576 = vmatpush.bf16.msra.mxu0 %v1497
    %1577 = vmatmul.bf16.gmra.mxu0 %v1411
    %v1578 = vpop.f32.mrf.mxu0
    %v1579 = vadd.f32 %v1414, %v1578
    %v1580 = vpop.f32.mrf.mxu0
    %1581 = vdwg.mxu0
    %v1583 = vsel %vm674, %v1553, 0
    %v1586 = vsel %vm674, %v1566, 0
    %1588 = vmatpush.xpose.msra.mxu0 0.0
    %1589 = vmatpush.xpose.msra.mxu0 0.0
    %1590 = vmatpush.xpose.msra.mxu0 0.0
    %1591 = vmatpush.xpose.msra.mxu0 0.0
    %1592 = vmatpush.xpose.msra.mxu0 0.0
    %1593 = vmatpush.xpose.msra.mxu0 0.0
    %1594 = vmatpush.xpose.msra.mxu0 0.0
    %1595 = vmatpush.xpose.msra.mxu0 0.0
    %1596 = vmatpush.xpose.msra.mxu0 0.0
    %1597 = vmatpush.xpose.msra.mxu0 0.0
    %1598 = vmatpush.xpose.msra.mxu0 0.0
    %1599 = vmatpush.xpose.msra.mxu0 0.0
    %1600 = vmatpush.xpose.msra.mxu0 0.0
    %1601 = vmatpush.xpose.msra.mxu0 0.0
    %1602 = vmatpush.xpose.msra.mxu0 0.0
    %1603 = vmatpush.xpose.msra.mxu0 %v1586
    %1604 = vmatmul.f32.gmra.mxu0 %v1583
    %v1605 = vpop.f32.mrf.mxu0
    %v1606 = vadd.f32 %v422, %v1605
    %1607 = vdwg.mxu0
    %v1608 = vsel %vm701, %v1606, -inf
    %1609 = vmax.xlane.f32.xlu0 %v1608
    %v1610 = vpop.xlane.xlu0 %1609
    %v1611 = vsub.f32 %v1606, %v1610
    %v1612 = vmul.f32 %v1611, 1.442695
    %v1613 = vpow.pop %v1612
    %v1614 = vsel %vm701, %v1613, 0.0
    %1615 = vadd.xlane.f32.xlu0 %v1614
    %v1616 = vpop.xlane.xlu0 %1615
    %v1617 = vrcp.pop %v1616
    %v1618 = vmul.f32 %v1613, %v1617
    %v1620 = vsel %vm701, %v1618, 0
    %1622 = vmatpush.msra.mxu0 0.0
    %1623 = vmatpush.msra.mxu0 0.0
    %1624 = vmatpush.msra.mxu0 0.0
    %1625 = vmatpush.msra.mxu0 0.0
    %1626 = vmatpush.msra.mxu0 0.0
    %1627 = vmatpush.msra.mxu0 0.0
    %1628 = vmatpush.msra.mxu0 0.0
    %1629 = vmatpush.msra.mxu0 0.0
    %1630 = vmatpush.msra.mxu0 0.0
    %1631 = vmatpush.msra.mxu0 0.0
    %1632 = vmatpush.msra.mxu0 0.0
    %1633 = vmatpush.msra.mxu0 0.0
    %1634 = vmatpush.msra.mxu0 0.0
    %1635 = vmatpush.msra.mxu0 0.0
    %1636 = vmatpush.msra.mxu0 0.0
    %1637 = vmatpush.msra.mxu0 %v1579
    %1638 = vmatmul.f32.gmra.mxu0 %v1620
    %v1639 = vpop.f32.mrf.mxu0
    %v1640 = vadd.f32 0.0, %v1639
    %1641 = vdwg.mxu0
    %v1642 = vpack.c.bf16 %v1640, %v1640
    %1643 = vrot.lane.b32.xlu0 %v1553, 96
    %v1644 = vpop.permute.xlu0 %1643
    %1645 = vrot.lane.b32.xlu0 %v1566, 96
    %v1646 = vpop.permute.xlu0 %1645
    %v1647 = vsel %vm674, %v1644, 0
    %v1649 = vsel %vm674, %v1646, 0
    %1651 = vmatpush.xpose.msra.mxu0 0.0
    %1652 = vmatpush.xpose.msra.mxu0 0.0
    %1653 = vmatpush.xpose.msra.mxu0 0.0
    %1654 = vmatpush.xpose.msra.mxu0 0.0
    %1655 = vmatpush.xpose.msra.mxu0 0.0
    %1656 = vmatpush.xpose.msra.mxu0 0.0
    %1657 = vmatpush.xpose.msra.mxu0 0.0
    %1658 = vmatpush.xpose.msra.mxu0 0.0
    %1659 = vmatpush.xpose.msra.mxu0 0.0
    %1660 = vmatpush.xpose.msra.mxu0 0.0
    %1661 = vmatpush.xpose.msra.mxu0 0.0
    %1662 = vmatpush.xpose.msra.mxu0 0.0
    %1663 = vmatpush.xpose.msra.mxu0 0.0
    %1664 = vmatpush.xpose.msra.mxu0 0.0
    %1665 = vmatpush.xpose.msra.mxu0 0.0
    %1666 = vmatpush.xpose.msra.mxu0 %v1649
    %1667 = vmatmul.f32.gmra.mxu0 %v1647
    %v1668 = vpop.f32.mrf.mxu0
    %v1669 = vadd.f32 %v422, %v1668
    %1670 = vdwg.mxu0
    %v1671 = vsel %vm701, %v1669, -inf
    %1672 = vmax.xlane.f32.xlu0 %v1671
    %v1673 = vpop.xlane.xlu0 %1672
    %v1674 = vsub.f32 %v1669, %v1673
    %v1675 = vmul.f32 %v1674, 1.442695
    %v1676 = vpow.pop %v1675
    %v1677 = vsel %vm701, %v1676, 0.0
    %1678 = vadd.xlane.f32.xlu0 %v1677
    %v1679 = vpop.xlane.xlu0 %1678
    %v1680 = vrcp.pop %v1679
    %v1681 = vmul.f32 %v1676, %v1680
    %1683 = vrot.lane.b32.xlu0 %v1579, 96
    %v1684 = vpop.permute.xlu0 %1683
    %v1687 = vsel %vm701, %v1681, 0
    %1689 = vmatpush.msra.mxu0 0.0
    %1690 = vmatpush.msra.mxu0 0.0
    %1691 = vmatpush.msra.mxu0 0.0
    %1692 = vmatpush.msra.mxu0 0.0
    %1693 = vmatpush.msra.mxu0 0.0
    %1694 = vmatpush.msra.mxu0 0.0
    %1695 = vmatpush.msra.mxu0 0.0
    %1696 = vmatpush.msra.mxu0 0.0
    %1697 = vmatpush.msra.mxu0 0.0
    %1698 = vmatpush.msra.mxu0 0.0
    %1699 = vmatpush.msra.mxu0 0.0
    %1700 = vmatpush.msra.mxu0 0.0
    %1701 = vmatpush.msra.mxu0 0.0
    %1702 = vmatpush.msra.mxu0 0.0
    %1703 = vmatpush.msra.mxu0 0.0
    %1704 = vmatpush.msra.mxu0 %v1684
    %1705 = vmatmul.f32.gmra.mxu0 %v1687
    %v1706 = vpop.f32.mrf.mxu0
    %v1707 = vadd.f32 0.0, %v1706
    %1708 = vdwg.mxu0
    %v1709 = vpack.c.bf16 %v1707, %v1707
    %v1710 = vunpack.c.h.b16 %v1343
    %v1711 = vunpack.c.h.b16 %v1346
    %v1712 = vunpack.c.h.b16 %v1349
    %v1713 = vunpack.c.h.b16 %v1352
    %v1714 = vpack.c.b16 %v1711, %v1710
    %v1715 = vpack.c.b16 %v1713, %v1712
    %v1719 = vsel %vm674, %v1709, 0
    %1721 = vmatpush.bf16.msra.mxu0 0
    %1722 = vmatpush.bf16.msra.mxu0 0
    %1723 = vmatpush.bf16.msra.mxu0 0
    %1724 = vmatpush.bf16.msra.mxu0 0
    %1725 = vmatpush.bf16.msra.mxu0 0
    %1726 = vmatpush.bf16.msra.mxu0 0
    %1727 = vmatpush.bf16.msra.mxu0 %v1715
    %1728 = vmatpush.bf16.msra.mxu0 %v1714
    %1729 = vmatmul.bf16.gmra.mxu0 %v1719
    %v1730 = vpop.f32.mrf.mxu0
    %v1731 = vadd.f32 0.0, %v1730
    %v1732 = vpop.f32.mrf.mxu0
    %1733 = vdwg.mxu0
    %v1734 = vunpack.c.h.b16 %v1331
    %v1735 = vunpack.c.h.b16 %v1334
    %v1736 = vunpack.c.h.b16 %v1337
    %v1737 = vunpack.c.h.b16 %v1340
    %v1738 = vpack.c.b16 %v1735, %v1734
    %v1739 = vpack.c.b16 %v1737, %v1736
    %v1743 = vsel %vm674, %v1642, 0
    %1745 = vmatpush.bf16.msra.mxu0 0
    %1746 = vmatpush.bf16.msra.mxu0 0
    %1747 = vmatpush.bf16.msra.mxu0 0
    %1748 = vmatpush.bf16.msra.mxu0 0
    %1749 = vmatpush.bf16.msra.mxu0 0
    %1750 = vmatpush.bf16.msra.mxu0 0
    %1751 = vmatpush.bf16.msra.mxu0 %v1739
    %1752 = vmatpush.bf16.msra.mxu0 %v1738
    %1753 = vmatmul.bf16.gmra.mxu0 %v1743
    %v1754 = vpop.f32.mrf.mxu0
    %v1755 = vadd.f32 %v1731, %v1754
    %v1756 = vpop.f32.mrf.mxu0
    %1757 = vdwg.mxu0
    %1758 = vrot.lane.b32.xlu0 %v1553, 64
    %v1759 = vpop.permute.xlu0 %1758
    %1760 = vrot.lane.b32.xlu0 %v1566, 64
    %v1761 = vpop.permute.xlu0 %1760
    %v1762 = vsel %vm674, %v1759, 0
    %v1764 = vsel %vm674, %v1761, 0
    %1766 = vmatpush.xpose.msra.mxu0 0.0
    %1767 = vmatpush.xpose.msra.mxu0 0.0
    %1768 = vmatpush.xpose.msra.mxu0 0.0
    %1769 = vmatpush.xpose.msra.mxu0 0.0
    %1770 = vmatpush.xpose.msra.mxu0 0.0
    %1771 = vmatpush.xpose.msra.mxu0 0.0
    %1772 = vmatpush.xpose.msra.mxu0 0.0
    %1773 = vmatpush.xpose.msra.mxu0 0.0
    %1774 = vmatpush.xpose.msra.mxu0 0.0
    %1775 = vmatpush.xpose.msra.mxu0 0.0
    %1776 = vmatpush.xpose.msra.mxu0 0.0
    %1777 = vmatpush.xpose.msra.mxu0 0.0
    %1778 = vmatpush.xpose.msra.mxu0 0.0
    %1779 = vmatpush.xpose.msra.mxu0 0.0
    %1780 = vmatpush.xpose.msra.mxu0 0.0
    %1781 = vmatpush.xpose.msra.mxu0 %v1764
    %1782 = vmatmul.f32.gmra.mxu0 %v1762
    %v1783 = vpop.f32.mrf.mxu0
    %v1784 = vadd.f32 %v422, %v1783
    %1785 = vdwg.mxu0
    %v1786 = vsel %vm701, %v1784, -inf
    %1787 = vmax.xlane.f32.xlu0 %v1786
    %v1788 = vpop.xlane.xlu0 %1787
    %v1789 = vsub.f32 %v1784, %v1788
    %v1790 = vmul.f32 %v1789, 1.442695
    %v1791 = vpow.pop %v1790
    %v1792 = vsel %vm701, %v1791, 0.0
    %1793 = vadd.xlane.f32.xlu0 %v1792
    %v1794 = vpop.xlane.xlu0 %1793
    %v1795 = vrcp.pop %v1794
    %v1796 = vmul.f32 %v1791, %v1795
    %1797 = vrot.lane.b32.xlu0 %v1579, 64
    %v1798 = vpop.permute.xlu0 %1797
    %v1801 = vsel %vm701, %v1796, 0
    %1803 = vmatpush.msra.mxu0 0.0
    %1804 = vmatpush.msra.mxu0 0.0
    %1805 = vmatpush.msra.mxu0 0.0
    %1806 = vmatpush.msra.mxu0 0.0
    %1807 = vmatpush.msra.mxu0 0.0
    %1808 = vmatpush.msra.mxu0 0.0
    %1809 = vmatpush.msra.mxu0 0.0
    %1810 = vmatpush.msra.mxu0 0.0
    %1811 = vmatpush.msra.mxu0 0.0
    %1812 = vmatpush.msra.mxu0 0.0
    %1813 = vmatpush.msra.mxu0 0.0
    %1814 = vmatpush.msra.mxu0 0.0
    %1815 = vmatpush.msra.mxu0 0.0
    %1816 = vmatpush.msra.mxu0 0.0
    %1817 = vmatpush.msra.mxu0 0.0
    %1818 = vmatpush.msra.mxu0 %v1798
    %1819 = vmatmul.f32.gmra.mxu0 %v1801
    %v1820 = vpop.f32.mrf.mxu0
    %v1821 = vadd.f32 0.0, %v1820
    %1822 = vdwg.mxu0
    %v1823 = vpack.c.bf16 %v1821, %v1821
    %v1824 = vunpack.c.h.b16 %v1355
    %v1825 = vunpack.c.h.b16 %v1358
    %v1826 = vunpack.c.h.b16 %v1361
    %v1827 = vunpack.c.h.b16 %v1364
    %v1828 = vpack.c.b16 %v1825, %v1824
    %v1829 = vpack.c.b16 %v1827, %v1826
    %v1833 = vsel %vm674, %v1823, 0
    %1835 = vmatpush.bf16.msra.mxu0 0
    %1836 = vmatpush.bf16.msra.mxu0 0
    %1837 = vmatpush.bf16.msra.mxu0 0
    %1838 = vmatpush.bf16.msra.mxu0 0
    %1839 = vmatpush.bf16.msra.mxu0 0
    %1840 = vmatpush.bf16.msra.mxu0 0
    %1841 = vmatpush.bf16.msra.mxu0 %v1829
    %1842 = vmatpush.bf16.msra.mxu0 %v1828
    %1843 = vmatmul.bf16.gmra.mxu0 %v1833
    %v1844 = vpop.f32.mrf.mxu0
    %v1845 = vadd.f32 0.0, %v1844
    %v1846 = vpop.f32.mrf.mxu0
    %1847 = vdwg.mxu0
    %v1848 = vadd.f32 %v1755, %v1845
    %1849 = vrot.lane.b32.xlu0 %v1553, 32
    %v1850 = vpop.permute.xlu0 %1849
    %1851 = vrot.lane.b32.xlu0 %v1566, 32
    %v1852 = vpop.permute.xlu0 %1851
    %v1853 = vsel %vm674, %v1850, 0
    %v1855 = vsel %vm674, %v1852, 0
    %1857 = vmatpush.xpose.msra.mxu0 0.0
    %1858 = vmatpush.xpose.msra.mxu0 0.0
    %1859 = vmatpush.xpose.msra.mxu0 0.0
    %1860 = vmatpush.xpose.msra.mxu0 0.0
    %1861 = vmatpush.xpose.msra.mxu0 0.0
    %1862 = vmatpush.xpose.msra.mxu0 0.0
    %1863 = vmatpush.xpose.msra.mxu0 0.0
    %1864 = vmatpush.xpose.msra.mxu0 0.0
    %1865 = vmatpush.xpose.msra.mxu0 0.0
    %1866 = vmatpush.xpose.msra.mxu0 0.0
    %1867 = vmatpush.xpose.msra.mxu0 0.0
    %1868 = vmatpush.xpose.msra.mxu0 0.0
    %1869 = vmatpush.xpose.msra.mxu0 0.0
    %1870 = vmatpush.xpose.msra.mxu0 0.0
    %1871 = vmatpush.xpose.msra.mxu0 0.0
    %1872 = vmatpush.xpose.msra.mxu0 %v1855
    %1873 = vmatmul.f32.gmra.mxu0 %v1853
    %v1874 = vpop.f32.mrf.mxu0
    %v1875 = vadd.f32 %v422, %v1874
    %1876 = vdwg.mxu0
    %v1877 = vsel %vm701, %v1875, -inf
    %1878 = vmax.xlane.f32.xlu0 %v1877
    %v1879 = vpop.xlane.xlu0 %1878
    %v1880 = vsub.f32 %v1875, %v1879
    %v1881 = vmul.f32 %v1880, 1.442695
    %v1882 = vpow.pop %v1881
    %v1883 = vsel %vm701, %v1882, 0.0
    %1884 = vadd.xlane.f32.xlu0 %v1883
    %v1885 = vpop.xlane.xlu0 %1884
    %v1886 = vrcp.pop %v1885
    %v1887 = vmul.f32 %v1882, %v1886
    %1888 = vrot.lane.b32.xlu0 %v1579, 32
    %v1889 = vpop.permute.xlu0 %1888
    %v1892 = vsel %vm701, %v1887, 0
    %1894 = vmatpush.msra.mxu0 0.0
    %1895 = vmatpush.msra.mxu0 0.0
    %1896 = vmatpush.msra.mxu0 0.0
    %1897 = vmatpush.msra.mxu0 0.0
    %1898 = vmatpush.msra.mxu0 0.0
    %1899 = vmatpush.msra.mxu0 0.0
    %1900 = vmatpush.msra.mxu0 0.0
    %1901 = vmatpush.msra.mxu0 0.0
    %1902 = vmatpush.msra.mxu0 0.0
    %1903 = vmatpush.msra.mxu0 0.0
    %1904 = vmatpush.msra.mxu0 0.0
    %1905 = vmatpush.msra.mxu0 0.0
    %1906 = vmatpush.msra.mxu0 0.0
    %1907 = vmatpush.msra.mxu0 0.0
    %1908 = vmatpush.msra.mxu0 0.0
    %1909 = vmatpush.msra.mxu0 %v1889
    %1910 = vmatmul.f32.gmra.mxu0 %v1892
    %v1911 = vpop.f32.mrf.mxu0
    %v1912 = vadd.f32 0.0, %v1911
    %1913 = vdwg.mxu0
    %v1914 = vpack.c.bf16 %v1912, %v1912
    %v1915 = vunpack.c.h.b16 %v1367
    %v1916 = vunpack.c.h.b16 %v1370
    %v1917 = vunpack.c.h.b16 %v1373
    %v1918 = vunpack.c.h.b16 %v1376
    %v1919 = vpack.c.b16 %v1916, %v1915
    %v1920 = vpack.c.b16 %v1918, %v1917
    %v1924 = vsel %vm674, %v1914, 0
    %1926 = vmatpush.bf16.msra.mxu0 0
    %1927 = vmatpush.bf16.msra.mxu0 0
    %1928 = vmatpush.bf16.msra.mxu0 0
    %1929 = vmatpush.bf16.msra.mxu0 0
    %1930 = vmatpush.bf16.msra.mxu0 0
    %1931 = vmatpush.bf16.msra.mxu0 0
    %1932 = vmatpush.bf16.msra.mxu0 %v1920
    %1933 = vmatpush.bf16.msra.mxu0 %v1919
    %1934 = vmatmul.bf16.gmra.mxu0 %v1924
    %v1935 = vpop.f32.mrf.mxu0
    %v1936 = vadd.f32 0.0, %v1935
    %v1937 = vpop.f32.mrf.mxu0
    %1938 = vdwg.mxu0
    %v1939 = vadd.f32 %v1848, %v1936
    %v1940 = vperm.slane %v60, 1
    %v1941 = vadd.f32 %v1939, %v1940
    %v1942 = vadd.f32 %v1328, %v1941
    %1943 = vadd.xlane.f32.xlu0 %v1942
    %v1944 = vpop.xlane.xlu0 %1943
    %v1945 = vmul.f32 %v1944, %v1045
    %v1946 = vsub.f32 %v1942, %v1945
    %v1947 = vmul.f32 %v1946, %v1946
    %1948 = vadd.xlane.f32.xlu0 %v1947
    %v1949 = vpop.xlane.xlu0 %1948
    %v1950 = vmul.f32 %v1949, %v1045
    %v1951 = vadd.f32 %v1950, 1e-05
    %v1952 = vrsqrt.pop %v1951
    %v1953 = vmul.f32 %v1952, %v1951
    %v1954 = vmul.f32 %v1953, %v1952
    %v1955 = vmul.f32 0.5, %v1954
    %v1956 = vsub.f32 1.5, %v1955
    %v1957 = vmul.f32 %v1952, %v1956
    %vm1958 = vweird.f32 %v1951
    %vm1959 = vweird.f32 %v1952
    %vm1960 = vmor %vm1958, %vm1959
    %v1961 = vsel %vm1960, %v1952, %v1957
    %v1962 = vmul.f32 %v1946, %v1961
    %v1963 = vperm.slane %v60, 2
    %v1964 = vmul.f32 %v1962, %v1963
    %v1965 = vperm.slane %v60, 3
    %v1966 = vadd.f32 %v1964, %v1965
    %v1967 = vpack.c.bf16 %v1966, %v1966
    %v1968 = vperm.slane %v60, 4
    %v1969 = vperm.slane %v61, 4
    %v1986 = vunpack.c.l.b16 %v1332
    %v1987 = vunpack.c.h.b16 %v1332
    %v1988 = vunpack.c.l.b16 %v1335
    %v1989 = vunpack.c.h.b16 %v1335
    %v1990 = vunpack.c.l.b16 %v1338
    %v1991 = vunpack.c.h.b16 %v1338
    %v1992 = vunpack.c.l.b16 %v1341
    %v1993 = vunpack.c.h.b16 %v1341
    %v1994 = vunpack.c.l.b16 %v1344
    %v1995 = vunpack.c.h.b16 %v1344
    %v1996 = vunpack.c.l.b16 %v1347
    %v1997 = vunpack.c.h.b16 %v1347
    %v1998 = vunpack.c.l.b16 %v1350
    %v1999 = vunpack.c.h.b16 %v1350
    %v2000 = vunpack.c.l.b16 %v1353
    %v2001 = vunpack.c.h.b16 %v1353
    %v2002 = vunpack.c.l.b16 %v1356
    %v2003 = vunpack.c.h.b16 %v1356
    %v2004 = vunpack.c.l.b16 %v1359
    %v2005 = vunpack.c.h.b16 %v1359
    %v2006 = vunpack.c.l.b16 %v1362
    %v2007 = vunpack.c.h.b16 %v1362
    %v2008 = vunpack.c.l.b16 %v1365
    %v2009 = vunpack.c.h.b16 %v1365
    %v2010 = vunpack.c.l.b16 %v1368
    %v2011 = vunpack.c.h.b16 %v1368
    %v2012 = vunpack.c.l.b16 %v1371
    %v2013 = vunpack.c.h.b16 %v1371
    %v2014 = vunpack.c.l.b16 %v1374
    %v2015 = vunpack.c.h.b16 %v1374
    %v2016 = vunpack.c.l.b16 %v1377
    %v2017 = vunpack.c.h.b16 %v1377
    %v2018 = vpack.c.b16 %v1988, %v1986
    %v2019 = vpack.c.b16 %v1989, %v1987
    %v2020 = vpack.c.b16 %v1992, %v1990
    %v2021 = vpack.c.b16 %v1993, %v1991
    %v2022 = vpack.c.b16 %v1996, %v1994
    %v2023 = vpack.c.b16 %v1997, %v1995
    %v2024 = vpack.c.b16 %v2000, %v1998
    %v2025 = vpack.c.b16 %v2001, %v1999
    %v2026 = vpack.c.b16 %v2004, %v2002
    %v2027 = vpack.c.b16 %v2005, %v2003
    %v2028 = vpack.c.b16 %v2008, %v2006
    %v2029 = vpack.c.b16 %v2009, %v2007
    %v2030 = vpack.c.b16 %v2012, %v2010
    %v2031 = vpack.c.b16 %v2013, %v2011
    %v2032 = vpack.c.b16 %v2016, %v2014
    %v2033 = vpack.c.b16 %v2017, %v2015
    %2050 = vmatpush.bf16.msra.mxu0 %v2032
    %2051 = vmatpush.bf16.msra.mxu0 %v2030
    %2052 = vmatpush.bf16.msra.mxu0 %v2028
    %2053 = vmatpush.bf16.msra.mxu0 %v2026
    %2054 = vmatpush.bf16.msra.mxu0 %v2024
    %2055 = vmatpush.bf16.msra.mxu0 %v2022
    %2056 = vmatpush.bf16.msra.mxu0 %v2020
    %2057 = vmatpush.bf16.msra.mxu0 %v2018
    %2058 = vmatmul.bf16.gmra.mxu0 %v1967
    %v2059 = vpop.f32.mrf.mxu0
    %v2060 = vadd.f32 %v1968, %v2059
    %v2061 = vpop.f32.mrf.mxu0
    %2062 = vdwg.mxu0
    %2063 = vmatpush.bf16.msra.mxu0 %v2033
    %2064 = vmatpush.bf16.msra.mxu0 %v2031
    %2065 = vmatpush.bf16.msra.mxu0 %v2029
    %2066 = vmatpush.bf16.msra.mxu0 %v2027
    %2067 = vmatpush.bf16.msra.mxu0 %v2025
    %2068 = vmatpush.bf16.msra.mxu0 %v2023
    %2069 = vmatpush.bf16.msra.mxu0 %v2021
    %2070 = vmatpush.bf16.msra.mxu0 %v2019
    %2071 = vmatmul.bf16.gmra.mxu0 %v1967
    %v2072 = vpop.f32.mrf.mxu0
    %v2073 = vadd.f32 %v1969, %v2072
    %v2074 = vpop.f32.mrf.mxu0
    %2075 = vdwg.mxu0
    %v2076 = vmax.f32 %v2060, 0.0
    %v2077 = vmax.f32 %v2073, 0.0
    %v2078 = vpack.c.bf16 %v2076, %v2076
    %v2079 = vpack.c.bf16 %v2077, %v2077
    %v2080 = vperm.slane %v60, 5
    %v2113 = vunpack.c.l.b16 %v1379
    %v2114 = vunpack.c.l.b16 %v1380
    %v2115 = vunpack.c.l.b16 %v1381
    %v2116 = vunpack.c.l.b16 %v1382
    %v2117 = vunpack.c.l.b16 %v1383
    %v2118 = vunpack.c.l.b16 %v1384
    %v2119 = vunpack.c.l.b16 %v1385
    %v2120 = vunpack.c.l.b16 %v1386
    %v2121 = vunpack.c.l.b16 %v1387
    %v2122 = vunpack.c.l.b16 %v1388
    %v2123 = vunpack.c.l.b16 %v1389
    %v2124 = vunpack.c.l.b16 %v1390
    %v2125 = vunpack.c.l.b16 %v1391
    %v2126 = vunpack.c.l.b16 %v1392
    %v2127 = vunpack.c.l.b16 %v1393
    %v2128 = vunpack.c.l.b16 %v1394
    %v2129 = vunpack.c.l.b16 %v1395
    %v2130 = vunpack.c.l.b16 %v1396
    %v2131 = vunpack.c.l.b16 %v1397
    %v2132 = vunpack.c.l.b16 %v1398
    %v2133 = vunpack.c.l.b16 %v1399
    %v2134 = vunpack.c.l.b16 %v1400
    %v2135 = vunpack.c.l.b16 %v1401
    %v2136 = vunpack.c.l.b16 %v1402
    %v2137 = vunpack.c.l.b16 %v1403
    %v2138 = vunpack.c.l.b16 %v1404
    %v2139 = vunpack.c.l.b16 %v1405
    %v2140 = vunpack.c.l.b16 %v1406
    %v2141 = vunpack.c.l.b16 %v1407
    %v2142 = vunpack.c.l.b16 %v1408
    %v2143 = vunpack.c.l.b16 %v1409
    %v2144 = vunpack.c.l.b16 %v1410
    %v2145 = vpack.c.b16 %v2114, %v2113
    %v2146 = vpack.c.b16 %v2116, %v2115
    %v2147 = vpack.c.b16 %v2118, %v2117
    %v2148 = vpack.c.b16 %v2120, %v2119
    %v2149 = vpack.c.b16 %v2122, %v2121
    %v2150 = vpack.c.b16 %v2124, %v2123
    %v2151 = vpack.c.b16 %v2126, %v2125
    %v2152 = vpack.c.b16 %v2128, %v2127
    %v2153 = vpack.c.b16 %v2130, %v2129
    %v2154 = vpack.c.b16 %v2132, %v2131
    %v2155 = vpack.c.b16 %v2134, %v2133
    %v2156 = vpack.c.b16 %v2136, %v2135
    %v2157 = vpack.c.b16 %v2138, %v2137
    %v2158 = vpack.c.b16 %v2140, %v2139
    %v2159 = vpack.c.b16 %v2142, %v2141
    %v2160 = vpack.c.b16 %v2144, %v2143
    %2177 = vmatpush.bf16.msra.mxu0 %v2152
    %2178 = vmatpush.bf16.msra.mxu0 %v2151
    %2179 = vmatpush.bf16.msra.mxu0 %v2150
    %2180 = vmatpush.bf16.msra.mxu0 %v2149
    %2181 = vmatpush.bf16.msra.mxu0 %v2148
    %2182 = vmatpush.bf16.msra.mxu0 %v2147
    %2183 = vmatpush.bf16.msra.mxu0 %v2146
    %2184 = vmatpush.bf16.msra.mxu0 %v2145
    %2185 = vmatmul.bf16.gmra.mxu0 %v2078
    %v2186 = vpop.f32.mrf.mxu0
    %v2187 = vadd.f32 %v2080, %v2186
    %v2188 = vpop.f32.mrf.mxu0
    %2189 = vdwg.mxu0
    %2190 = vmatpush.bf16.msra.mxu0 %v2160
    %2191 = vmatpush.bf16.msra.mxu0 %v2159
    %2192 = vmatpush.bf16.msra.mxu0 %v2158
    %2193 = vmatpush.bf16.msra.mxu0 %v2157
    %2194 = vmatpush.bf16.msra.mxu0 %v2156
    %2195 = vmatpush.bf16.msra.mxu0 %v2155
    %2196 = vmatpush.bf16.msra.mxu0 %v2154
    %2197 = vmatpush.bf16.msra.mxu0 %v2153
    %2198 = vmatmul.bf16.gmra.mxu0 %v2079
    %v2199 = vpop.f32.mrf.mxu0
    %v2200 = vadd.f32 %v2187, %v2199
    %v2201 = vpop.f32.mrf.mxu0
    %2202 = vdwg.mxu0
    %v2203 = vadd.f32 %v1966, %v2200
    %2204 = vadd.xlane.f32.xlu0 %v2203
    %v2205 = vpop.xlane.xlu0 %2204
    %v2206 = vmul.f32 %v2205, %v1045
    %v2207 = vsub.f32 %v2203, %v2206
    %v2208 = vmul.f32 %v2207, %v2207
    %2209 = vadd.xlane.f32.xlu0 %v2208
    %v2210 = vpop.xlane.xlu0 %2209
    %v2211 = vmul.f32 %v2210, %v1045
    %v2212 = vadd.f32 %v2211, 1e-05
    %v2213 = vrsqrt.pop %v2212
    %v2214 = vmul.f32 %v2213, %v2212
    %v2215 = vmul.f32 %v2214, %v2213
    %v2216 = vmul.f32 0.5, %v2215
    %v2217 = vsub.f32 1.5, %v2216
    %v2218 = vmul.f32 %v2213, %v2217
    %vm2219 = vweird.f32 %v2212
    %vm2220 = vweird.f32 %v2213
    %vm2221 = vmor %vm2219, %vm2220
    %v2222 = vsel %vm2221, %v2213, %v2218
    %v2223 = vmul.f32 %v2207, %v2222
    %v2224 = vperm.slane %v60, 6
    %v2225 = vmul.f32 %v2223, %v2224
    %v2226 = vperm.slane %v60, 7
    %v2227 = vadd.f32 %v2225, %v2226
    %2228 = vadd.xlane.f32.xlu0 %v2227
    %v2229 = vpop.xlane.xlu0 %2228
    %v2230 = vmul.f32 %v2229, %v1045
    %v2231 = vsub.f32 %v2227, %v2230
    %v2232 = vmul.f32 %v2231, %v2231
    %2233 = vadd.xlane.f32.xlu0 %v2232
    %v2234 = vpop.xlane.xlu0 %2233
    %v2235 = vmul.f32 %v2234, %v1045
    %v2236 = vadd.f32 %v2235, 1e-05
    %v2237 = vrsqrt.pop %v2236
    %v2238 = vmul.f32 %v2237, %v2236
    %v2239 = vmul.f32 %v2238, %v2237
    %v2240 = vmul.f32 0.5, %v2239
    %v2241 = vsub.f32 1.5, %v2240
    %v2242 = vmul.f32 %v2237, %v2241
    %vm2243 = vweird.f32 %v2236
    %vm2244 = vweird.f32 %v2237
    %vm2245 = vmor %vm2243, %vm2244
    %v2246 = vsel %vm2245, %v2237, %v2242
    %v2247 = vmul.f32 %v2231, %v2246
    %v2248 = vperm.slane %v63, 0
    %v2249 = vmul.f32 %v2247, %v2248
    %v2250 = vperm.slane %v63, 1
    %v2251 = vadd.f32 %v2249, %v2250
    %v2252 = vsel %vm701, %v275, 0
    %2254 = vmatpush.msra.mxu0 0.0
    %2255 = vmatpush.msra.mxu0 0.0
    %2256 = vmatpush.msra.mxu0 0.0
    %2257 = vmatpush.msra.mxu0 0.0
    %2258 = vmatpush.msra.mxu0 0.0
    %2259 = vmatpush.msra.mxu0 0.0
    %2260 = vmatpush.msra.mxu0 0.0
    %2261 = vmatpush.msra.mxu0 0.0
    %2262 = vmatpush.msra.mxu0 0.0
    %2263 = vmatpush.msra.mxu0 0.0
    %2264 = vmatpush.msra.mxu0 0.0
    %2265 = vmatpush.msra.mxu0 0.0
    %2266 = vmatpush.msra.mxu0 0.0
    %2267 = vmatpush.msra.mxu0 0.0
    %2268 = vmatpush.msra.mxu0 0.0
    %2269 = vmatpush.msra.mxu0 %v2251
    %2270 = vmatmul.f32.gmra.mxu0 %v2252
    %v2271 = vpop.f32.mrf.mxu0
    %v2272 = vadd.f32 0.0, %v2271
    %2273 = vdwg.mxu0
    %v2274 = vld [vmem:[%s5] sm:$0xf]
    %v2275 = vld [vmem:[%s5 + $0x4] sm:$0xf]
    %v2276 = vld [vmem:[%s5 + $0x8] sm:$0xf]
    %v2277 = vld [vmem:[%s5 + $0xc] sm:$0xf]
    %v2278 = vld [vmem:[%s5 + $0x10] sm:$0xf]
    %v2279 = vld [vmem:[%s5 + $0x14] sm:$0xf]
    %v2280 = vld [vmem:[%s5 + $0x18] sm:$0xf]
    %v2281 = vld [vmem:[%s5 + $0x1c] sm:$0xf]
    %v2282 = vld [vmem:[%s5 + $0x20] sm:$0xf]
    %v2283 = vld [vmem:[%s5 + $0x24] sm:$0xf]
    %v2284 = vld [vmem:[%s5 + $0x28] sm:$0xf]
    %v2285 = vld [vmem:[%s5 + $0x2c] sm:$0xf]
    %v2286 = vld [vmem:[%s5 + $0x30] sm:$0xf]
    %v2287 = vld [vmem:[%s5 + $0x34] sm:$0xf]
    %v2288 = vld [vmem:[%s5 + $0x38] sm:$0xf]
    %v2289 = vld [vmem:[%s5 + $0x3c] sm:$0xf]
    %v2290 = vpack.c.bf16 %v2272, %v2272
    %v2291 = vadd.s32 %v270, 2
    %vm2292 = vcmp.eq.s32.totalorder %v272, %v2291
    %v2293 = vsel %vm2292, 1, 0
    %v2294 = vcvt.s32.f32 %v2293
    %v2296 = vsel %vm701, %v2294, 0
    %2298 = vmatpush.msra.mxu0 0.0
    %2299 = vmatpush.msra.mxu0 0.0
    %2300 = vmatpush.msra.mxu0 0.0
    %2301 = vmatpush.msra.mxu0 0.0
    %2302 = vmatpush.msra.mxu0 0.0
    %2303 = vmatpush.msra.mxu0 0.0
    %2304 = vmatpush.msra.mxu0 0.0
    %2305 = vmatpush.msra.mxu0 0.0
    %2306 = vmatpush.msra.mxu0 0.0
    %2307 = vmatpush.msra.mxu0 0.0
    %2308 = vmatpush.msra.mxu0 0.0
    %2309 = vmatpush.msra.mxu0 0.0
    %2310 = vmatpush.msra.mxu0 0.0
    %2311 = vmatpush.msra.mxu0 0.0
    %2312 = vmatpush.msra.mxu0 0.0
    %2313 = vmatpush.msra.mxu0 %v2251
    %2314 = vmatmul.f32.gmra.mxu0 %v2296
    %v2315 = vpop.f32.mrf.mxu0
    %v2316 = vadd.f32 0.0, %v2315
    %2317 = vdwg.mxu0
    %v2318 = vld [vmem:[%s5 + $0x40] sm:$0xf]
    %v2319 = vld [vmem:[%s5 + $0x44] sm:$0xf]
    %v2320 = vld [vmem:[%s5 + $0x48] sm:$0xf]
    %v2321 = vld [vmem:[%s5 + $0x4c] sm:$0xf]
    %v2322 = vld [vmem:[%s5 + $0x50] sm:$0xf]
    %v2323 = vld [vmem:[%s5 + $0x54] sm:$0xf]
    %v2324 = vld [vmem:[%s5 + $0x58] sm:$0xf]
    %v2325 = vld [vmem:[%s5 + $0x5c] sm:$0xf]
    %v2326 = vld [vmem:[%s5 + $0x60] sm:$0xf]
    %v2327 = vld [vmem:[%s5 + $0x64] sm:$0xf]
    %v2328 = vld [vmem:[%s5 + $0x68] sm:$0xf]
    %v2329 = vld [vmem:[%s5 + $0x6c] sm:$0xf]
    %v2330 = vld [vmem:[%s5 + $0x70] sm:$0xf]
    %v2331 = vld [vmem:[%s5 + $0x74] sm:$0xf]
    %v2332 = vld [vmem:[%s5 + $0x78] sm:$0xf]
    %v2333 = vld [vmem:[%s5 + $0x7c] sm:$0xf]
    %v2334 = vpack.c.bf16 %v2316, %v2316
    %v2351 = vunpack.c.l.b16 %v2318
    %v2352 = vunpack.c.l.b16 %v2319
    %v2353 = vunpack.c.l.b16 %v2320
    %v2354 = vunpack.c.l.b16 %v2321
    %v2355 = vunpack.c.l.b16 %v2322
    %v2356 = vunpack.c.l.b16 %v2323
    %v2357 = vunpack.c.l.b16 %v2324
    %v2358 = vunpack.c.l.b16 %v2325
    %v2359 = vunpack.c.l.b16 %v2326
    %v2360 = vunpack.c.l.b16 %v2327
    %v2361 = vunpack.c.l.b16 %v2328
    %v2362 = vunpack.c.l.b16 %v2329
    %v2363 = vunpack.c.l.b16 %v2330
    %v2364 = vunpack.c.l.b16 %v2331
    %v2365 = vunpack.c.l.b16 %v2332
    %v2366 = vunpack.c.l.b16 %v2333
    %v2367 = vpack.c.b16 %v2352, %v2351
    %v2368 = vpack.c.b16 %v2354, %v2353
    %v2369 = vpack.c.b16 %v2356, %v2355
    %v2370 = vpack.c.b16 %v2358, %v2357
    %v2371 = vpack.c.b16 %v2360, %v2359
    %v2372 = vpack.c.b16 %v2362, %v2361
    %v2373 = vpack.c.b16 %v2364, %v2363
    %v2374 = vpack.c.b16 %v2366, %v2365
    %2383 = vmatpush.bf16.msra.mxu0 %v2374
    %2384 = vmatpush.bf16.msra.mxu0 %v2373
    %2385 = vmatpush.bf16.msra.mxu0 %v2372
    %2386 = vmatpush.bf16.msra.mxu0 %v2371
    %2387 = vmatpush.bf16.msra.mxu0 %v2370
    %2388 = vmatpush.bf16.msra.mxu0 %v2369
    %2389 = vmatpush.bf16.msra.mxu0 %v2368
    %2390 = vmatpush.bf16.msra.mxu0 %v2367
    %2391 = vmatmul.bf16.gmra.mxu0 %v2334
    %v2392 = vpop.f32.mrf.mxu0
    %v2393 = vadd.f32 0.0, %v2392
    %v2394 = vpop.f32.mrf.mxu0
    %2395 = vdwg.mxu0
    %v2412 = vunpack.c.l.b16 %v2274
    %v2413 = vunpack.c.l.b16 %v2275
    %v2414 = vunpack.c.l.b16 %v2276
    %v2415 = vunpack.c.l.b16 %v2277
    %v2416 = vunpack.c.l.b16 %v2278
    %v2417 = vunpack.c.l.b16 %v2279
    %v2418 = vunpack.c.l.b16 %v2280
    %v2419 = vunpack.c.l.b16 %v2281
    %v2420 = vunpack.c.l.b16 %v2282
    %v2421 = vunpack.c.l.b16 %v2283
    %v2422 = vunpack.c.l.b16 %v2284
    %v2423 = vunpack.c.l.b16 %v2285
    %v2424 = vunpack.c.l.b16 %v2286
    %v2425 = vunpack.c.l.b16 %v2287
    %v2426 = vunpack.c.l.b16 %v2288
    %v2427 = vunpack.c.l.b16 %v2289
    %v2428 = vpack.c.b16 %v2413, %v2412
    %v2429 = vpack.c.b16 %v2415, %v2414
    %v2430 = vpack.c.b16 %v2417, %v2416
    %v2431 = vpack.c.b16 %v2419, %v2418
    %v2432 = vpack.c.b16 %v2421, %v2420
    %v2433 = vpack.c.b16 %v2423, %v2422
    %v2434 = vpack.c.b16 %v2425, %v2424
    %v2435 = vpack.c.b16 %v2427, %v2426
    %2444 = vmatpush.bf16.msra.mxu0 %v2435
    %2445 = vmatpush.bf16.msra.mxu0 %v2434
    %2446 = vmatpush.bf16.msra.mxu0 %v2433
    %2447 = vmatpush.bf16.msra.mxu0 %v2432
    %2448 = vmatpush.bf16.msra.mxu0 %v2431
    %2449 = vmatpush.bf16.msra.mxu0 %v2430
    %2450 = vmatpush.bf16.msra.mxu0 %v2429
    %2451 = vmatpush.bf16.msra.mxu0 %v2428
    %2452 = vmatmul.bf16.gmra.mxu0 %v2290
    %v2453 = vpop.f32.mrf.mxu0
    %v2454 = vadd.f32 %v2393, %v2453
    %v2455 = vpop.f32.mrf.mxu0
    %2456 = vdwg.mxu0
    %v2457 = vadd.s32 %v270, 4
    %vm2458 = vcmp.eq.s32.totalorder %v272, %v2457
    %v2459 = vsel %vm2458, 1, 0
    %v2460 = vcvt.s32.f32 %v2459
    %v2462 = vsel %vm701, %v2460, 0
    %2464 = vmatpush.msra.mxu0 0.0
    %2465 = vmatpush.msra.mxu0 0.0
    %2466 = vmatpush.msra.mxu0 0.0
    %2467 = vmatpush.msra.mxu0 0.0
    %2468 = vmatpush.msra.mxu0 0.0
    %2469 = vmatpush.msra.mxu0 0.0
    %2470 = vmatpush.msra.mxu0 0.0
    %2471 = vmatpush.msra.mxu0 0.0
    %2472 = vmatpush.msra.mxu0 0.0
    %2473 = vmatpush.msra.mxu0 0.0
    %2474 = vmatpush.msra.mxu0 0.0
    %2475 = vmatpush.msra.mxu0 0.0
    %2476 = vmatpush.msra.mxu0 0.0
    %2477 = vmatpush.msra.mxu0 0.0
    %2478 = vmatpush.msra.mxu0 0.0
    %2479 = vmatpush.msra.mxu0 %v2251
    %2480 = vmatmul.f32.gmra.mxu0 %v2462
    %v2481 = vpop.f32.mrf.mxu0
    %v2482 = vadd.f32 0.0, %v2481
    %2483 = vdwg.mxu0
    %v2484 = vld [vmem:[%s5 + $0x80] sm:$0xf]
    %v2485 = vld [vmem:[%s5 + $0x84] sm:$0xf]
    %v2486 = vld [vmem:[%s5 + $0x88] sm:$0xf]
    %v2487 = vld [vmem:[%s5 + $0x8c] sm:$0xf]
    %v2488 = vld [vmem:[%s5 + $0x90] sm:$0xf]
    %v2489 = vld [vmem:[%s5 + $0x94] sm:$0xf]
    %v2490 = vld [vmem:[%s5 + $0x98] sm:$0xf]
    %v2491 = vld [vmem:[%s5 + $0x9c] sm:$0xf]
    %v2492 = vld [vmem:[%s5 + $0xa0] sm:$0xf]
    %v2493 = vld [vmem:[%s5 + $0xa4] sm:$0xf]
    %v2494 = vld [vmem:[%s5 + $0xa8] sm:$0xf]
    %v2495 = vld [vmem:[%s5 + $0xac] sm:$0xf]
    %v2496 = vld [vmem:[%s5 + $0xb0] sm:$0xf]
    %v2497 = vld [vmem:[%s5 + $0xb4] sm:$0xf]
    %v2498 = vld [vmem:[%s5 + $0xb8] sm:$0xf]
    %v2499 = vld [vmem:[%s5 + $0xbc] sm:$0xf]
    %v2500 = vpack.c.bf16 %v2482, %v2482
    %v2517 = vunpack.c.l.b16 %v2484
    %v2518 = vunpack.c.l.b16 %v2485
    %v2519 = vunpack.c.l.b16 %v2486
    %v2520 = vunpack.c.l.b16 %v2487
    %v2521 = vunpack.c.l.b16 %v2488
    %v2522 = vunpack.c.l.b16 %v2489
    %v2523 = vunpack.c.l.b16 %v2490
    %v2524 = vunpack.c.l.b16 %v2491
    %v2525 = vunpack.c.l.b16 %v2492
    %v2526 = vunpack.c.l.b16 %v2493
    %v2527 = vunpack.c.l.b16 %v2494
    %v2528 = vunpack.c.l.b16 %v2495
    %v2529 = vunpack.c.l.b16 %v2496
    %v2530 = vunpack.c.l.b16 %v2497
    %v2531 = vunpack.c.l.b16 %v2498
    %v2532 = vunpack.c.l.b16 %v2499
    %v2533 = vpack.c.b16 %v2518, %v2517
    %v2534 = vpack.c.b16 %v2520, %v2519
    %v2535 = vpack.c.b16 %v2522, %v2521
    %v2536 = vpack.c.b16 %v2524, %v2523
    %v2537 = vpack.c.b16 %v2526, %v2525
    %v2538 = vpack.c.b16 %v2528, %v2527
    %v2539 = vpack.c.b16 %v2530, %v2529
    %v2540 = vpack.c.b16 %v2532, %v2531
    %2549 = vmatpush.bf16.msra.mxu0 %v2540
    %2550 = vmatpush.bf16.msra.mxu0 %v2539
    %2551 = vmatpush.bf16.msra.mxu0 %v2538
    %2552 = vmatpush.bf16.msra.mxu0 %v2537
    %2553 = vmatpush.bf16.msra.mxu0 %v2536
    %2554 = vmatpush.bf16.msra.mxu0 %v2535
    %2555 = vmatpush.bf16.msra.mxu0 %v2534
    %2556 = vmatpush.bf16.msra.mxu0 %v2533
    %2557 = vmatmul.bf16.gmra.mxu0 %v2500
    %v2558 = vpop.f32.mrf.mxu0
    %v2559 = vadd.f32 0.0, %v2558
    %v2560 = vpop.f32.mrf.mxu0
    %2561 = vdwg.mxu0
    %v2562 = vadd.f32 %v2454, %v2559
    %v2563 = vadd.s32 %v270, 6
    %vm2564 = vcmp.eq.s32.totalorder %v272, %v2563
    %v2565 = vsel %vm2564, 1, 0
    %v2566 = vcvt.s32.f32 %v2565
    %v2568 = vsel %vm701, %v2566, 0
    %2570 = vmatpush.msra.mxu0 0.0
    %2571 = vmatpush.msra.mxu0 0.0
    %2572 = vmatpush.msra.mxu0 0.0
    %2573 = vmatpush.msra.mxu0 0.0
    %2574 = vmatpush.msra.mxu0 0.0
    %2575 = vmatpush.msra.mxu0 0.0
    %2576 = vmatpush.msra.mxu0 0.0
    %2577 = vmatpush.msra.mxu0 0.0
    %2578 = vmatpush.msra.mxu0 0.0
    %2579 = vmatpush.msra.mxu0 0.0
    %2580 = vmatpush.msra.mxu0 0.0
    %2581 = vmatpush.msra.mxu0 0.0
    %2582 = vmatpush.msra.mxu0 0.0
    %2583 = vmatpush.msra.mxu0 0.0
    %2584 = vmatpush.msra.mxu0 0.0
    %2585 = vmatpush.msra.mxu0 %v2251
    %2586 = vmatmul.f32.gmra.mxu0 %v2568
    %v2587 = vpop.f32.mrf.mxu0
    %v2588 = vadd.f32 0.0, %v2587
    %2589 = vdwg.mxu0
    %v2590 = vld [vmem:[%s5 + $0xc0] sm:$0xf]
    %v2591 = vld [vmem:[%s5 + $0xc4] sm:$0xf]
    %v2592 = vld [vmem:[%s5 + $0xc8] sm:$0xf]
    %v2593 = vld [vmem:[%s5 + $0xcc] sm:$0xf]
    %v2594 = vld [vmem:[%s5 + $0xd0] sm:$0xf]
    %v2595 = vld [vmem:[%s5 + $0xd4] sm:$0xf]
    %v2596 = vld [vmem:[%s5 + $0xd8] sm:$0xf]
    %v2597 = vld [vmem:[%s5 + $0xdc] sm:$0xf]
    %v2598 = vld [vmem:[%s5 + $0xe0] sm:$0xf]
    %v2599 = vld [vmem:[%s5 + $0xe4] sm:$0xf]
    %v2600 = vld [vmem:[%s5 + $0xe8] sm:$0xf]
    %v2601 = vld [vmem:[%s5 + $0xec] sm:$0xf]
    %v2602 = vld [vmem:[%s5 + $0xf0] sm:$0xf]
    %v2603 = vld [vmem:[%s5 + $0xf4] sm:$0xf]
    %v2604 = vld [vmem:[%s5 + $0xf8] sm:$0xf]
    %v2605 = vld [vmem:[%s5 + $0xfc] sm:$0xf]
    %v2606 = vpack.c.bf16 %v2588, %v2588
    %v2623 = vunpack.c.l.b16 %v2590
    %v2624 = vunpack.c.l.b16 %v2591
    %v2625 = vunpack.c.l.b16 %v2592
    %v2626 = vunpack.c.l.b16 %v2593
    %v2627 = vunpack.c.l.b16 %v2594
    %v2628 = vunpack.c.l.b16 %v2595
    %v2629 = vunpack.c.l.b16 %v2596
    %v2630 = vunpack.c.l.b16 %v2597
    %v2631 = vunpack.c.l.b16 %v2598
    %v2632 = vunpack.c.l.b16 %v2599
    %v2633 = vunpack.c.l.b16 %v2600
    %v2634 = vunpack.c.l.b16 %v2601
    %v2635 = vunpack.c.l.b16 %v2602
    %v2636 = vunpack.c.l.b16 %v2603
    %v2637 = vunpack.c.l.b16 %v2604
    %v2638 = vunpack.c.l.b16 %v2605
    %v2639 = vpack.c.b16 %v2624, %v2623
    %v2640 = vpack.c.b16 %v2626, %v2625
    %v2641 = vpack.c.b16 %v2628, %v2627
    %v2642 = vpack.c.b16 %v2630, %v2629
    %v2643 = vpack.c.b16 %v2632, %v2631
    %v2644 = vpack.c.b16 %v2634, %v2633
    %v2645 = vpack.c.b16 %v2636, %v2635
    %v2646 = vpack.c.b16 %v2638, %v2637
    %2655 = vmatpush.bf16.msra.mxu0 %v2646
    %2656 = vmatpush.bf16.msra.mxu0 %v2645
    %2657 = vmatpush.bf16.msra.mxu0 %v2644
    %2658 = vmatpush.bf16.msra.mxu0 %v2643
    %2659 = vmatpush.bf16.msra.mxu0 %v2642
    %2660 = vmatpush.bf16.msra.mxu0 %v2641
    %2661 = vmatpush.bf16.msra.mxu0 %v2640
    %2662 = vmatpush.bf16.msra.mxu0 %v2639
    %2663 = vmatmul.bf16.gmra.mxu0 %v2606
    %v2664 = vpop.f32.mrf.mxu0
    %v2665 = vadd.f32 0.0, %v2664
    %v2666 = vpop.f32.mrf.mxu0
    %2667 = vdwg.mxu0
    %v2668 = vadd.f32 %v2562, %v2665
    %v2669 = vperm.slane %v63, 2
    %v2670 = vadd.f32 %v2668, %v2669
    %vm2671 = vcmask 656384
    %2672 = vst.msk [vmem:[%s6] sm:$0x3] %vm2671, %v2670
    // Predicated region
    $region34: #{anti_encoder_forward.1} parent=1 // pred_check
      _
    $region35: #{anti_encoder_forward.1} parent=1 // pred_check_branch
      %2674 = sbr.rel (0) target = $region37
    $region36: #{anti_encoder_forward.1} parent=1 // pred_region
      _
    $region37: #{anti_encoder_forward.1} parent=1 // pred_fallthru
      _
    // Predicated region
    $region38: #{anti_encoder_forward.1} parent=1 // pred_check
      _
    $region39: #{anti_encoder_forward.1} parent=1 // pred_check_branch
      %2676 = sbr.rel (0) target = $region41
    $region40: #{anti_encoder_forward.1} parent=1 // pred_region
      _
    $region41: #{anti_encoder_forward.1} parent=1 // pred_fallthru
      _
    %2677 = vsyncpa [#allocation3], 1
    %2678 = vsyncpa [#allocation5], 1

</llo_original>
